<compile_context>
chip_gen: v6e
topology: v6e:2x2x1
jax: 0.10.0
libtpu: 0.0.40
codegen_flags: <defaults>
</compile_context>

<pallas_src>
import jax
import jax.numpy as jnp
from jax import lax
from jax.experimental import pallas as pl
from jax.experimental.pallas import tpu as pltpu
from jax.scipy.linalg import expm as _expm_ref

# ---- static hyper-parameters (mirror MatrixExponential attrs) ---------------
K_STEPS = 4
LATENT_FEATURES = 128          # matrix side N (lane-dense: last dim == 128)
BATCH = 2

TAYLOR_ORDER = 13              # Horner Taylor order; ||B||_inf <= 1 => err ~1e-11
MAX_SQUARINGS = 12             # handles ||X / k_steps||_inf up to 2^12

_LN2 = 0.6931471805599453


def _matrix_exp_kernel(x_ref, out_ref):
    n = x_ref.shape[-1]

    # A = X / k_steps   (the module's forward scaling)
    a = x_ref[0] * jnp.float32(1.0 / K_STEPS)

    # ---- choose s with ||A / 2^s||_inf <= 1 (everything stays (1,1)-shaped) --
    row_sums = jnp.sum(jnp.abs(a), axis=-1, keepdims=True)            # (n, 1)
    nrm = jnp.max(row_sums, axis=-2, keepdims=True)                   # (1, 1)
    s_f = jnp.ceil(jnp.log(jnp.maximum(nrm, 1.0)) * (1.0 / _LN2))     # (1, 1)
    s_f = jnp.clip(s_f, 0.0, float(MAX_SQUARINGS))
    b = a * jnp.exp(-s_f * _LN2)                                      # ||B||_inf <= 1

    # identity via 2-D broadcasted_iota (Mosaic-safe, no 1-D iota)
    rows = lax.broadcasted_iota(jnp.int32, (n, n), 0)
    cols = lax.broadcasted_iota(jnp.int32, (n, n), 1)
    eye = jnp.where(rows == cols, 1.0, 0.0).astype(jnp.float32)

    # ---- Horner Taylor: P = I + B(I + B/2 (I + ... + B/m)) ~= exp(B) --------
    p = eye
    for k in range(TAYLOR_ORDER, 0, -1):
        p = eye + jnp.dot(b, p, preferred_element_type=jnp.float32) * jnp.float32(1.0 / k)

    # ---- repeated squaring: exp(A) = exp(B)^(2^s) ----------------------------
    # Fixed unrolled loop; iterations beyond s are gated out with a float
    # (1,1) blend (MXU work is trivial at this size, and this avoids any
    # dynamic trip count or boolean-mask broadcast).
    e = p
    for i in range(MAX_SQUARINGS):
        e2 = jnp.dot(e, e, preferred_element_type=jnp.float32)
        gate = jnp.where(jnp.float32(i) < s_f, 1.0, 0.0).astype(jnp.float32)  # (1,1)
        e = gate * e2 + (1.0 - gate) * e

    out_ref[0] = e.astype(out_ref.dtype)


def matrix_exponential(x):
    """matrix_exp(x / K_STEPS) for x of shape (B, N, N) or (N, N), float32."""
    squeeze = x.ndim == 2
    if squeeze:
        x = x[None]
    bsz, n, _ = x.shape
    out = pl.pallas_call(
        _matrix_exp_kernel,
        out_shape=jax.ShapeDtypeStruct((bsz, n, n), jnp.float32),
        grid_spec=pltpu.PrefetchScalarGridSpec(
            num_scalar_prefetch=0,
            grid=(bsz,),
            in_specs=[pl.BlockSpec((1, n, n), lambda i: (i, 0, 0))],
            out_specs=pl.BlockSpec((1, n, n), lambda i: (i, 0, 0)),
        ),
        compiler_params=pltpu.CompilerParams(
            dimension_semantics=("parallel",),   # megacore-shards batch on v7x
        ),
    )(x)
    return out[0] if squeeze else out


if __name__ == "__main__":
    key = jax.random.PRNGKey(0)
    x = 0.25 * jax.random.normal(
        key, (BATCH, LATENT_FEATURES, LATENT_FEATURES), jnp.float32)

    out = matrix_exponential(x)
    out = jax.block_until_ready(out)

    # Pure-JAX reference of torch.matrix_exp(X / k_steps).
    ref = jnp.stack([_expm_ref(x[i] / K_STEPS) for i in range(BATCH)])

    assert out.shape == (BATCH, LATENT_FEATURES, LATENT_FEATURES)
    assert bool(jnp.allclose(out, ref, atol=2e-3, rtol=2e-3)), (
        float(jnp.max(jnp.abs(out - ref))))

    print("KERNEL_OK")
</pallas_src>

<mosaic_0001>
module attributes {stable_mosaic.version = 11 : i64} {
  func.func @_matrix_exp_kernel(%arg0: i32, %arg1: memref<1x128x128xf32, #tpu.memory_space<vmem>>, %arg2: memref<1x128x128xf32, #tpu.memory_space<vmem>>) attributes {dimension_semantics = [#tpu.dimension_semantics<parallel>], iteration_bounds = array<i64: 2>, scalar_prefetch = 0 : i64, scratch_operands = 0 : i64, tpu.core_type = #tpu.core_type<tc>, window_params = [{transform_indices = @transform_0, window_bounds = array<i64: 1, 128, 128>}, {transform_indices = @transform_1, window_bounds = array<i64: 1, 128, 128>}]} {
    %c0 = arith.constant 0 : index
    %c0_0 = arith.constant 0 : index
    %c0_1 = arith.constant 0 : index
    %0 = vector.load %arg1[%c0, %c0_0, %c0_1] : memref<1x128x128xf32, #tpu.memory_space<vmem>>, vector<1x128x128xf32>
    %1 = vector.shape_cast %0 : vector<1x128x128xf32> to vector<128x128xf32>
    %cst = arith.constant 2.500000e-01 : f32
    %2 = vector.broadcast %cst : f32 to vector<128x128xf32>
    %3 = arith.mulf %1, %2 : vector<128x128xf32>
    %4 = math.absf %3 : vector<128x128xf32>
    %cst_2 = arith.constant dense<0.000000e+00> : vector<128xf32>
    %5 = vector.multi_reduction <add>, %4, %cst_2 [1] : vector<128x128xf32> to vector<128xf32>
    %6 = vector.shape_cast %5 : vector<128xf32> to vector<128x1xf32>
    %cst_3 = arith.constant dense<0xFF800000> : vector<1xf32>
    %7 = vector.multi_reduction <maximumf>, %6, %cst_3 [0] : vector<128x1xf32> to vector<1xf32>
    %8 = vector.shape_cast %7 : vector<1xf32> to vector<1x1xf32>
    %cst_4 = arith.constant 1.000000e+00 : f32
    %9 = vector.broadcast %cst_4 : f32 to vector<1x1xf32>
    %10 = arith.maximumf %8, %9 : vector<1x1xf32>
    %11 = math.log %10 : vector<1x1xf32>
    %cst_5 = arith.constant 1.44269502 : f32
    %12 = vector.broadcast %cst_5 : f32 to vector<1x1xf32>
    %13 = arith.mulf %11, %12 : vector<1x1xf32>
    %14 = math.ceil %13 : vector<1x1xf32>
    %cst_6 = arith.constant 0.000000e+00 : f32
    %cst_7 = arith.constant 1.200000e+01 : f32
    %15 = vector.broadcast %cst_6 : f32 to vector<1x1xf32>
    %16 = arith.maximumf %15, %14 : vector<1x1xf32>
    %17 = vector.broadcast %cst_7 : f32 to vector<1x1xf32>
    %18 = arith.minimumf %17, %16 : vector<1x1xf32>
    %cst_8 = arith.constant 0.000000e+00 : f32
    %19 = vector.broadcast %cst_8 : f32 to vector<1x1xf32>
    %20 = arith.subf %19, %18 : vector<1x1xf32>
    %cst_9 = arith.constant 0.693147182 : f32
    %21 = vector.broadcast %cst_9 : f32 to vector<1x1xf32>
    %22 = arith.mulf %20, %21 : vector<1x1xf32>
    %23 = math.exp %22 : vector<1x1xf32>
    %24 = vector.broadcast %23 : vector<1x1xf32> to vector<128x128xf32>
    %25 = arith.mulf %3, %24 : vector<128x128xf32>
    %26 = tpu.iota {dimensions = array<i32: 0>} : vector<128x128xi32>
    %27 = tpu.iota {dimensions = array<i32: 1>} : vector<128x128xi32>
    %28 = arith.cmpi eq, %26, %27 : vector<128x128xi32>
    %cst_10 = arith.constant 1.000000e+00 : f32
    %cst_11 = arith.constant 0.000000e+00 : f32
    %29 = vector.broadcast %cst_10 : f32 to vector<128x128xf32>
    %30 = vector.broadcast %cst_11 : f32 to vector<128x128xf32>
    %31 = arith.select %28, %29, %30 : vector<128x128xi1>, vector<128x128xf32>
    %cst_12 = arith.constant dense<0.000000e+00> : vector<128x128xf32>
    %32 = tpu.matmul %25, %31, %cst_12 {dimension_numbers = #tpu.dot_dimension_numbers<[1], [0], [0], [1], [0, 0, 1, 1], [], []>} : vector<128x128xf32>, vector<128x128xf32>, vector<128x128xf32> -> vector<128x128xf32>
    %cst_13 = arith.constant 0.0769230798 : f32
    %33 = vector.broadcast %cst_13 : f32 to vector<128x128xf32>
    %34 = arith.mulf %32, %33 : vector<128x128xf32>
    %35 = arith.addf %31, %34 : vector<128x128xf32>
    %cst_14 = arith.constant dense<0.000000e+00> : vector<128x128xf32>
    %36 = tpu.matmul %25, %35, %cst_14 {dimension_numbers = #tpu.dot_dimension_numbers<[1], [0], [0], [1], [0, 0, 1, 1], [], []>} : vector<128x128xf32>, vector<128x128xf32>, vector<128x128xf32> -> vector<128x128xf32>
    %cst_15 = arith.constant 0.0833333358 : f32
    %37 = vector.broadcast %cst_15 : f32 to vector<128x128xf32>
    %38 = arith.mulf %36, %37 : vector<128x128xf32>
    %39 = arith.addf %31, %38 : vector<128x128xf32>
    %cst_16 = arith.constant dense<0.000000e+00> : vector<128x128xf32>
    %40 = tpu.matmul %25, %39, %cst_16 {dimension_numbers = #tpu.dot_dimension_numbers<[1], [0], [0], [1], [0, 0, 1, 1], [], []>} : vector<128x128xf32>, vector<128x128xf32>, vector<128x128xf32> -> vector<128x128xf32>
    %cst_17 = arith.constant 0.0909090936 : f32
    %41 = vector.broadcast %cst_17 : f32 to vector<128x128xf32>
    %42 = arith.mulf %40, %41 : vector<128x128xf32>
    %43 = arith.addf %31, %42 : vector<128x128xf32>
    %cst_18 = arith.constant dense<0.000000e+00> : vector<128x128xf32>
    %44 = tpu.matmul %25, %43, %cst_18 {dimension_numbers = #tpu.dot_dimension_numbers<[1], [0], [0], [1], [0, 0, 1, 1], [], []>} : vector<128x128xf32>, vector<128x128xf32>, vector<128x128xf32> -> vector<128x128xf32>
    %cst_19 = arith.constant 1.000000e-01 : f32
    %45 = vector.broadcast %cst_19 : f32 to vector<128x128xf32>
    %46 = arith.mulf %44, %45 : vector<128x128xf32>
    %47 = arith.addf %31, %46 : vector<128x128xf32>
    %cst_20 = arith.constant dense<0.000000e+00> : vector<128x128xf32>
    %48 = tpu.matmul %25, %47, %cst_20 {dimension_numbers = #tpu.dot_dimension_numbers<[1], [0], [0], [1], [0, 0, 1, 1], [], []>} : vector<128x128xf32>, vector<128x128xf32>, vector<128x128xf32> -> vector<128x128xf32>
    %cst_21 = arith.constant 0.111111112 : f32
    %49 = vector.broadcast %cst_21 : f32 to vector<128x128xf32>
    %50 = arith.mulf %48, %49 : vector<128x128xf32>
    %51 = arith.addf %31, %50 : vector<128x128xf32>
    %cst_22 = arith.constant dense<0.000000e+00> : vector<128x128xf32>
    %52 = tpu.matmul %25, %51, %cst_22 {dimension_numbers = #tpu.dot_dimension_numbers<[1], [0], [0], [1], [0, 0, 1, 1], [], []>} : vector<128x128xf32>, vector<128x128xf32>, vector<128x128xf32> -> vector<128x128xf32>
    %cst_23 = arith.constant 1.250000e-01 : f32
    %53 = vector.broadcast %cst_23 : f32 to vector<128x128xf32>
    %54 = arith.mulf %52, %53 : vector<128x128xf32>
    %55 = arith.addf %31, %54 : vector<128x128xf32>
    %cst_24 = arith.constant dense<0.000000e+00> : vector<128x128xf32>
    %56 = tpu.matmul %25, %55, %cst_24 {dimension_numbers = #tpu.dot_dimension_numbers<[1], [0], [0], [1], [0, 0, 1, 1], [], []>} : vector<128x128xf32>, vector<128x128xf32>, vector<128x128xf32> -> vector<128x128xf32>
    %cst_25 = arith.constant 0.142857149 : f32
    %57 = vector.broadcast %cst_25 : f32 to vector<128x128xf32>
    %58 = arith.mulf %56, %57 : vector<128x128xf32>
    %59 = arith.addf %31, %58 : vector<128x128xf32>
    %cst_26 = arith.constant dense<0.000000e+00> : vector<128x128xf32>
    %60 = tpu.matmul %25, %59, %cst_26 {dimension_numbers = #tpu.dot_dimension_numbers<[1], [0], [0], [1], [0, 0, 1, 1], [], []>} : vector<128x128xf32>, vector<128x128xf32>, vector<128x128xf32> -> vector<128x128xf32>
    %cst_27 = arith.constant 0.166666672 : f32
    %61 = vector.broadcast %cst_27 : f32 to vector<128x128xf32>
    %62 = arith.mulf %60, %61 : vector<128x128xf32>
    %63 = arith.addf %31, %62 : vector<128x128xf32>
    %cst_28 = arith.constant dense<0.000000e+00> : vector<128x128xf32>
    %64 = tpu.matmul %25, %63, %cst_28 {dimension_numbers = #tpu.dot_dimension_numbers<[1], [0], [0], [1], [0, 0, 1, 1], [], []>} : vector<128x128xf32>, vector<128x128xf32>, vector<128x128xf32> -> vector<128x128xf32>
    %cst_29 = arith.constant 2.000000e-01 : f32
    %65 = vector.broadcast %cst_29 : f32 to vector<128x128xf32>
    %66 = arith.mulf %64, %65 : vector<128x128xf32>
    %67 = arith.addf %31, %66 : vector<128x128xf32>
    %cst_30 = arith.constant dense<0.000000e+00> : vector<128x128xf32>
    %68 = tpu.matmul %25, %67, %cst_30 {dimension_numbers = #tpu.dot_dimension_numbers<[1], [0], [0], [1], [0, 0, 1, 1], [], []>} : vector<128x128xf32>, vector<128x128xf32>, vector<128x128xf32> -> vector<128x128xf32>
    %cst_31 = arith.constant 2.500000e-01 : f32
    %69 = vector.broadcast %cst_31 : f32 to vector<128x128xf32>
    %70 = arith.mulf %68, %69 : vector<128x128xf32>
    %71 = arith.addf %31, %70 : vector<128x128xf32>
    %cst_32 = arith.constant dense<0.000000e+00> : vector<128x128xf32>
    %72 = tpu.matmul %25, %71, %cst_32 {dimension_numbers = #tpu.dot_dimension_numbers<[1], [0], [0], [1], [0, 0, 1, 1], [], []>} : vector<128x128xf32>, vector<128x128xf32>, vector<128x128xf32> -> vector<128x128xf32>
    %cst_33 = arith.constant 0.333333343 : f32
    %73 = vector.broadcast %cst_33 : f32 to vector<128x128xf32>
    %74 = arith.mulf %72, %73 : vector<128x128xf32>
    %75 = arith.addf %31, %74 : vector<128x128xf32>
    %cst_34 = arith.constant dense<0.000000e+00> : vector<128x128xf32>
    %76 = tpu.matmul %25, %75, %cst_34 {dimension_numbers = #tpu.dot_dimension_numbers<[1], [0], [0], [1], [0, 0, 1, 1], [], []>} : vector<128x128xf32>, vector<128x128xf32>, vector<128x128xf32> -> vector<128x128xf32>
    %cst_35 = arith.constant 5.000000e-01 : f32
    %77 = vector.broadcast %cst_35 : f32 to vector<128x128xf32>
    %78 = arith.mulf %76, %77 : vector<128x128xf32>
    %79 = arith.addf %31, %78 : vector<128x128xf32>
    %cst_36 = arith.constant dense<0.000000e+00> : vector<128x128xf32>
    %80 = tpu.matmul %25, %79, %cst_36 {dimension_numbers = #tpu.dot_dimension_numbers<[1], [0], [0], [1], [0, 0, 1, 1], [], []>} : vector<128x128xf32>, vector<128x128xf32>, vector<128x128xf32> -> vector<128x128xf32>
    %cst_37 = arith.constant 1.000000e+00 : f32
    %81 = vector.broadcast %cst_37 : f32 to vector<128x128xf32>
    %82 = arith.mulf %80, %81 : vector<128x128xf32>
    %83 = arith.addf %31, %82 : vector<128x128xf32>
    %cst_38 = arith.constant dense<0.000000e+00> : vector<128x128xf32>
    %84 = tpu.matmul %83, %83, %cst_38 {dimension_numbers = #tpu.dot_dimension_numbers<[1], [0], [0], [1], [0, 0, 1, 1], [], []>} : vector<128x128xf32>, vector<128x128xf32>, vector<128x128xf32> -> vector<128x128xf32>
    %cst_39 = arith.constant 0.000000e+00 : f32
    %85 = vector.broadcast %cst_39 : f32 to vector<1x1xf32>
    %86 = arith.cmpf olt, %85, %18 : vector<1x1xf32>
    %cst_40 = arith.constant 1.000000e+00 : f32
    %cst_41 = arith.constant 0.000000e+00 : f32
    %87 = vector.broadcast %cst_40 : f32 to vector<1x1xf32>
    %88 = vector.broadcast %cst_41 : f32 to vector<1x1xf32>
    %89 = arith.select %86, %87, %88 : vector<1x1xi1>, vector<1x1xf32>
    %90 = vector.broadcast %89 : vector<1x1xf32> to vector<128x128xf32>
    %91 = arith.mulf %90, %84 : vector<128x128xf32>
    %cst_42 = arith.constant 1.000000e+00 : f32
    %92 = vector.broadcast %cst_42 : f32 to vector<1x1xf32>
    %93 = arith.subf %92, %89 : vector<1x1xf32>
    %94 = vector.broadcast %93 : vector<1x1xf32> to vector<128x128xf32>
    %95 = arith.mulf %94, %83 : vector<128x128xf32>
    %96 = arith.addf %91, %95 : vector<128x128xf32>
    %cst_43 = arith.constant dense<0.000000e+00> : vector<128x128xf32>
    %97 = tpu.matmul %96, %96, %cst_43 {dimension_numbers = #tpu.dot_dimension_numbers<[1], [0], [0], [1], [0, 0, 1, 1], [], []>} : vector<128x128xf32>, vector<128x128xf32>, vector<128x128xf32> -> vector<128x128xf32>
    %cst_44 = arith.constant 1.000000e+00 : f32
    %98 = vector.broadcast %cst_44 : f32 to vector<1x1xf32>
    %99 = arith.cmpf olt, %98, %18 : vector<1x1xf32>
    %cst_45 = arith.constant 1.000000e+00 : f32
    %cst_46 = arith.constant 0.000000e+00 : f32
    %100 = vector.broadcast %cst_45 : f32 to vector<1x1xf32>
    %101 = vector.broadcast %cst_46 : f32 to vector<1x1xf32>
    %102 = arith.select %99, %100, %101 : vector<1x1xi1>, vector<1x1xf32>
    %103 = vector.broadcast %102 : vector<1x1xf32> to vector<128x128xf32>
    %104 = arith.mulf %103, %97 : vector<128x128xf32>
    %cst_47 = arith.constant 1.000000e+00 : f32
    %105 = vector.broadcast %cst_47 : f32 to vector<1x1xf32>
    %106 = arith.subf %105, %102 : vector<1x1xf32>
    %107 = vector.broadcast %106 : vector<1x1xf32> to vector<128x128xf32>
    %108 = arith.mulf %107, %96 : vector<128x128xf32>
    %109 = arith.addf %104, %108 : vector<128x128xf32>
    %cst_48 = arith.constant dense<0.000000e+00> : vector<128x128xf32>
    %110 = tpu.matmul %109, %109, %cst_48 {dimension_numbers = #tpu.dot_dimension_numbers<[1], [0], [0], [1], [0, 0, 1, 1], [], []>} : vector<128x128xf32>, vector<128x128xf32>, vector<128x128xf32> -> vector<128x128xf32>
    %cst_49 = arith.constant 2.000000e+00 : f32
    %111 = vector.broadcast %cst_49 : f32 to vector<1x1xf32>
    %112 = arith.cmpf olt, %111, %18 : vector<1x1xf32>
    %cst_50 = arith.constant 1.000000e+00 : f32
    %cst_51 = arith.constant 0.000000e+00 : f32
    %113 = vector.broadcast %cst_50 : f32 to vector<1x1xf32>
    %114 = vector.broadcast %cst_51 : f32 to vector<1x1xf32>
    %115 = arith.select %112, %113, %114 : vector<1x1xi1>, vector<1x1xf32>
    %116 = vector.broadcast %115 : vector<1x1xf32> to vector<128x128xf32>
    %117 = arith.mulf %116, %110 : vector<128x128xf32>
    %cst_52 = arith.constant 1.000000e+00 : f32
    %118 = vector.broadcast %cst_52 : f32 to vector<1x1xf32>
    %119 = arith.subf %118, %115 : vector<1x1xf32>
    %120 = vector.broadcast %119 : vector<1x1xf32> to vector<128x128xf32>
    %121 = arith.mulf %120, %109 : vector<128x128xf32>
    %122 = arith.addf %117, %121 : vector<128x128xf32>
    %cst_53 = arith.constant dense<0.000000e+00> : vector<128x128xf32>
    %123 = tpu.matmul %122, %122, %cst_53 {dimension_numbers = #tpu.dot_dimension_numbers<[1], [0], [0], [1], [0, 0, 1, 1], [], []>} : vector<128x128xf32>, vector<128x128xf32>, vector<128x128xf32> -> vector<128x128xf32>
    %cst_54 = arith.constant 3.000000e+00 : f32
    %124 = vector.broadcast %cst_54 : f32 to vector<1x1xf32>
    %125 = arith.cmpf olt, %124, %18 : vector<1x1xf32>
    %cst_55 = arith.constant 1.000000e+00 : f32
    %cst_56 = arith.constant 0.000000e+00 : f32
    %126 = vector.broadcast %cst_55 : f32 to vector<1x1xf32>
    %127 = vector.broadcast %cst_56 : f32 to vector<1x1xf32>
    %128 = arith.select %125, %126, %127 : vector<1x1xi1>, vector<1x1xf32>
    %129 = vector.broadcast %128 : vector<1x1xf32> to vector<128x128xf32>
    %130 = arith.mulf %129, %123 : vector<128x128xf32>
    %cst_57 = arith.constant 1.000000e+00 : f32
    %131 = vector.broadcast %cst_57 : f32 to vector<1x1xf32>
    %132 = arith.subf %131, %128 : vector<1x1xf32>
    %133 = vector.broadcast %132 : vector<1x1xf32> to vector<128x128xf32>
    %134 = arith.mulf %133, %122 : vector<128x128xf32>
    %135 = arith.addf %130, %134 : vector<128x128xf32>
    %cst_58 = arith.constant dense<0.000000e+00> : vector<128x128xf32>
    %136 = tpu.matmul %135, %135, %cst_58 {dimension_numbers = #tpu.dot_dimension_numbers<[1], [0], [0], [1], [0, 0, 1, 1], [], []>} : vector<128x128xf32>, vector<128x128xf32>, vector<128x128xf32> -> vector<128x128xf32>
    %cst_59 = arith.constant 4.000000e+00 : f32
    %137 = vector.broadcast %cst_59 : f32 to vector<1x1xf32>
    %138 = arith.cmpf olt, %137, %18 : vector<1x1xf32>
    %cst_60 = arith.constant 1.000000e+00 : f32
    %cst_61 = arith.constant 0.000000e+00 : f32
    %139 = vector.broadcast %cst_60 : f32 to vector<1x1xf32>
    %140 = vector.broadcast %cst_61 : f32 to vector<1x1xf32>
    %141 = arith.select %138, %139, %140 : vector<1x1xi1>, vector<1x1xf32>
    %142 = vector.broadcast %141 : vector<1x1xf32> to vector<128x128xf32>
    %143 = arith.mulf %142, %136 : vector<128x128xf32>
    %cst_62 = arith.constant 1.000000e+00 : f32
    %144 = vector.broadcast %cst_62 : f32 to vector<1x1xf32>
    %145 = arith.subf %144, %141 : vector<1x1xf32>
    %146 = vector.broadcast %145 : vector<1x1xf32> to vector<128x128xf32>
    %147 = arith.mulf %146, %135 : vector<128x128xf32>
    %148 = arith.addf %143, %147 : vector<128x128xf32>
    %cst_63 = arith.constant dense<0.000000e+00> : vector<128x128xf32>
    %149 = tpu.matmul %148, %148, %cst_63 {dimension_numbers = #tpu.dot_dimension_numbers<[1], [0], [0], [1], [0, 0, 1, 1], [], []>} : vector<128x128xf32>, vector<128x128xf32>, vector<128x128xf32> -> vector<128x128xf32>
    %cst_64 = arith.constant 5.000000e+00 : f32
    %150 = vector.broadcast %cst_64 : f32 to vector<1x1xf32>
    %151 = arith.cmpf olt, %150, %18 : vector<1x1xf32>
    %cst_65 = arith.constant 1.000000e+00 : f32
    %cst_66 = arith.constant 0.000000e+00 : f32
    %152 = vector.broadcast %cst_65 : f32 to vector<1x1xf32>
    %153 = vector.broadcast %cst_66 : f32 to vector<1x1xf32>
    %154 = arith.select %151, %152, %153 : vector<1x1xi1>, vector<1x1xf32>
    %155 = vector.broadcast %154 : vector<1x1xf32> to vector<128x128xf32>
    %156 = arith.mulf %155, %149 : vector<128x128xf32>
    %cst_67 = arith.constant 1.000000e+00 : f32
    %157 = vector.broadcast %cst_67 : f32 to vector<1x1xf32>
    %158 = arith.subf %157, %154 : vector<1x1xf32>
    %159 = vector.broadcast %158 : vector<1x1xf32> to vector<128x128xf32>
    %160 = arith.mulf %159, %148 : vector<128x128xf32>
    %161 = arith.addf %156, %160 : vector<128x128xf32>
    %cst_68 = arith.constant dense<0.000000e+00> : vector<128x128xf32>
    %162 = tpu.matmul %161, %161, %cst_68 {dimension_numbers = #tpu.dot_dimension_numbers<[1], [0], [0], [1], [0, 0, 1, 1], [], []>} : vector<128x128xf32>, vector<128x128xf32>, vector<128x128xf32> -> vector<128x128xf32>
    %cst_69 = arith.constant 6.000000e+00 : f32
    %163 = vector.broadcast %cst_69 : f32 to vector<1x1xf32>
    %164 = arith.cmpf olt, %163, %18 : vector<1x1xf32>
    %cst_70 = arith.constant 1.000000e+00 : f32
    %cst_71 = arith.constant 0.000000e+00 : f32
    %165 = vector.broadcast %cst_70 : f32 to vector<1x1xf32>
    %166 = vector.broadcast %cst_71 : f32 to vector<1x1xf32>
    %167 = arith.select %164, %165, %166 : vector<1x1xi1>, vector<1x1xf32>
    %168 = vector.broadcast %167 : vector<1x1xf32> to vector<128x128xf32>
    %169 = arith.mulf %168, %162 : vector<128x128xf32>
    %cst_72 = arith.constant 1.000000e+00 : f32
    %170 = vector.broadcast %cst_72 : f32 to vector<1x1xf32>
    %171 = arith.subf %170, %167 : vector<1x1xf32>
    %172 = vector.broadcast %171 : vector<1x1xf32> to vector<128x128xf32>
    %173 = arith.mulf %172, %161 : vector<128x128xf32>
    %174 = arith.addf %169, %173 : vector<128x128xf32>
    %cst_73 = arith.constant dense<0.000000e+00> : vector<128x128xf32>
    %175 = tpu.matmul %174, %174, %cst_73 {dimension_numbers = #tpu.dot_dimension_numbers<[1], [0], [0], [1], [0, 0, 1, 1], [], []>} : vector<128x128xf32>, vector<128x128xf32>, vector<128x128xf32> -> vector<128x128xf32>
    %cst_74 = arith.constant 7.000000e+00 : f32
    %176 = vector.broadcast %cst_74 : f32 to vector<1x1xf32>
    %177 = arith.cmpf olt, %176, %18 : vector<1x1xf32>
    %cst_75 = arith.constant 1.000000e+00 : f32
    %cst_76 = arith.constant 0.000000e+00 : f32
    %178 = vector.broadcast %cst_75 : f32 to vector<1x1xf32>
    %179 = vector.broadcast %cst_76 : f32 to vector<1x1xf32>
    %180 = arith.select %177, %178, %179 : vector<1x1xi1>, vector<1x1xf32>
    %181 = vector.broadcast %180 : vector<1x1xf32> to vector<128x128xf32>
    %182 = arith.mulf %181, %175 : vector<128x128xf32>
    %cst_77 = arith.constant 1.000000e+00 : f32
    %183 = vector.broadcast %cst_77 : f32 to vector<1x1xf32>
    %184 = arith.subf %183, %180 : vector<1x1xf32>
    %185 = vector.broadcast %184 : vector<1x1xf32> to vector<128x128xf32>
    %186 = arith.mulf %185, %174 : vector<128x128xf32>
    %187 = arith.addf %182, %186 : vector<128x128xf32>
    %cst_78 = arith.constant dense<0.000000e+00> : vector<128x128xf32>
    %188 = tpu.matmul %187, %187, %cst_78 {dimension_numbers = #tpu.dot_dimension_numbers<[1], [0], [0], [1], [0, 0, 1, 1], [], []>} : vector<128x128xf32>, vector<128x128xf32>, vector<128x128xf32> -> vector<128x128xf32>
    %cst_79 = arith.constant 8.000000e+00 : f32
    %189 = vector.broadcast %cst_79 : f32 to vector<1x1xf32>
    %190 = arith.cmpf olt, %189, %18 : vector<1x1xf32>
    %cst_80 = arith.constant 1.000000e+00 : f32
    %cst_81 = arith.constant 0.000000e+00 : f32
    %191 = vector.broadcast %cst_80 : f32 to vector<1x1xf32>
    %192 = vector.broadcast %cst_81 : f32 to vector<1x1xf32>
    %193 = arith.select %190, %191, %192 : vector<1x1xi1>, vector<1x1xf32>
    %194 = vector.broadcast %193 : vector<1x1xf32> to vector<128x128xf32>
    %195 = arith.mulf %194, %188 : vector<128x128xf32>
    %cst_82 = arith.constant 1.000000e+00 : f32
    %196 = vector.broadcast %cst_82 : f32 to vector<1x1xf32>
    %197 = arith.subf %196, %193 : vector<1x1xf32>
    %198 = vector.broadcast %197 : vector<1x1xf32> to vector<128x128xf32>
    %199 = arith.mulf %198, %187 : vector<128x128xf32>
    %200 = arith.addf %195, %199 : vector<128x128xf32>
    %cst_83 = arith.constant dense<0.000000e+00> : vector<128x128xf32>
    %201 = tpu.matmul %200, %200, %cst_83 {dimension_numbers = #tpu.dot_dimension_numbers<[1], [0], [0], [1], [0, 0, 1, 1], [], []>} : vector<128x128xf32>, vector<128x128xf32>, vector<128x128xf32> -> vector<128x128xf32>
    %cst_84 = arith.constant 9.000000e+00 : f32
    %202 = vector.broadcast %cst_84 : f32 to vector<1x1xf32>
    %203 = arith.cmpf olt, %202, %18 : vector<1x1xf32>
    %cst_85 = arith.constant 1.000000e+00 : f32
    %cst_86 = arith.constant 0.000000e+00 : f32
    %204 = vector.broadcast %cst_85 : f32 to vector<1x1xf32>
    %205 = vector.broadcast %cst_86 : f32 to vector<1x1xf32>
    %206 = arith.select %203, %204, %205 : vector<1x1xi1>, vector<1x1xf32>
    %207 = vector.broadcast %206 : vector<1x1xf32> to vector<128x128xf32>
    %208 = arith.mulf %207, %201 : vector<128x128xf32>
    %cst_87 = arith.constant 1.000000e+00 : f32
    %209 = vector.broadcast %cst_87 : f32 to vector<1x1xf32>
    %210 = arith.subf %209, %206 : vector<1x1xf32>
    %211 = vector.broadcast %210 : vector<1x1xf32> to vector<128x128xf32>
    %212 = arith.mulf %211, %200 : vector<128x128xf32>
    %213 = arith.addf %208, %212 : vector<128x128xf32>
    %cst_88 = arith.constant dense<0.000000e+00> : vector<128x128xf32>
    %214 = tpu.matmul %213, %213, %cst_88 {dimension_numbers = #tpu.dot_dimension_numbers<[1], [0], [0], [1], [0, 0, 1, 1], [], []>} : vector<128x128xf32>, vector<128x128xf32>, vector<128x128xf32> -> vector<128x128xf32>
    %cst_89 = arith.constant 1.000000e+01 : f32
    %215 = vector.broadcast %cst_89 : f32 to vector<1x1xf32>
    %216 = arith.cmpf olt, %215, %18 : vector<1x1xf32>
    %cst_90 = arith.constant 1.000000e+00 : f32
    %cst_91 = arith.constant 0.000000e+00 : f32
    %217 = vector.broadcast %cst_90 : f32 to vector<1x1xf32>
    %218 = vector.broadcast %cst_91 : f32 to vector<1x1xf32>
    %219 = arith.select %216, %217, %218 : vector<1x1xi1>, vector<1x1xf32>
    %220 = vector.broadcast %219 : vector<1x1xf32> to vector<128x128xf32>
    %221 = arith.mulf %220, %214 : vector<128x128xf32>
    %cst_92 = arith.constant 1.000000e+00 : f32
    %222 = vector.broadcast %cst_92 : f32 to vector<1x1xf32>
    %223 = arith.subf %222, %219 : vector<1x1xf32>
    %224 = vector.broadcast %223 : vector<1x1xf32> to vector<128x128xf32>
    %225 = arith.mulf %224, %213 : vector<128x128xf32>
    %226 = arith.addf %221, %225 : vector<128x128xf32>
    %cst_93 = arith.constant dense<0.000000e+00> : vector<128x128xf32>
    %227 = tpu.matmul %226, %226, %cst_93 {dimension_numbers = #tpu.dot_dimension_numbers<[1], [0], [0], [1], [0, 0, 1, 1], [], []>} : vector<128x128xf32>, vector<128x128xf32>, vector<128x128xf32> -> vector<128x128xf32>
    %cst_94 = arith.constant 1.100000e+01 : f32
    %228 = vector.broadcast %cst_94 : f32 to vector<1x1xf32>
    %229 = arith.cmpf olt, %228, %18 : vector<1x1xf32>
    %cst_95 = arith.constant 1.000000e+00 : f32
    %cst_96 = arith.constant 0.000000e+00 : f32
    %230 = vector.broadcast %cst_95 : f32 to vector<1x1xf32>
    %231 = vector.broadcast %cst_96 : f32 to vector<1x1xf32>
    %232 = arith.select %229, %230, %231 : vector<1x1xi1>, vector<1x1xf32>
    %233 = vector.broadcast %232 : vector<1x1xf32> to vector<128x128xf32>
    %234 = arith.mulf %233, %227 : vector<128x128xf32>
    %cst_97 = arith.constant 1.000000e+00 : f32
    %235 = vector.broadcast %cst_97 : f32 to vector<1x1xf32>
    %236 = arith.subf %235, %232 : vector<1x1xf32>
    %237 = vector.broadcast %236 : vector<1x1xf32> to vector<128x128xf32>
    %238 = arith.mulf %237, %226 : vector<128x128xf32>
    %239 = arith.addf %234, %238 : vector<128x128xf32>
    %c0_98 = arith.constant 0 : index
    %c0_99 = arith.constant 0 : index
    %c0_100 = arith.constant 0 : index
    %240 = vector.load %arg2[%c0_98, %c0_99, %c0_100] : memref<1x128x128xf32, #tpu.memory_space<vmem>>, vector<1x128x128xf32>
    %241 = vector.shape_cast %240 : vector<1x128x128xf32> to vector<128x128xf32>
    %242 = vector.shape_cast %239 : vector<128x128xf32> to vector<1x128x128xf32>
    tpu.vector_store %arg2[%c0_98, %c0_99, %c0_100], %242 {strides = array<i32>} : memref<1x128x128xf32, #tpu.memory_space<vmem>>, vector<1x128x128xf32>,
    return
  }
  func.func @transform_0(%arg0: i32) -> (i32, i32, i32) {
    %c0_i32 = arith.constant 0 : i32
    %c0_i32_0 = arith.constant 0 : i32
    %c0_i32_1 = arith.constant 0 : i32
    return %arg0, %c0_i32, %c0_i32_0 : i32, i32, i32
  }
  func.func @transform_1(%arg0: i32) -> (i32, i32, i32) {
    %c0_i32 = arith.constant 0 : i32
    %c0_i32_0 = arith.constant 0 : i32
    %c0_i32_1 = arith.constant 0 : i32
    return %arg0, %c0_i32, %c0_i32_0 : i32, i32, i32
  }
}

</mosaic_0001>

<llo_original>
// kernel: tpu_custom_call.1
$region0: #{tpu_custom_call.1}
  #allocation0 [shape = 'u32[]', space=smem, size = 0x4, offset = 0x4, fixed_abs, tag = 'smem constant byte address 0x4 - core index']
  #allocation1 [shape = 'u32[144,128]{1,0:T(1,128)}', space=vmem, size = 0x12000, scoped, tag = 'internal scratch']
  %s0 = inlined_call_operand.hbm [shape: f32[2,128,128], index: 0, kind: input, shape index: {}]
  %s1 = inlined_call_operand.hbm [shape: f32[2,128,128], index: 1, kind: output, shape index: {}]
  %s2 = sld [smem:[#allocation0]]
  $region41: #{tpu_custom_call.1} parent=0
    _
  %s4 = ssub.s32 1, %s2
  %s5 = scalar_select 0, %s4, %s2
  $region1: #{tpu_custom_call.1} parent=0
    #allocation2 [shape = 'u8[131072]{0}', space=vmem, size = 0x20000, scoped, tag = 'input window, operand 0']
    #allocation3 [shape = 's32[2]{0}', space=sflag, size = 0x8, scoped, tag = 'scoped memory for tpu_custom_call.1']
    #allocation4 [shape = 's32[2]{0}', space=sflag, size = 0x8, scoped, tag = 'scoped memory for tpu_custom_call.1']
    #allocation5 [shape = 'u8[131072]{0}', space=vmem, size = 0x20000, scoped, tag = 'output window, operand 0']
    %6 = vsyncpa [#allocation3], 0
    %s7 = scalar_lea.sflag [#allocation3], 1
    %8 = vsyncpa %s7, 0
    %9 = vsyncpa [#allocation4], 0
    %s10 = scalar_lea.sflag [#allocation4], 1
    %11 = vsyncpa %s10, 0
    loop: start=0, step=1, limit=4
    $region2: #{tpu_custom_call.1} parent=1 // loop_pre_header
      _
    $region3: #{tpu_custom_call.1} parent=1 // loop_header
      %s13 = sphi 0, %s17
      %p14 = scmp.ge.s32.totalorder %s13, 4
      %s23 = sphi 0, %s25
      %s26 = sphi 0, %s23
      %s27 = sphi 0, %s26
      %s43 = sphi 0, %s27
      %s49 = sphi 0, %s51
      %s52 = sphi 0, %s49
      %s53 = sphi 0, %s52
      %s69 = sphi 0, %s53
    $region4: #{tpu_custom_call.1} parent=1 // loop_header_branch
      %16 = sbr.rel (%p14) target = $region8
    $region5: #{tpu_custom_call.1} parent=1 // loop_body
      %s18 = ssub.s32 %s13, 1
      %s19 = ssub.s32 %s13, 2
      %s20 = sadd.s32 %s13, 1
      %s21 = ssub.s32 %s13, %s20
      %p22 = scmp.eq.s32.totalorder %s21, 0
      %s24 = sadd.s32 %s23, 1
      %s25 = scalar_select %p22, %s23, %s24
      %p28 = pneg %p22
      %p29 = scmp.eq.s32.totalorder %s13, 1
      %p30 = por %p28, %p29
      %p31 = scmp.ne.s32.totalorder %s23, %s26
      %p32 = scmp.eq.s32.totalorder %s13, 0
      %p33 = por %p31, %p32
      %p34 = scmp.ne.s32.totalorder %s23, %s26
      %p35 = scmp.eq.s32.totalorder %s18, 1
      %p36 = por %p34, %p35
      %p37 = scmp.ne.s32.totalorder %s26, %s27
      %p38 = scmp.eq.s32.totalorder %s18, 0
      %p39 = por %p37, %p38
      %p40 = scmp.ne.s32.totalorder %s26, %s27
      %p41 = scmp.eq.s32.totalorder %s19, 1
      %p42 = por %p40, %p41
      %p44 = scmp.ne.s32.totalorder %s27, %s43
      %p45 = scmp.eq.s32.totalorder %s19, 0
      %p46 = por %p44, %p45
      %s47 = ssub.s32 %s13, %s20
      %p48 = scmp.eq.s32.totalorder %s47, 0
      %s50 = sadd.s32 %s49, 1
      %s51 = scalar_select %p48, %s49, %s50
      %p54 = pneg %p48
      %p55 = scmp.eq.s32.totalorder %s13, 1
      %p56 = por %p54, %p55
      %p57 = scmp.ne.s32.totalorder %s49, %s52
      %p58 = scmp.eq.s32.totalorder %s13, 0
      %p59 = por %p57, %p58
      %p60 = scmp.ne.s32.totalorder %s49, %s52
      %p61 = scmp.eq.s32.totalorder %s18, 1
      %p62 = por %p60, %p61
      %p63 = scmp.ne.s32.totalorder %s52, %s53
      %p64 = scmp.eq.s32.totalorder %s18, 0
      %p65 = por %p63, %p64
      %p66 = scmp.ne.s32.totalorder %s52, %s53
      %p67 = scmp.eq.s32.totalorder %s19, 1
      %p68 = por %p66, %p67
      %p70 = scmp.ne.s32.totalorder %s53, %s69
      %p71 = scmp.eq.s32.totalorder %s19, 0
      %p72 = por %p70, %p71
      %p73 = scmp.le.s32.totalorder 1, %s13
      %p74 = scmp.lt.s32.totalorder %s13, 3
      %p75 = pnand %p73, %p74
      %p76 = pneg %p75
      // Predicated region
      $region9: #{tpu_custom_call.1} parent=5 // pred_check
        _
      $region10: #{tpu_custom_call.1} parent=5 // pred_check_branch
        %78 = sbr.rel (%p75) target = $region12
      $region11: #{tpu_custom_call.1} parent=5 // pred_region
        %s79 = ssub.s32 %s13, 1
      $region12: #{tpu_custom_call.1} parent=5 // pred_fallthru
        _
      %p80 = scmp.lt.s32.totalorder %s13, 2
      // Predicated region
      $region13: #{tpu_custom_call.1} parent=5 // pred_check
        %p81 = pneg %p80
      $region14: #{tpu_custom_call.1} parent=5 // pred_check_branch
        %83 = sbr.rel (%p81) target = $region16
      $region15: #{tpu_custom_call.1} parent=5 // pred_region
        // Predicated region
        $region17: #{tpu_custom_call.1} parent=15 // pred_check
          %p84 = pneg %p33
        $region18: #{tpu_custom_call.1} parent=15 // pred_check_branch
          %86 = sbr.rel (%p84) target = $region20
        $region19: #{tpu_custom_call.1} parent=15 // pred_region
          %s87 = sand.u32 %s23, 1
          %s88 = scalar_lea.sflag [#allocation3], %s87
          %s89 = sand.u32 %s23, 1
          %s90 = smul.addr %s89, 128
          %s91 = scalar_lea.vmem [#allocation2], %s90
          %s93 = ssub.s32 2048, 2048
          %94 = vsyncadd %s88, %s93
          %s95 = smul.addr %s13, 16
          %s96 = smul.addr %s95, 128
          %s97 = scalar_lea.hbm %s0, %s96
          %s98 = sshll.u32 %s91, 4
          %s99 = int_to_ptr.vmem [resolvable:$true] %s98
          %104 = dma.hbm_to_vmem [thread:$0]  %s97, 2048, %s99, %s88, 128, 128, 8
        $region20: #{tpu_custom_call.1} parent=15 // pred_fallthru
          _
      $region16: #{tpu_custom_call.1} parent=5 // pred_fallthru
        _
      %p105 = scmp.le.s32.totalorder 1, %s13
      %p106 = scmp.lt.s32.totalorder %s13, 3
      %p107 = pnand %p105, %p106
      %p108 = pneg %p107
      // Predicated region
      $region21: #{tpu_custom_call.1} parent=5 // pred_check
        _
      $region22: #{tpu_custom_call.1} parent=5 // pred_check_branch
        %110 = sbr.rel (%p107) target = $region24
      $region23: #{tpu_custom_call.1} parent=5 // pred_region
        %s111 = ssub.s32 %s13, 1
        %s112 = sand.u32 %s26, 1
        %s113 = scalar_lea.sflag [#allocation3], %s112
        %s114 = sand.u32 %s26, 1
        %s115 = smul.addr %s114, 128
        %s116 = scalar_lea.vmem [#allocation2], %s115
        // Predicated region
        $region25: #{tpu_custom_call.1} parent=23 // pred_check
          %p117 = pneg %p39
        $region26: #{tpu_custom_call.1} parent=23 // pred_check_branch
          %119 = sbr.rel (%p117) target = $region28
        $region27: #{tpu_custom_call.1} parent=23 // pred_region
          %120 = dma.done %s113, 2048
        $region28: #{tpu_custom_call.1} parent=23 // pred_fallthru
          _
        %s121 = sand.u32 %s26, 1
        %s122 = scalar_lea.sflag [#allocation3], %s121
        %s123 = sand.u32 %s26, 1
        %s124 = smul.addr %s123, 128
        %s125 = scalar_lea.vmem [#allocation2], %s124
        %p126 = pneg %p39
        %p127 = pneg %p36
        %p128 = pneg %p65
        %p129 = pneg %p62
        %s130 = sand.u32 %s52, 1
        %s131 = scalar_lea.sflag [#allocation4], %s130
        %s132 = sand.u32 %s52, 1
        %s133 = smul.addr %s132, 128
        %s134 = scalar_lea.vmem [#allocation5], %s133
        %v135 = vld [vmem:[%s116] sm:$0xff]
        %v136 = vld [vmem:[%s116 + $0x8] sm:$0xff]
        %v137 = vld [vmem:[%s116 + $0x10] sm:$0xff]
        %v138 = vld [vmem:[%s116 + $0x18] sm:$0xff]
        %v139 = vld [vmem:[%s116 + $0x20] sm:$0xff]
        %v140 = vld [vmem:[%s116 + $0x28] sm:$0xff]
        %v141 = vld [vmem:[%s116 + $0x30] sm:$0xff]
        %v142 = vld [vmem:[%s116 + $0x38] sm:$0xff]
        %v143 = vld [vmem:[%s116 + $0x40] sm:$0xff]
        %v144 = vld [vmem:[%s116 + $0x48] sm:$0xff]
        %v145 = vld [vmem:[%s116 + $0x50] sm:$0xff]
        %v146 = vld [vmem:[%s116 + $0x58] sm:$0xff]
        %v147 = vld [vmem:[%s116 + $0x60] sm:$0xff]
        %v148 = vld [vmem:[%s116 + $0x68] sm:$0xff]
        %v149 = vld [vmem:[%s116 + $0x70] sm:$0xff]
        %v150 = vld [vmem:[%s116 + $0x78] sm:$0xff]
        %v151 = vmul.f32 %v135, 0.25
        %v152 = vmul.f32 %v136, 0.25
        %v153 = vmul.f32 %v137, 0.25
        %v154 = vmul.f32 %v138, 0.25
        %v155 = vmul.f32 %v139, 0.25
        %v156 = vmul.f32 %v140, 0.25
        %v157 = vmul.f32 %v141, 0.25
        %v158 = vmul.f32 %v142, 0.25
        %v159 = vmul.f32 %v143, 0.25
        %v160 = vmul.f32 %v144, 0.25
        %v161 = vmul.f32 %v145, 0.25
        %v162 = vmul.f32 %v146, 0.25
        %v163 = vmul.f32 %v147, 0.25
        %v164 = vmul.f32 %v148, 0.25
        %v165 = vmul.f32 %v149, 0.25
        %v166 = vmul.f32 %v150, 0.25
        %v167 = vand.u32 2147483647, %v151
        %v168 = vand.u32 2147483647, %v152
        %v169 = vand.u32 2147483647, %v153
        %v170 = vand.u32 2147483647, %v154
        %v171 = vand.u32 2147483647, %v155
        %v172 = vand.u32 2147483647, %v156
        %v173 = vand.u32 2147483647, %v157
        %v174 = vand.u32 2147483647, %v158
        %v175 = vand.u32 2147483647, %v159
        %v176 = vand.u32 2147483647, %v160
        %v177 = vand.u32 2147483647, %v161
        %v178 = vand.u32 2147483647, %v162
        %v179 = vand.u32 2147483647, %v163
        %v180 = vand.u32 2147483647, %v164
        %v181 = vand.u32 2147483647, %v165
        %v182 = vand.u32 2147483647, %v166
        %183 = vadd.xlane.f32.xlu0 %v167
        %v184 = vpop.xlane.xlu0 %183
        %185 = vadd.xlane.f32.xlu0 %v168
        %v186 = vpop.xlane.xlu0 %185
        %187 = vadd.xlane.f32.xlu0 %v169
        %v188 = vpop.xlane.xlu0 %187
        %189 = vadd.xlane.f32.xlu0 %v170
        %v190 = vpop.xlane.xlu0 %189
        %191 = vadd.xlane.f32.xlu0 %v171
        %v192 = vpop.xlane.xlu0 %191
        %193 = vadd.xlane.f32.xlu0 %v172
        %v194 = vpop.xlane.xlu0 %193
        %195 = vadd.xlane.f32.xlu0 %v173
        %v196 = vpop.xlane.xlu0 %195
        %197 = vadd.xlane.f32.xlu0 %v174
        %v198 = vpop.xlane.xlu0 %197
        %199 = vadd.xlane.f32.xlu0 %v175
        %v200 = vpop.xlane.xlu0 %199
        %201 = vadd.xlane.f32.xlu0 %v176
        %v202 = vpop.xlane.xlu0 %201
        %203 = vadd.xlane.f32.xlu0 %v177
        %v204 = vpop.xlane.xlu0 %203
        %205 = vadd.xlane.f32.xlu0 %v178
        %v206 = vpop.xlane.xlu0 %205
        %207 = vadd.xlane.f32.xlu0 %v179
        %v208 = vpop.xlane.xlu0 %207
        %209 = vadd.xlane.f32.xlu0 %v180
        %v210 = vpop.xlane.xlu0 %209
        %211 = vadd.xlane.f32.xlu0 %v181
        %v212 = vpop.xlane.xlu0 %211
        %213 = vadd.xlane.f32.xlu0 %v182
        %v214 = vpop.xlane.xlu0 %213
        %v215 = vmax.f32 %v184, %v192
        %v216 = vmax.f32 %v186, %v194
        %v217 = vmax.f32 %v188, %v196
        %v218 = vmax.f32 %v190, %v198
        %v219 = vmax.f32 %v215, %v200
        %v220 = vmax.f32 %v216, %v202
        %v221 = vmax.f32 %v217, %v204
        %v222 = vmax.f32 %v218, %v206
        %v223 = vmax.f32 %v219, %v208
        %v224 = vmax.f32 %v220, %v210
        %v225 = vmax.f32 %v221, %v212
        %v226 = vmax.f32 %v222, %v214
        %v227 = vmax.f32 %v223, %v224
        %v228 = vmax.f32 %v225, %v226
        %v229 = vmax.f32 %v227, %v228
        %v230 = vrot.slane %v229, 4
        %v231 = vmax.f32 %v229, %v230
        %v232 = vrot.slane %v231, 2
        %v233 = vmax.f32 %v231, %v232
        %v234 = vrot.slane %v233, 1
        %v235 = vmax.f32 %v233, %v234
        %v236 = vmax.f32 %v235, 1.0
        %v237 = vlog2.pop %v236
        %v238 = vmul.f32 %v237, 0.6931472
        %v239 = vmul.f32 %v238, 1.442695
        %v240 = vceil.f32 %v239
        %v241 = vmax.f32 %v240, 0.0
        %v242 = vmin.f32 %v241, 12.0
        %v243 = vsub.f32 0.0, %v242
        %v244 = vmul.f32 %v243, 0.6931472
        %v245 = vmul.f32 %v244, 1.442695
        %v246 = vpow.pop %v245
        %v247 = vmul.f32 %v151, %v246
        %v248 = vmul.f32 %v152, %v246
        %v249 = vmul.f32 %v153, %v246
        %v250 = vmul.f32 %v154, %v246
        %v251 = vmul.f32 %v155, %v246
        %v252 = vmul.f32 %v156, %v246
        %v253 = vmul.f32 %v157, %v246
        %v254 = vmul.f32 %v158, %v246
        %v255 = vmul.f32 %v159, %v246
        %v256 = vmul.f32 %v160, %v246
        %v257 = vmul.f32 %v161, %v246
        %v258 = vmul.f32 %v162, %v246
        %v259 = vmul.f32 %v163, %v246
        %v260 = vmul.f32 %v164, %v246
        %v261 = vmul.f32 %v165, %v246
        %v262 = vmul.f32 %v166, %v246
        %v263 = vlaneseq
        %v264 = vshrl.u32 %v263, 7
        %v265 = vadd.s32 %v264, 8
        %v266 = vadd.s32 %v264, 16
        %v267 = vadd.s32 %v264, 24
        %v268 = vadd.s32 %v264, 32
        %v269 = vadd.s32 %v264, 40
        %v270 = vadd.s32 %v264, 48
        %v271 = vadd.s32 %v264, 56
        %v272 = vadd.s32 %v264, 64
        %v273 = vadd.s32 %v264, 72
        %v274 = vadd.s32 %v264, 80
        %v275 = vadd.s32 %v264, 88
        %v276 = vadd.s32 %v264, 96
        %v277 = vadd.s32 %v264, 104
        %v278 = vadd.s32 %v264, 112
        %v279 = vadd.s32 %v264, 120
        %v280 = vlaneseq
        %v281 = vand.u32 %v280, 127
        %vm282 = vcmp.eq.s32.totalorder %v264, %v281
        %vm283 = vcmp.eq.s32.totalorder %v265, %v281
        %vm284 = vcmp.eq.s32.totalorder %v266, %v281
        %vm285 = vcmp.eq.s32.totalorder %v267, %v281
        %vm286 = vcmp.eq.s32.totalorder %v268, %v281
        %vm287 = vcmp.eq.s32.totalorder %v269, %v281
        %vm288 = vcmp.eq.s32.totalorder %v270, %v281
        %vm289 = vcmp.eq.s32.totalorder %v271, %v281
        %vm290 = vcmp.eq.s32.totalorder %v272, %v281
        %vm291 = vcmp.eq.s32.totalorder %v273, %v281
        %vm292 = vcmp.eq.s32.totalorder %v274, %v281
        %vm293 = vcmp.eq.s32.totalorder %v275, %v281
        %vm294 = vcmp.eq.s32.totalorder %v276, %v281
        %vm295 = vcmp.eq.s32.totalorder %v277, %v281
        %vm296 = vcmp.eq.s32.totalorder %v278, %v281
        %vm297 = vcmp.eq.s32.totalorder %v279, %v281
        %v298 = vsel %vm282, 1.0, 0.0
        %v299 = vsel %vm283, 1.0, 0.0
        %v300 = vsel %vm284, 1.0, 0.0
        %v301 = vsel %vm285, 1.0, 0.0
        %v302 = vsel %vm286, 1.0, 0.0
        %v303 = vsel %vm287, 1.0, 0.0
        %v304 = vsel %vm288, 1.0, 0.0
        %v305 = vsel %vm289, 1.0, 0.0
        %v306 = vsel %vm290, 1.0, 0.0
        %v307 = vsel %vm291, 1.0, 0.0
        %v308 = vsel %vm292, 1.0, 0.0
        %v309 = vsel %vm293, 1.0, 0.0
        %v310 = vsel %vm294, 1.0, 0.0
        %v311 = vsel %vm295, 1.0, 0.0
        %v312 = vsel %vm296, 1.0, 0.0
        %v313 = vsel %vm297, 1.0, 0.0
        %314 = vmatprep.subr.mxu0 0.0
        %315 = vmatpush1.msra.mxu0 %v313
        %316 = vmatprep.subr.mxu0 0.0
        %317 = vmatpush1.msra.mxu0 %v312
        %318 = vmatprep.subr.mxu0 0.0
        %319 = vmatpush1.msra.mxu0 %v311
        %320 = vmatprep.subr.mxu0 0.0
        %321 = vmatpush1.msra.mxu0 %v310
        %322 = vmatprep.subr.mxu0 0.0
        %323 = vmatpush1.msra.mxu0 %v309
        %324 = vmatprep.subr.mxu0 0.0
        %325 = vmatpush1.msra.mxu0 %v308
        %326 = vmatprep.subr.mxu0 0.0
        %327 = vmatpush1.msra.mxu0 %v307
        %328 = vmatprep.subr.mxu0 0.0
        %329 = vmatpush1.msra.mxu0 %v306
        %330 = vmatprep.subr.mxu0 0.0
        %331 = vmatpush1.msra.mxu0 %v305
        %332 = vmatprep.subr.mxu0 0.0
        %333 = vmatpush1.msra.mxu0 %v304
        %334 = vmatprep.subr.mxu0 0.0
        %335 = vmatpush1.msra.mxu0 %v303
        %336 = vmatprep.subr.mxu0 0.0
        %337 = vmatpush1.msra.mxu0 %v302
        %338 = vmatprep.subr.mxu0 0.0
        %339 = vmatpush1.msra.mxu0 %v301
        %340 = vmatprep.subr.mxu0 0.0
        %341 = vmatpush1.msra.mxu0 %v300
        %342 = vmatprep.subr.mxu0 0.0
        %343 = vmatpush1.msra.mxu0 %v299
        %344 = vmatprep.subr.mxu0 0.0
        %345 = vmatpush1.msra.mxu0 %v298
        %346 = vmatprep.subr.mxu0 0.0
        %347 = vmatpush2.msra.mxu0 0.0
        %348 = vmatprep.subr.mxu0 0.0
        %349 = vmatpush2.msra.mxu0 0.0
        %350 = vmatprep.subr.mxu0 0.0
        %351 = vmatpush2.msra.mxu0 0.0
        %352 = vmatprep.subr.mxu0 0.0
        %353 = vmatpush2.msra.mxu0 0.0
        %354 = vmatprep.subr.mxu0 0.0
        %355 = vmatpush2.msra.mxu0 0.0
        %356 = vmatprep.subr.mxu0 0.0
        %357 = vmatpush2.msra.mxu0 0.0
        %358 = vmatprep.subr.mxu0 0.0
        %359 = vmatpush2.msra.mxu0 0.0
        %360 = vmatprep.subr.mxu0 0.0
        %361 = vmatpush2.msra.mxu0 0.0
        %362 = vmatprep.subr.mxu0 0.0
        %363 = vmatpush2.msra.mxu0 0.0
        %364 = vmatprep.subr.mxu0 0.0
        %365 = vmatpush2.msra.mxu0 0.0
        %366 = vmatprep.subr.mxu0 0.0
        %367 = vmatpush2.msra.mxu0 0.0
        %368 = vmatprep.subr.mxu0 0.0
        %369 = vmatpush2.msra.mxu0 0.0
        %370 = vmatprep.subr.mxu0 0.0
        %371 = vmatpush2.msra.mxu0 0.0
        %372 = vmatprep.subr.mxu0 0.0
        %373 = vmatpush2.msra.mxu0 0.0
        %374 = vmatprep.subr.mxu0 0.0
        %375 = vmatpush2.msra.mxu0 0.0
        %376 = vmatprep.subr.mxu0 0.0
        %377 = vmatpush2.msra.mxu0 0.0
        %378 = vmatprep.mubr.f32.mxu0 0.0
        %379 = vmatmul.mubr.f32.gmra.mxu0 %v247
        %v380 = vpop.f32.mrf.mxu0
        %v381 = vadd.f32 0.0, %v380
        %v382 = vpop.f32.mrf.mxu0
        %383 = vmatprep.mubr.f32.mxu0 0.0
        %384 = vmatmul.mubr.f32.gmra.mxu0 %v248
        %v385 = vpop.f32.mrf.mxu0
        %v386 = vadd.f32 0.0, %v385
        %v387 = vpop.f32.mrf.mxu0
        %388 = vmatprep.mubr.f32.mxu0 0.0
        %389 = vmatmul.mubr.f32.gmra.mxu0 %v249
        %v390 = vpop.f32.mrf.mxu0
        %v391 = vadd.f32 0.0, %v390
        %v392 = vpop.f32.mrf.mxu0
        %393 = vmatprep.mubr.f32.mxu0 0.0
        %394 = vmatmul.mubr.f32.gmra.mxu0 %v250
        %v395 = vpop.f32.mrf.mxu0
        %v396 = vadd.f32 0.0, %v395
        %v397 = vpop.f32.mrf.mxu0
        %398 = vmatprep.mubr.f32.mxu0 0.0
        %399 = vmatmul.mubr.f32.gmra.mxu0 %v251
        %v400 = vpop.f32.mrf.mxu0
        %v401 = vadd.f32 0.0, %v400
        %v402 = vpop.f32.mrf.mxu0
        %403 = vmatprep.mubr.f32.mxu0 0.0
        %404 = vmatmul.mubr.f32.gmra.mxu0 %v252
        %v405 = vpop.f32.mrf.mxu0
        %v406 = vadd.f32 0.0, %v405
        %v407 = vpop.f32.mrf.mxu0
        %408 = vmatprep.mubr.f32.mxu0 0.0
        %409 = vmatmul.mubr.f32.gmra.mxu0 %v253
        %v410 = vpop.f32.mrf.mxu0
        %v411 = vadd.f32 0.0, %v410
        %v412 = vpop.f32.mrf.mxu0
        %413 = vmatprep.mubr.f32.mxu0 0.0
        %414 = vmatmul.mubr.f32.gmra.mxu0 %v254
        %v415 = vpop.f32.mrf.mxu0
        %v416 = vadd.f32 0.0, %v415
        %v417 = vpop.f32.mrf.mxu0
        %418 = vmatprep.mubr.f32.mxu0 0.0
        %419 = vmatmul.mubr.f32.gmra.mxu0 %v255
        %v420 = vpop.f32.mrf.mxu0
        %v421 = vadd.f32 0.0, %v420
        %v422 = vpop.f32.mrf.mxu0
        %423 = vmatprep.mubr.f32.mxu0 0.0
        %424 = vmatmul.mubr.f32.gmra.mxu0 %v256
        %v425 = vpop.f32.mrf.mxu0
        %v426 = vadd.f32 0.0, %v425
        %v427 = vpop.f32.mrf.mxu0
        %428 = vmatprep.mubr.f32.mxu0 0.0
        %429 = vmatmul.mubr.f32.gmra.mxu0 %v257
        %v430 = vpop.f32.mrf.mxu0
        %v431 = vadd.f32 0.0, %v430
        %v432 = vpop.f32.mrf.mxu0
        %433 = vmatprep.mubr.f32.mxu0 0.0
        %434 = vmatmul.mubr.f32.gmra.mxu0 %v258
        %v435 = vpop.f32.mrf.mxu0
        %v436 = vadd.f32 0.0, %v435
        %v437 = vpop.f32.mrf.mxu0
        %438 = vmatprep.mubr.f32.mxu0 0.0
        %439 = vmatmul.mubr.f32.gmra.mxu0 %v259
        %v440 = vpop.f32.mrf.mxu0
        %v441 = vadd.f32 0.0, %v440
        %v442 = vpop.f32.mrf.mxu0
        %443 = vmatprep.mubr.f32.mxu0 0.0
        %444 = vmatmul.mubr.f32.gmra.mxu0 %v260
        %v445 = vpop.f32.mrf.mxu0
        %v446 = vadd.f32 0.0, %v445
        %v447 = vpop.f32.mrf.mxu0
        %448 = vmatprep.mubr.f32.mxu0 0.0
        %449 = vmatmul.mubr.f32.gmra.mxu0 %v261
        %v450 = vpop.f32.mrf.mxu0
        %v451 = vadd.f32 0.0, %v450
        %v452 = vpop.f32.mrf.mxu0
        %453 = vmatprep.mubr.f32.mxu0 0.0
        %454 = vmatmul.mubr.f32.gmra.mxu0 %v262
        %v455 = vpop.f32.mrf.mxu0
        %v456 = vadd.f32 0.0, %v455
        %v457 = vpop.f32.mrf.mxu0
        %458 = vdwg.mxu0
        %v459 = vmul.f32 %v381, 0.07692308
        %v460 = vmul.f32 %v386, 0.07692308
        %v461 = vmul.f32 %v391, 0.07692308
        %v462 = vmul.f32 %v396, 0.07692308
        %v463 = vmul.f32 %v401, 0.07692308
        %v464 = vmul.f32 %v406, 0.07692308
        %v465 = vmul.f32 %v411, 0.07692308
        %v466 = vmul.f32 %v416, 0.07692308
        %v467 = vmul.f32 %v421, 0.07692308
        %v468 = vmul.f32 %v426, 0.07692308
        %v469 = vmul.f32 %v431, 0.07692308
        %v470 = vmul.f32 %v436, 0.07692308
        %v471 = vmul.f32 %v441, 0.07692308
        %v472 = vmul.f32 %v446, 0.07692308
        %v473 = vmul.f32 %v451, 0.07692308
        %v474 = vmul.f32 %v456, 0.07692308
        %v475 = vadd.f32 %v298, %v459
        %v476 = vadd.f32 %v299, %v460
        %v477 = vadd.f32 %v300, %v461
        %v478 = vadd.f32 %v301, %v462
        %v479 = vadd.f32 %v302, %v463
        %v480 = vadd.f32 %v303, %v464
        %v481 = vadd.f32 %v304, %v465
        %v482 = vadd.f32 %v305, %v466
        %v483 = vadd.f32 %v306, %v467
        %v484 = vadd.f32 %v307, %v468
        %v485 = vadd.f32 %v308, %v469
        %v486 = vadd.f32 %v309, %v470
        %v487 = vadd.f32 %v310, %v471
        %v488 = vadd.f32 %v311, %v472
        %v489 = vadd.f32 %v312, %v473
        %v490 = vadd.f32 %v313, %v474
        %491 = vmatprep.subr.mxu0 0.0
        %492 = vmatpush1.msra.mxu0 %v490
        %493 = vmatprep.subr.mxu0 0.0
        %494 = vmatpush1.msra.mxu0 %v489
        %495 = vmatprep.subr.mxu0 0.0
        %496 = vmatpush1.msra.mxu0 %v488
        %497 = vmatprep.subr.mxu0 0.0
        %498 = vmatpush1.msra.mxu0 %v487
        %499 = vmatprep.subr.mxu0 0.0
        %500 = vmatpush1.msra.mxu0 %v486
        %501 = vmatprep.subr.mxu0 0.0
        %502 = vmatpush1.msra.mxu0 %v485
        %503 = vmatprep.subr.mxu0 0.0
        %504 = vmatpush1.msra.mxu0 %v484
        %505 = vmatprep.subr.mxu0 0.0
        %506 = vmatpush1.msra.mxu0 %v483
        %507 = vmatprep.subr.mxu0 0.0
        %508 = vmatpush1.msra.mxu0 %v482
        %509 = vmatprep.subr.mxu0 0.0
        %510 = vmatpush1.msra.mxu0 %v481
        %511 = vmatprep.subr.mxu0 0.0
        %512 = vmatpush1.msra.mxu0 %v480
        %513 = vmatprep.subr.mxu0 0.0
        %514 = vmatpush1.msra.mxu0 %v479
        %515 = vmatprep.subr.mxu0 0.0
        %516 = vmatpush1.msra.mxu0 %v478
        %517 = vmatprep.subr.mxu0 0.0
        %518 = vmatpush1.msra.mxu0 %v477
        %519 = vmatprep.subr.mxu0 0.0
        %520 = vmatpush1.msra.mxu0 %v476
        %521 = vmatprep.subr.mxu0 0.0
        %522 = vmatpush1.msra.mxu0 %v475
        %523 = vmatprep.subr.mxu0 0.0
        %524 = vmatpush2.msra.mxu0 0.0
        %525 = vmatprep.subr.mxu0 0.0
        %526 = vmatpush2.msra.mxu0 0.0
        %527 = vmatprep.subr.mxu0 0.0
        %528 = vmatpush2.msra.mxu0 0.0
        %529 = vmatprep.subr.mxu0 0.0
        %530 = vmatpush2.msra.mxu0 0.0
        %531 = vmatprep.subr.mxu0 0.0
        %532 = vmatpush2.msra.mxu0 0.0
        %533 = vmatprep.subr.mxu0 0.0
        %534 = vmatpush2.msra.mxu0 0.0
        %535 = vmatprep.subr.mxu0 0.0
        %536 = vmatpush2.msra.mxu0 0.0
        %537 = vmatprep.subr.mxu0 0.0
        %538 = vmatpush2.msra.mxu0 0.0
        %539 = vmatprep.subr.mxu0 0.0
        %540 = vmatpush2.msra.mxu0 0.0
        %541 = vmatprep.subr.mxu0 0.0
        %542 = vmatpush2.msra.mxu0 0.0
        %543 = vmatprep.subr.mxu0 0.0
        %544 = vmatpush2.msra.mxu0 0.0
        %545 = vmatprep.subr.mxu0 0.0
        %546 = vmatpush2.msra.mxu0 0.0
        %547 = vmatprep.subr.mxu0 0.0
        %548 = vmatpush2.msra.mxu0 0.0
        %549 = vmatprep.subr.mxu0 0.0
        %550 = vmatpush2.msra.mxu0 0.0
        %551 = vmatprep.subr.mxu0 0.0
        %552 = vmatpush2.msra.mxu0 0.0
        %553 = vmatprep.subr.mxu0 0.0
        %554 = vmatpush2.msra.mxu0 0.0
        %555 = vmatprep.mubr.f32.mxu0 0.0
        %556 = vmatmul.mubr.f32.gmra.mxu0 %v247
        %v557 = vpop.f32.mrf.mxu0
        %v558 = vadd.f32 0.0, %v557
        %v559 = vpop.f32.mrf.mxu0
        %560 = vmatprep.mubr.f32.mxu0 0.0
        %561 = vmatmul.mubr.f32.gmra.mxu0 %v248
        %v562 = vpop.f32.mrf.mxu0
        %v563 = vadd.f32 0.0, %v562
        %v564 = vpop.f32.mrf.mxu0
        %565 = vmatprep.mubr.f32.mxu0 0.0
        %566 = vmatmul.mubr.f32.gmra.mxu0 %v249
        %v567 = vpop.f32.mrf.mxu0
        %v568 = vadd.f32 0.0, %v567
        %v569 = vpop.f32.mrf.mxu0
        %570 = vmatprep.mubr.f32.mxu0 0.0
        %571 = vmatmul.mubr.f32.gmra.mxu0 %v250
        %v572 = vpop.f32.mrf.mxu0
        %v573 = vadd.f32 0.0, %v572
        %v574 = vpop.f32.mrf.mxu0
        %575 = vmatprep.mubr.f32.mxu0 0.0
        %576 = vmatmul.mubr.f32.gmra.mxu0 %v251
        %v577 = vpop.f32.mrf.mxu0
        %v578 = vadd.f32 0.0, %v577
        %v579 = vpop.f32.mrf.mxu0
        %580 = vmatprep.mubr.f32.mxu0 0.0
        %581 = vmatmul.mubr.f32.gmra.mxu0 %v252
        %v582 = vpop.f32.mrf.mxu0
        %v583 = vadd.f32 0.0, %v582
        %v584 = vpop.f32.mrf.mxu0
        %585 = vmatprep.mubr.f32.mxu0 0.0
        %586 = vmatmul.mubr.f32.gmra.mxu0 %v253
        %v587 = vpop.f32.mrf.mxu0
        %v588 = vadd.f32 0.0, %v587
        %v589 = vpop.f32.mrf.mxu0
        %590 = vmatprep.mubr.f32.mxu0 0.0
        %591 = vmatmul.mubr.f32.gmra.mxu0 %v254
        %v592 = vpop.f32.mrf.mxu0
        %v593 = vadd.f32 0.0, %v592
        %v594 = vpop.f32.mrf.mxu0
        %595 = vmatprep.mubr.f32.mxu0 0.0
        %596 = vmatmul.mubr.f32.gmra.mxu0 %v255
        %v597 = vpop.f32.mrf.mxu0
        %v598 = vadd.f32 0.0, %v597
        %v599 = vpop.f32.mrf.mxu0
        %600 = vmatprep.mubr.f32.mxu0 0.0
        %601 = vmatmul.mubr.f32.gmra.mxu0 %v256
        %v602 = vpop.f32.mrf.mxu0
        %v603 = vadd.f32 0.0, %v602
        %v604 = vpop.f32.mrf.mxu0
        %605 = vmatprep.mubr.f32.mxu0 0.0
        %606 = vmatmul.mubr.f32.gmra.mxu0 %v257
        %v607 = vpop.f32.mrf.mxu0
        %v608 = vadd.f32 0.0, %v607
        %v609 = vpop.f32.mrf.mxu0
        %610 = vmatprep.mubr.f32.mxu0 0.0
        %611 = vmatmul.mubr.f32.gmra.mxu0 %v258
        %v612 = vpop.f32.mrf.mxu0
        %v613 = vadd.f32 0.0, %v612
        %v614 = vpop.f32.mrf.mxu0
        %615 = vmatprep.mubr.f32.mxu0 0.0
        %616 = vmatmul.mubr.f32.gmra.mxu0 %v259
        %v617 = vpop.f32.mrf.mxu0
        %v618 = vadd.f32 0.0, %v617
        %v619 = vpop.f32.mrf.mxu0
        %620 = vmatprep.mubr.f32.mxu0 0.0
        %621 = vmatmul.mubr.f32.gmra.mxu0 %v260
        %v622 = vpop.f32.mrf.mxu0
        %v623 = vadd.f32 0.0, %v622
        %v624 = vpop.f32.mrf.mxu0
        %625 = vmatprep.mubr.f32.mxu0 0.0
        %626 = vmatmul.mubr.f32.gmra.mxu0 %v261
        %v627 = vpop.f32.mrf.mxu0
        %v628 = vadd.f32 0.0, %v627
        %v629 = vpop.f32.mrf.mxu0
        %630 = vmatprep.mubr.f32.mxu0 0.0
        %631 = vmatmul.mubr.f32.gmra.mxu0 %v262
        %v632 = vpop.f32.mrf.mxu0
        %v633 = vadd.f32 0.0, %v632
        %v634 = vpop.f32.mrf.mxu0
        %635 = vdwg.mxu0
        %v636 = vmul.f32 %v558, 0.083333336
        %v637 = vmul.f32 %v563, 0.083333336
        %v638 = vmul.f32 %v568, 0.083333336
        %v639 = vmul.f32 %v573, 0.083333336
        %v640 = vmul.f32 %v578, 0.083333336
        %v641 = vmul.f32 %v583, 0.083333336
        %v642 = vmul.f32 %v588, 0.083333336
        %v643 = vmul.f32 %v593, 0.083333336
        %v644 = vmul.f32 %v598, 0.083333336
        %v645 = vmul.f32 %v603, 0.083333336
        %v646 = vmul.f32 %v608, 0.083333336
        %v647 = vmul.f32 %v613, 0.083333336
        %v648 = vmul.f32 %v618, 0.083333336
        %v649 = vmul.f32 %v623, 0.083333336
        %v650 = vmul.f32 %v628, 0.083333336
        %v651 = vmul.f32 %v633, 0.083333336
        %v652 = vadd.f32 %v298, %v636
        %v653 = vadd.f32 %v299, %v637
        %v654 = vadd.f32 %v300, %v638
        %v655 = vadd.f32 %v301, %v639
        %v656 = vadd.f32 %v302, %v640
        %v657 = vadd.f32 %v303, %v641
        %v658 = vadd.f32 %v304, %v642
        %v659 = vadd.f32 %v305, %v643
        %v660 = vadd.f32 %v306, %v644
        %v661 = vadd.f32 %v307, %v645
        %v662 = vadd.f32 %v308, %v646
        %v663 = vadd.f32 %v309, %v647
        %v664 = vadd.f32 %v310, %v648
        %v665 = vadd.f32 %v311, %v649
        %v666 = vadd.f32 %v312, %v650
        %v667 = vadd.f32 %v313, %v651
        %668 = vmatprep.subr.mxu0 0.0
        %669 = vmatpush1.msra.mxu0 %v667
        %670 = vmatprep.subr.mxu0 0.0
        %671 = vmatpush1.msra.mxu0 %v666
        %672 = vmatprep.subr.mxu0 0.0
        %673 = vmatpush1.msra.mxu0 %v665
        %674 = vmatprep.subr.mxu0 0.0
        %675 = vmatpush1.msra.mxu0 %v664
        %676 = vmatprep.subr.mxu0 0.0
        %677 = vmatpush1.msra.mxu0 %v663
        %678 = vmatprep.subr.mxu0 0.0
        %679 = vmatpush1.msra.mxu0 %v662
        %680 = vmatprep.subr.mxu0 0.0
        %681 = vmatpush1.msra.mxu0 %v661
        %682 = vmatprep.subr.mxu0 0.0
        %683 = vmatpush1.msra.mxu0 %v660
        %684 = vmatprep.subr.mxu0 0.0
        %685 = vmatpush1.msra.mxu0 %v659
        %686 = vmatprep.subr.mxu0 0.0
        %687 = vmatpush1.msra.mxu0 %v658
        %688 = vmatprep.subr.mxu0 0.0
        %689 = vmatpush1.msra.mxu0 %v657
        %690 = vmatprep.subr.mxu0 0.0
        %691 = vmatpush1.msra.mxu0 %v656
        %692 = vmatprep.subr.mxu0 0.0
        %693 = vmatpush1.msra.mxu0 %v655
        %694 = vmatprep.subr.mxu0 0.0
        %695 = vmatpush1.msra.mxu0 %v654
        %696 = vmatprep.subr.mxu0 0.0
        %697 = vmatpush1.msra.mxu0 %v653
        %698 = vmatprep.subr.mxu0 0.0
        %699 = vmatpush1.msra.mxu0 %v652
        %700 = vmatprep.subr.mxu0 0.0
        %701 = vmatpush2.msra.mxu0 0.0
        %702 = vmatprep.subr.mxu0 0.0
        %703 = vmatpush2.msra.mxu0 0.0
        %704 = vmatprep.subr.mxu0 0.0
        %705 = vmatpush2.msra.mxu0 0.0
        %706 = vmatprep.subr.mxu0 0.0
        %707 = vmatpush2.msra.mxu0 0.0
        %708 = vmatprep.subr.mxu0 0.0
        %709 = vmatpush2.msra.mxu0 0.0
        %710 = vmatprep.subr.mxu0 0.0
        %711 = vmatpush2.msra.mxu0 0.0
        %712 = vmatprep.subr.mxu0 0.0
        %713 = vmatpush2.msra.mxu0 0.0
        %714 = vmatprep.subr.mxu0 0.0
        %715 = vmatpush2.msra.mxu0 0.0
        %716 = vmatprep.subr.mxu0 0.0
        %717 = vmatpush2.msra.mxu0 0.0
        %718 = vmatprep.subr.mxu0 0.0
        %719 = vmatpush2.msra.mxu0 0.0
        %720 = vmatprep.subr.mxu0 0.0
        %721 = vmatpush2.msra.mxu0 0.0
        %722 = vmatprep.subr.mxu0 0.0
        %723 = vmatpush2.msra.mxu0 0.0
        %724 = vmatprep.subr.mxu0 0.0
        %725 = vmatpush2.msra.mxu0 0.0
        %726 = vmatprep.subr.mxu0 0.0
        %727 = vmatpush2.msra.mxu0 0.0
        %728 = vmatprep.subr.mxu0 0.0
        %729 = vmatpush2.msra.mxu0 0.0
        %730 = vmatprep.subr.mxu0 0.0
        %731 = vmatpush2.msra.mxu0 0.0
        %732 = vmatprep.mubr.f32.mxu0 0.0
        %733 = vmatmul.mubr.f32.gmra.mxu0 %v247
        %v734 = vpop.f32.mrf.mxu0
        %v735 = vadd.f32 0.0, %v734
        %v736 = vpop.f32.mrf.mxu0
        %737 = vmatprep.mubr.f32.mxu0 0.0
        %738 = vmatmul.mubr.f32.gmra.mxu0 %v248
        %v739 = vpop.f32.mrf.mxu0
        %v740 = vadd.f32 0.0, %v739
        %v741 = vpop.f32.mrf.mxu0
        %742 = vmatprep.mubr.f32.mxu0 0.0
        %743 = vmatmul.mubr.f32.gmra.mxu0 %v249
        %v744 = vpop.f32.mrf.mxu0
        %v745 = vadd.f32 0.0, %v744
        %v746 = vpop.f32.mrf.mxu0
        %747 = vmatprep.mubr.f32.mxu0 0.0
        %748 = vmatmul.mubr.f32.gmra.mxu0 %v250
        %v749 = vpop.f32.mrf.mxu0
        %v750 = vadd.f32 0.0, %v749
        %v751 = vpop.f32.mrf.mxu0
        %752 = vmatprep.mubr.f32.mxu0 0.0
        %753 = vmatmul.mubr.f32.gmra.mxu0 %v251
        %v754 = vpop.f32.mrf.mxu0
        %v755 = vadd.f32 0.0, %v754
        %v756 = vpop.f32.mrf.mxu0
        %757 = vmatprep.mubr.f32.mxu0 0.0
        %758 = vmatmul.mubr.f32.gmra.mxu0 %v252
        %v759 = vpop.f32.mrf.mxu0
        %v760 = vadd.f32 0.0, %v759
        %v761 = vpop.f32.mrf.mxu0
        %762 = vmatprep.mubr.f32.mxu0 0.0
        %763 = vmatmul.mubr.f32.gmra.mxu0 %v253
        %v764 = vpop.f32.mrf.mxu0
        %v765 = vadd.f32 0.0, %v764
        %v766 = vpop.f32.mrf.mxu0
        %767 = vmatprep.mubr.f32.mxu0 0.0
        %768 = vmatmul.mubr.f32.gmra.mxu0 %v254
        %v769 = vpop.f32.mrf.mxu0
        %v770 = vadd.f32 0.0, %v769
        %v771 = vpop.f32.mrf.mxu0
        %772 = vmatprep.mubr.f32.mxu0 0.0
        %773 = vmatmul.mubr.f32.gmra.mxu0 %v255
        %v774 = vpop.f32.mrf.mxu0
        %v775 = vadd.f32 0.0, %v774
        %v776 = vpop.f32.mrf.mxu0
        %777 = vmatprep.mubr.f32.mxu0 0.0
        %778 = vmatmul.mubr.f32.gmra.mxu0 %v256
        %v779 = vpop.f32.mrf.mxu0
        %v780 = vadd.f32 0.0, %v779
        %v781 = vpop.f32.mrf.mxu0
        %782 = vmatprep.mubr.f32.mxu0 0.0
        %783 = vmatmul.mubr.f32.gmra.mxu0 %v257
        %v784 = vpop.f32.mrf.mxu0
        %v785 = vadd.f32 0.0, %v784
        %v786 = vpop.f32.mrf.mxu0
        %787 = vmatprep.mubr.f32.mxu0 0.0
        %788 = vmatmul.mubr.f32.gmra.mxu0 %v258
        %v789 = vpop.f32.mrf.mxu0
        %v790 = vadd.f32 0.0, %v789
        %v791 = vpop.f32.mrf.mxu0
        %792 = vmatprep.mubr.f32.mxu0 0.0
        %793 = vmatmul.mubr.f32.gmra.mxu0 %v259
        %v794 = vpop.f32.mrf.mxu0
        %v795 = vadd.f32 0.0, %v794
        %v796 = vpop.f32.mrf.mxu0
        %797 = vmatprep.mubr.f32.mxu0 0.0
        %798 = vmatmul.mubr.f32.gmra.mxu0 %v260
        %v799 = vpop.f32.mrf.mxu0
        %v800 = vadd.f32 0.0, %v799
        %v801 = vpop.f32.mrf.mxu0
        %802 = vmatprep.mubr.f32.mxu0 0.0
        %803 = vmatmul.mubr.f32.gmra.mxu0 %v261
        %v804 = vpop.f32.mrf.mxu0
        %v805 = vadd.f32 0.0, %v804
        %v806 = vpop.f32.mrf.mxu0
        %807 = vmatprep.mubr.f32.mxu0 0.0
        %808 = vmatmul.mubr.f32.gmra.mxu0 %v262
        %v809 = vpop.f32.mrf.mxu0
        %v810 = vadd.f32 0.0, %v809
        %v811 = vpop.f32.mrf.mxu0
        %812 = vdwg.mxu0
        %v813 = vmul.f32 %v735, 0.09090909
        %v814 = vmul.f32 %v740, 0.09090909
        %v815 = vmul.f32 %v745, 0.09090909
        %v816 = vmul.f32 %v750, 0.09090909
        %v817 = vmul.f32 %v755, 0.09090909
        %v818 = vmul.f32 %v760, 0.09090909
        %v819 = vmul.f32 %v765, 0.09090909
        %v820 = vmul.f32 %v770, 0.09090909
        %v821 = vmul.f32 %v775, 0.09090909
        %v822 = vmul.f32 %v780, 0.09090909
        %v823 = vmul.f32 %v785, 0.09090909
        %v824 = vmul.f32 %v790, 0.09090909
        %v825 = vmul.f32 %v795, 0.09090909
        %v826 = vmul.f32 %v800, 0.09090909
        %v827 = vmul.f32 %v805, 0.09090909
        %v828 = vmul.f32 %v810, 0.09090909
        %v829 = vadd.f32 %v298, %v813
        %v830 = vadd.f32 %v299, %v814
        %v831 = vadd.f32 %v300, %v815
        %v832 = vadd.f32 %v301, %v816
        %v833 = vadd.f32 %v302, %v817
        %v834 = vadd.f32 %v303, %v818
        %v835 = vadd.f32 %v304, %v819
        %v836 = vadd.f32 %v305, %v820
        %v837 = vadd.f32 %v306, %v821
        %v838 = vadd.f32 %v307, %v822
        %v839 = vadd.f32 %v308, %v823
        %v840 = vadd.f32 %v309, %v824
        %v841 = vadd.f32 %v310, %v825
        %v842 = vadd.f32 %v311, %v826
        %v843 = vadd.f32 %v312, %v827
        %v844 = vadd.f32 %v313, %v828
        %845 = vmatprep.subr.mxu0 0.0
        %846 = vmatpush1.msra.mxu0 %v844
        %847 = vmatprep.subr.mxu0 0.0
        %848 = vmatpush1.msra.mxu0 %v843
        %849 = vmatprep.subr.mxu0 0.0
        %850 = vmatpush1.msra.mxu0 %v842
        %851 = vmatprep.subr.mxu0 0.0
        %852 = vmatpush1.msra.mxu0 %v841
        %853 = vmatprep.subr.mxu0 0.0
        %854 = vmatpush1.msra.mxu0 %v840
        %855 = vmatprep.subr.mxu0 0.0
        %856 = vmatpush1.msra.mxu0 %v839
        %857 = vmatprep.subr.mxu0 0.0
        %858 = vmatpush1.msra.mxu0 %v838
        %859 = vmatprep.subr.mxu0 0.0
        %860 = vmatpush1.msra.mxu0 %v837
        %861 = vmatprep.subr.mxu0 0.0
        %862 = vmatpush1.msra.mxu0 %v836
        %863 = vmatprep.subr.mxu0 0.0
        %864 = vmatpush1.msra.mxu0 %v835
        %865 = vmatprep.subr.mxu0 0.0
        %866 = vmatpush1.msra.mxu0 %v834
        %867 = vmatprep.subr.mxu0 0.0
        %868 = vmatpush1.msra.mxu0 %v833
        %869 = vmatprep.subr.mxu0 0.0
        %870 = vmatpush1.msra.mxu0 %v832
        %871 = vmatprep.subr.mxu0 0.0
        %872 = vmatpush1.msra.mxu0 %v831
        %873 = vmatprep.subr.mxu0 0.0
        %874 = vmatpush1.msra.mxu0 %v830
        %875 = vmatprep.subr.mxu0 0.0
        %876 = vmatpush1.msra.mxu0 %v829
        %877 = vmatprep.subr.mxu0 0.0
        %878 = vmatpush2.msra.mxu0 0.0
        %879 = vmatprep.subr.mxu0 0.0
        %880 = vmatpush2.msra.mxu0 0.0
        %881 = vmatprep.subr.mxu0 0.0
        %882 = vmatpush2.msra.mxu0 0.0
        %883 = vmatprep.subr.mxu0 0.0
        %884 = vmatpush2.msra.mxu0 0.0
        %885 = vmatprep.subr.mxu0 0.0
        %886 = vmatpush2.msra.mxu0 0.0
        %887 = vmatprep.subr.mxu0 0.0
        %888 = vmatpush2.msra.mxu0 0.0
        %889 = vmatprep.subr.mxu0 0.0
        %890 = vmatpush2.msra.mxu0 0.0
        %891 = vmatprep.subr.mxu0 0.0
        %892 = vmatpush2.msra.mxu0 0.0
        %893 = vmatprep.subr.mxu0 0.0
        %894 = vmatpush2.msra.mxu0 0.0
        %895 = vmatprep.subr.mxu0 0.0
        %896 = vmatpush2.msra.mxu0 0.0
        %897 = vmatprep.subr.mxu0 0.0
        %898 = vmatpush2.msra.mxu0 0.0
        %899 = vmatprep.subr.mxu0 0.0
        %900 = vmatpush2.msra.mxu0 0.0
        %901 = vmatprep.subr.mxu0 0.0
        %902 = vmatpush2.msra.mxu0 0.0
        %903 = vmatprep.subr.mxu0 0.0
        %904 = vmatpush2.msra.mxu0 0.0
        %905 = vmatprep.subr.mxu0 0.0
        %906 = vmatpush2.msra.mxu0 0.0
        %907 = vmatprep.subr.mxu0 0.0
        %908 = vmatpush2.msra.mxu0 0.0
        %909 = vmatprep.mubr.f32.mxu0 0.0
        %910 = vmatmul.mubr.f32.gmra.mxu0 %v247
        %v911 = vpop.f32.mrf.mxu0
        %v912 = vadd.f32 0.0, %v911
        %v913 = vpop.f32.mrf.mxu0
        %914 = vmatprep.mubr.f32.mxu0 0.0
        %915 = vmatmul.mubr.f32.gmra.mxu0 %v248
        %v916 = vpop.f32.mrf.mxu0
        %v917 = vadd.f32 0.0, %v916
        %v918 = vpop.f32.mrf.mxu0
        %919 = vmatprep.mubr.f32.mxu0 0.0
        %920 = vmatmul.mubr.f32.gmra.mxu0 %v249
        %v921 = vpop.f32.mrf.mxu0
        %v922 = vadd.f32 0.0, %v921
        %v923 = vpop.f32.mrf.mxu0
        %924 = vmatprep.mubr.f32.mxu0 0.0
        %925 = vmatmul.mubr.f32.gmra.mxu0 %v250
        %v926 = vpop.f32.mrf.mxu0
        %v927 = vadd.f32 0.0, %v926
        %v928 = vpop.f32.mrf.mxu0
        %929 = vmatprep.mubr.f32.mxu0 0.0
        %930 = vmatmul.mubr.f32.gmra.mxu0 %v251
        %v931 = vpop.f32.mrf.mxu0
        %v932 = vadd.f32 0.0, %v931
        %v933 = vpop.f32.mrf.mxu0
        %934 = vmatprep.mubr.f32.mxu0 0.0
        %935 = vmatmul.mubr.f32.gmra.mxu0 %v252
        %v936 = vpop.f32.mrf.mxu0
        %v937 = vadd.f32 0.0, %v936
        %v938 = vpop.f32.mrf.mxu0
        %939 = vmatprep.mubr.f32.mxu0 0.0
        %940 = vmatmul.mubr.f32.gmra.mxu0 %v253
        %v941 = vpop.f32.mrf.mxu0
        %v942 = vadd.f32 0.0, %v941
        %v943 = vpop.f32.mrf.mxu0
        %944 = vmatprep.mubr.f32.mxu0 0.0
        %945 = vmatmul.mubr.f32.gmra.mxu0 %v254
        %v946 = vpop.f32.mrf.mxu0
        %v947 = vadd.f32 0.0, %v946
        %v948 = vpop.f32.mrf.mxu0
        %949 = vmatprep.mubr.f32.mxu0 0.0
        %950 = vmatmul.mubr.f32.gmra.mxu0 %v255
        %v951 = vpop.f32.mrf.mxu0
        %v952 = vadd.f32 0.0, %v951
        %v953 = vpop.f32.mrf.mxu0
        %954 = vmatprep.mubr.f32.mxu0 0.0
        %955 = vmatmul.mubr.f32.gmra.mxu0 %v256
        %v956 = vpop.f32.mrf.mxu0
        %v957 = vadd.f32 0.0, %v956
        %v958 = vpop.f32.mrf.mxu0
        %959 = vmatprep.mubr.f32.mxu0 0.0
        %960 = vmatmul.mubr.f32.gmra.mxu0 %v257
        %v961 = vpop.f32.mrf.mxu0
        %v962 = vadd.f32 0.0, %v961
        %v963 = vpop.f32.mrf.mxu0
        %964 = vmatprep.mubr.f32.mxu0 0.0
        %965 = vmatmul.mubr.f32.gmra.mxu0 %v258
        %v966 = vpop.f32.mrf.mxu0
        %v967 = vadd.f32 0.0, %v966
        %v968 = vpop.f32.mrf.mxu0
        %969 = vmatprep.mubr.f32.mxu0 0.0
        %970 = vmatmul.mubr.f32.gmra.mxu0 %v259
        %v971 = vpop.f32.mrf.mxu0
        %v972 = vadd.f32 0.0, %v971
        %v973 = vpop.f32.mrf.mxu0
        %974 = vmatprep.mubr.f32.mxu0 0.0
        %975 = vmatmul.mubr.f32.gmra.mxu0 %v260
        %v976 = vpop.f32.mrf.mxu0
        %v977 = vadd.f32 0.0, %v976
        %v978 = vpop.f32.mrf.mxu0
        %979 = vmatprep.mubr.f32.mxu0 0.0
        %980 = vmatmul.mubr.f32.gmra.mxu0 %v261
        %v981 = vpop.f32.mrf.mxu0
        %v982 = vadd.f32 0.0, %v981
        %v983 = vpop.f32.mrf.mxu0
        %984 = vmatprep.mubr.f32.mxu0 0.0
        %985 = vmatmul.mubr.f32.gmra.mxu0 %v262
        %v986 = vpop.f32.mrf.mxu0
        %v987 = vadd.f32 0.0, %v986
        %v988 = vpop.f32.mrf.mxu0
        %989 = vdwg.mxu0
        %v990 = vmul.f32 %v912, 0.1
        %v991 = vmul.f32 %v917, 0.1
        %v992 = vmul.f32 %v922, 0.1
        %v993 = vmul.f32 %v927, 0.1
        %v994 = vmul.f32 %v932, 0.1
        %v995 = vmul.f32 %v937, 0.1
        %v996 = vmul.f32 %v942, 0.1
        %v997 = vmul.f32 %v947, 0.1
        %v998 = vmul.f32 %v952, 0.1
        %v999 = vmul.f32 %v957, 0.1
        %v1000 = vmul.f32 %v962, 0.1
        %v1001 = vmul.f32 %v967, 0.1
        %v1002 = vmul.f32 %v972, 0.1
        %v1003 = vmul.f32 %v977, 0.1
        %v1004 = vmul.f32 %v982, 0.1
        %v1005 = vmul.f32 %v987, 0.1
        %v1006 = vadd.f32 %v298, %v990
        %v1007 = vadd.f32 %v299, %v991
        %v1008 = vadd.f32 %v300, %v992
        %v1009 = vadd.f32 %v301, %v993
        %v1010 = vadd.f32 %v302, %v994
        %v1011 = vadd.f32 %v303, %v995
        %v1012 = vadd.f32 %v304, %v996
        %v1013 = vadd.f32 %v305, %v997
        %v1014 = vadd.f32 %v306, %v998
        %v1015 = vadd.f32 %v307, %v999
        %v1016 = vadd.f32 %v308, %v1000
        %v1017 = vadd.f32 %v309, %v1001
        %v1018 = vadd.f32 %v310, %v1002
        %v1019 = vadd.f32 %v311, %v1003
        %v1020 = vadd.f32 %v312, %v1004
        %v1021 = vadd.f32 %v313, %v1005
        %1022 = vmatprep.subr.mxu0 0.0
        %1023 = vmatpush1.msra.mxu0 %v1021
        %1024 = vmatprep.subr.mxu0 0.0
        %1025 = vmatpush1.msra.mxu0 %v1020
        %1026 = vmatprep.subr.mxu0 0.0
        %1027 = vmatpush1.msra.mxu0 %v1019
        %1028 = vmatprep.subr.mxu0 0.0
        %1029 = vmatpush1.msra.mxu0 %v1018
        %1030 = vmatprep.subr.mxu0 0.0
        %1031 = vmatpush1.msra.mxu0 %v1017
        %1032 = vmatprep.subr.mxu0 0.0
        %1033 = vmatpush1.msra.mxu0 %v1016
        %1034 = vmatprep.subr.mxu0 0.0
        %1035 = vmatpush1.msra.mxu0 %v1015
        %1036 = vmatprep.subr.mxu0 0.0
        %1037 = vmatpush1.msra.mxu0 %v1014
        %1038 = vmatprep.subr.mxu0 0.0
        %1039 = vmatpush1.msra.mxu0 %v1013
        %1040 = vmatprep.subr.mxu0 0.0
        %1041 = vmatpush1.msra.mxu0 %v1012
        %1042 = vmatprep.subr.mxu0 0.0
        %1043 = vmatpush1.msra.mxu0 %v1011
        %1044 = vmatprep.subr.mxu0 0.0
        %1045 = vmatpush1.msra.mxu0 %v1010
        %1046 = vmatprep.subr.mxu0 0.0
        %1047 = vmatpush1.msra.mxu0 %v1009
        %1048 = vmatprep.subr.mxu0 0.0
        %1049 = vmatpush1.msra.mxu0 %v1008
        %1050 = vmatprep.subr.mxu0 0.0
        %1051 = vmatpush1.msra.mxu0 %v1007
        %1052 = vmatprep.subr.mxu0 0.0
        %1053 = vmatpush1.msra.mxu0 %v1006
        %1054 = vmatprep.subr.mxu0 0.0
        %1055 = vmatpush2.msra.mxu0 0.0
        %1056 = vmatprep.subr.mxu0 0.0
        %1057 = vmatpush2.msra.mxu0 0.0
        %1058 = vmatprep.subr.mxu0 0.0
        %1059 = vmatpush2.msra.mxu0 0.0
        %1060 = vmatprep.subr.mxu0 0.0
        %1061 = vmatpush2.msra.mxu0 0.0
        %1062 = vmatprep.subr.mxu0 0.0
        %1063 = vmatpush2.msra.mxu0 0.0
        %1064 = vmatprep.subr.mxu0 0.0
        %1065 = vmatpush2.msra.mxu0 0.0
        %1066 = vmatprep.subr.mxu0 0.0
        %1067 = vmatpush2.msra.mxu0 0.0
        %1068 = vmatprep.subr.mxu0 0.0
        %1069 = vmatpush2.msra.mxu0 0.0
        %1070 = vmatprep.subr.mxu0 0.0
        %1071 = vmatpush2.msra.mxu0 0.0
        %1072 = vmatprep.subr.mxu0 0.0
        %1073 = vmatpush2.msra.mxu0 0.0
        %1074 = vmatprep.subr.mxu0 0.0
        %1075 = vmatpush2.msra.mxu0 0.0
        %1076 = vmatprep.subr.mxu0 0.0
        %1077 = vmatpush2.msra.mxu0 0.0
        %1078 = vmatprep.subr.mxu0 0.0
        %1079 = vmatpush2.msra.mxu0 0.0
        %1080 = vmatprep.subr.mxu0 0.0
        %1081 = vmatpush2.msra.mxu0 0.0
        %1082 = vmatprep.subr.mxu0 0.0
        %1083 = vmatpush2.msra.mxu0 0.0
        %1084 = vmatprep.subr.mxu0 0.0
        %1085 = vmatpush2.msra.mxu0 0.0
        %1086 = vmatprep.mubr.f32.mxu0 0.0
        %1087 = vmatmul.mubr.f32.gmra.mxu0 %v247
        %v1088 = vpop.f32.mrf.mxu0
        %v1089 = vadd.f32 0.0, %v1088
        %v1090 = vpop.f32.mrf.mxu0
        %1091 = vmatprep.mubr.f32.mxu0 0.0
        %1092 = vmatmul.mubr.f32.gmra.mxu0 %v248
        %v1093 = vpop.f32.mrf.mxu0
        %v1094 = vadd.f32 0.0, %v1093
        %v1095 = vpop.f32.mrf.mxu0
        %1096 = vmatprep.mubr.f32.mxu0 0.0
        %1097 = vmatmul.mubr.f32.gmra.mxu0 %v249
        %v1098 = vpop.f32.mrf.mxu0
        %v1099 = vadd.f32 0.0, %v1098
        %v1100 = vpop.f32.mrf.mxu0
        %1101 = vmatprep.mubr.f32.mxu0 0.0
        %1102 = vmatmul.mubr.f32.gmra.mxu0 %v250
        %v1103 = vpop.f32.mrf.mxu0
        %v1104 = vadd.f32 0.0, %v1103
        %v1105 = vpop.f32.mrf.mxu0
        %1106 = vmatprep.mubr.f32.mxu0 0.0
        %1107 = vmatmul.mubr.f32.gmra.mxu0 %v251
        %v1108 = vpop.f32.mrf.mxu0
        %v1109 = vadd.f32 0.0, %v1108
        %v1110 = vpop.f32.mrf.mxu0
        %1111 = vmatprep.mubr.f32.mxu0 0.0
        %1112 = vmatmul.mubr.f32.gmra.mxu0 %v252
        %v1113 = vpop.f32.mrf.mxu0
        %v1114 = vadd.f32 0.0, %v1113
        %v1115 = vpop.f32.mrf.mxu0
        %1116 = vmatprep.mubr.f32.mxu0 0.0
        %1117 = vmatmul.mubr.f32.gmra.mxu0 %v253
        %v1118 = vpop.f32.mrf.mxu0
        %v1119 = vadd.f32 0.0, %v1118
        %v1120 = vpop.f32.mrf.mxu0
        %1121 = vmatprep.mubr.f32.mxu0 0.0
        %1122 = vmatmul.mubr.f32.gmra.mxu0 %v254
        %v1123 = vpop.f32.mrf.mxu0
        %v1124 = vadd.f32 0.0, %v1123
        %v1125 = vpop.f32.mrf.mxu0
        %1126 = vmatprep.mubr.f32.mxu0 0.0
        %1127 = vmatmul.mubr.f32.gmra.mxu0 %v255
        %v1128 = vpop.f32.mrf.mxu0
        %v1129 = vadd.f32 0.0, %v1128
        %v1130 = vpop.f32.mrf.mxu0
        %1131 = vmatprep.mubr.f32.mxu0 0.0
        %1132 = vmatmul.mubr.f32.gmra.mxu0 %v256
        %v1133 = vpop.f32.mrf.mxu0
        %v1134 = vadd.f32 0.0, %v1133
        %v1135 = vpop.f32.mrf.mxu0
        %1136 = vmatprep.mubr.f32.mxu0 0.0
        %1137 = vmatmul.mubr.f32.gmra.mxu0 %v257
        %v1138 = vpop.f32.mrf.mxu0
        %v1139 = vadd.f32 0.0, %v1138
        %v1140 = vpop.f32.mrf.mxu0
        %1141 = vmatprep.mubr.f32.mxu0 0.0
        %1142 = vmatmul.mubr.f32.gmra.mxu0 %v258
        %v1143 = vpop.f32.mrf.mxu0
        %v1144 = vadd.f32 0.0, %v1143
        %v1145 = vpop.f32.mrf.mxu0
        %1146 = vmatprep.mubr.f32.mxu0 0.0
        %1147 = vmatmul.mubr.f32.gmra.mxu0 %v259
        %v1148 = vpop.f32.mrf.mxu0
        %v1149 = vadd.f32 0.0, %v1148
        %v1150 = vpop.f32.mrf.mxu0
        %1151 = vmatprep.mubr.f32.mxu0 0.0
        %1152 = vmatmul.mubr.f32.gmra.mxu0 %v260
        %v1153 = vpop.f32.mrf.mxu0
        %v1154 = vadd.f32 0.0, %v1153
        %v1155 = vpop.f32.mrf.mxu0
        %1156 = vmatprep.mubr.f32.mxu0 0.0
        %1157 = vmatmul.mubr.f32.gmra.mxu0 %v261
        %v1158 = vpop.f32.mrf.mxu0
        %v1159 = vadd.f32 0.0, %v1158
        %v1160 = vpop.f32.mrf.mxu0
        %1161 = vmatprep.mubr.f32.mxu0 0.0
        %1162 = vmatmul.mubr.f32.gmra.mxu0 %v262
        %v1163 = vpop.f32.mrf.mxu0
        %v1164 = vadd.f32 0.0, %v1163
        %v1165 = vpop.f32.mrf.mxu0
        %1166 = vdwg.mxu0
        %v1167 = vmul.f32 %v1089, 0.11111111
        %v1168 = vmul.f32 %v1094, 0.11111111
        %v1169 = vmul.f32 %v1099, 0.11111111
        %v1170 = vmul.f32 %v1104, 0.11111111
        %v1171 = vmul.f32 %v1109, 0.11111111
        %v1172 = vmul.f32 %v1114, 0.11111111
        %v1173 = vmul.f32 %v1119, 0.11111111
        %v1174 = vmul.f32 %v1124, 0.11111111
        %v1175 = vmul.f32 %v1129, 0.11111111
        %v1176 = vmul.f32 %v1134, 0.11111111
        %v1177 = vmul.f32 %v1139, 0.11111111
        %v1178 = vmul.f32 %v1144, 0.11111111
        %v1179 = vmul.f32 %v1149, 0.11111111
        %v1180 = vmul.f32 %v1154, 0.11111111
        %v1181 = vmul.f32 %v1159, 0.11111111
        %v1182 = vmul.f32 %v1164, 0.11111111
        %v1183 = vadd.f32 %v298, %v1167
        %v1184 = vadd.f32 %v299, %v1168
        %v1185 = vadd.f32 %v300, %v1169
        %v1186 = vadd.f32 %v301, %v1170
        %v1187 = vadd.f32 %v302, %v1171
        %v1188 = vadd.f32 %v303, %v1172
        %v1189 = vadd.f32 %v304, %v1173
        %v1190 = vadd.f32 %v305, %v1174
        %v1191 = vadd.f32 %v306, %v1175
        %v1192 = vadd.f32 %v307, %v1176
        %v1193 = vadd.f32 %v308, %v1177
        %v1194 = vadd.f32 %v309, %v1178
        %v1195 = vadd.f32 %v310, %v1179
        %v1196 = vadd.f32 %v311, %v1180
        %v1197 = vadd.f32 %v312, %v1181
        %v1198 = vadd.f32 %v313, %v1182
        %1199 = vmatprep.subr.mxu0 0.0
        %1200 = vmatpush1.msra.mxu0 %v1198
        %1201 = vmatprep.subr.mxu0 0.0
        %1202 = vmatpush1.msra.mxu0 %v1197
        %1203 = vmatprep.subr.mxu0 0.0
        %1204 = vmatpush1.msra.mxu0 %v1196
        %1205 = vmatprep.subr.mxu0 0.0
        %1206 = vmatpush1.msra.mxu0 %v1195
        %1207 = vmatprep.subr.mxu0 0.0
        %1208 = vmatpush1.msra.mxu0 %v1194
        %1209 = vmatprep.subr.mxu0 0.0
        %1210 = vmatpush1.msra.mxu0 %v1193
        %1211 = vmatprep.subr.mxu0 0.0
        %1212 = vmatpush1.msra.mxu0 %v1192
        %1213 = vmatprep.subr.mxu0 0.0
        %1214 = vmatpush1.msra.mxu0 %v1191
        %1215 = vmatprep.subr.mxu0 0.0
        %1216 = vmatpush1.msra.mxu0 %v1190
        %1217 = vmatprep.subr.mxu0 0.0
        %1218 = vmatpush1.msra.mxu0 %v1189
        %1219 = vmatprep.subr.mxu0 0.0
        %1220 = vmatpush1.msra.mxu0 %v1188
        %1221 = vmatprep.subr.mxu0 0.0
        %1222 = vmatpush1.msra.mxu0 %v1187
        %1223 = vmatprep.subr.mxu0 0.0
        %1224 = vmatpush1.msra.mxu0 %v1186
        %1225 = vmatprep.subr.mxu0 0.0
        %1226 = vmatpush1.msra.mxu0 %v1185
        %1227 = vmatprep.subr.mxu0 0.0
        %1228 = vmatpush1.msra.mxu0 %v1184
        %1229 = vmatprep.subr.mxu0 0.0
        %1230 = vmatpush1.msra.mxu0 %v1183
        %1231 = vmatprep.subr.mxu0 0.0
        %1232 = vmatpush2.msra.mxu0 0.0
        %1233 = vmatprep.subr.mxu0 0.0
        %1234 = vmatpush2.msra.mxu0 0.0
        %1235 = vmatprep.subr.mxu0 0.0
        %1236 = vmatpush2.msra.mxu0 0.0
        %1237 = vmatprep.subr.mxu0 0.0
        %1238 = vmatpush2.msra.mxu0 0.0
        %1239 = vmatprep.subr.mxu0 0.0
        %1240 = vmatpush2.msra.mxu0 0.0
        %1241 = vmatprep.subr.mxu0 0.0
        %1242 = vmatpush2.msra.mxu0 0.0
        %1243 = vmatprep.subr.mxu0 0.0
        %1244 = vmatpush2.msra.mxu0 0.0
        %1245 = vmatprep.subr.mxu0 0.0
        %1246 = vmatpush2.msra.mxu0 0.0
        %1247 = vmatprep.subr.mxu0 0.0
        %1248 = vmatpush2.msra.mxu0 0.0
        %1249 = vmatprep.subr.mxu0 0.0
        %1250 = vmatpush2.msra.mxu0 0.0
        %1251 = vmatprep.subr.mxu0 0.0
        %1252 = vmatpush2.msra.mxu0 0.0
        %1253 = vmatprep.subr.mxu0 0.0
        %1254 = vmatpush2.msra.mxu0 0.0
        %1255 = vmatprep.subr.mxu0 0.0
        %1256 = vmatpush2.msra.mxu0 0.0
        %1257 = vmatprep.subr.mxu0 0.0
        %1258 = vmatpush2.msra.mxu0 0.0
        %1259 = vmatprep.subr.mxu0 0.0
        %1260 = vmatpush2.msra.mxu0 0.0
        %1261 = vmatprep.subr.mxu0 0.0
        %1262 = vmatpush2.msra.mxu0 0.0
        %1263 = vmatprep.mubr.f32.mxu0 0.0
        %1264 = vmatmul.mubr.f32.gmra.mxu0 %v247
        %v1265 = vpop.f32.mrf.mxu0
        %v1266 = vadd.f32 0.0, %v1265
        %v1267 = vpop.f32.mrf.mxu0
        %1268 = vmatprep.mubr.f32.mxu0 0.0
        %1269 = vmatmul.mubr.f32.gmra.mxu0 %v248
        %v1270 = vpop.f32.mrf.mxu0
        %v1271 = vadd.f32 0.0, %v1270
        %v1272 = vpop.f32.mrf.mxu0
        %1273 = vmatprep.mubr.f32.mxu0 0.0
        %1274 = vmatmul.mubr.f32.gmra.mxu0 %v249
        %v1275 = vpop.f32.mrf.mxu0
        %v1276 = vadd.f32 0.0, %v1275
        %v1277 = vpop.f32.mrf.mxu0
        %1278 = vmatprep.mubr.f32.mxu0 0.0
        %1279 = vmatmul.mubr.f32.gmra.mxu0 %v250
        %v1280 = vpop.f32.mrf.mxu0
        %v1281 = vadd.f32 0.0, %v1280
        %v1282 = vpop.f32.mrf.mxu0
        %1283 = vmatprep.mubr.f32.mxu0 0.0
        %1284 = vmatmul.mubr.f32.gmra.mxu0 %v251
        %v1285 = vpop.f32.mrf.mxu0
        %v1286 = vadd.f32 0.0, %v1285
        %v1287 = vpop.f32.mrf.mxu0
        %1288 = vmatprep.mubr.f32.mxu0 0.0
        %1289 = vmatmul.mubr.f32.gmra.mxu0 %v252
        %v1290 = vpop.f32.mrf.mxu0
        %v1291 = vadd.f32 0.0, %v1290
        %v1292 = vpop.f32.mrf.mxu0
        %1293 = vmatprep.mubr.f32.mxu0 0.0
        %1294 = vmatmul.mubr.f32.gmra.mxu0 %v253
        %v1295 = vpop.f32.mrf.mxu0
        %v1296 = vadd.f32 0.0, %v1295
        %v1297 = vpop.f32.mrf.mxu0
        %1298 = vmatprep.mubr.f32.mxu0 0.0
        %1299 = vmatmul.mubr.f32.gmra.mxu0 %v254
        %v1300 = vpop.f32.mrf.mxu0
        %v1301 = vadd.f32 0.0, %v1300
        %v1302 = vpop.f32.mrf.mxu0
        %1303 = vmatprep.mubr.f32.mxu0 0.0
        %1304 = vmatmul.mubr.f32.gmra.mxu0 %v255
        %v1305 = vpop.f32.mrf.mxu0
        %v1306 = vadd.f32 0.0, %v1305
        %v1307 = vpop.f32.mrf.mxu0
        %1308 = vmatprep.mubr.f32.mxu0 0.0
        %1309 = vmatmul.mubr.f32.gmra.mxu0 %v256
        %v1310 = vpop.f32.mrf.mxu0
        %v1311 = vadd.f32 0.0, %v1310
        %v1312 = vpop.f32.mrf.mxu0
        %1313 = vmatprep.mubr.f32.mxu0 0.0
        %1314 = vmatmul.mubr.f32.gmra.mxu0 %v257
        %v1315 = vpop.f32.mrf.mxu0
        %v1316 = vadd.f32 0.0, %v1315
        %v1317 = vpop.f32.mrf.mxu0
        %1318 = vmatprep.mubr.f32.mxu0 0.0
        %1319 = vmatmul.mubr.f32.gmra.mxu0 %v258
        %v1320 = vpop.f32.mrf.mxu0
        %v1321 = vadd.f32 0.0, %v1320
        %v1322 = vpop.f32.mrf.mxu0
        %1323 = vmatprep.mubr.f32.mxu0 0.0
        %1324 = vmatmul.mubr.f32.gmra.mxu0 %v259
        %v1325 = vpop.f32.mrf.mxu0
        %v1326 = vadd.f32 0.0, %v1325
        %v1327 = vpop.f32.mrf.mxu0
        %1328 = vmatprep.mubr.f32.mxu0 0.0
        %1329 = vmatmul.mubr.f32.gmra.mxu0 %v260
        %v1330 = vpop.f32.mrf.mxu0
        %v1331 = vadd.f32 0.0, %v1330
        %v1332 = vpop.f32.mrf.mxu0
        %1333 = vmatprep.mubr.f32.mxu0 0.0
        %1334 = vmatmul.mubr.f32.gmra.mxu0 %v261
        %v1335 = vpop.f32.mrf.mxu0
        %v1336 = vadd.f32 0.0, %v1335
        %v1337 = vpop.f32.mrf.mxu0
        %1338 = vmatprep.mubr.f32.mxu0 0.0
        %1339 = vmatmul.mubr.f32.gmra.mxu0 %v262
        %v1340 = vpop.f32.mrf.mxu0
        %v1341 = vadd.f32 0.0, %v1340
        %v1342 = vpop.f32.mrf.mxu0
        %1343 = vdwg.mxu0
        %v1344 = vmul.f32 %v1266, 0.125
        %v1345 = vmul.f32 %v1271, 0.125
        %v1346 = vmul.f32 %v1276, 0.125
        %v1347 = vmul.f32 %v1281, 0.125
        %v1348 = vmul.f32 %v1286, 0.125
        %v1349 = vmul.f32 %v1291, 0.125
        %v1350 = vmul.f32 %v1296, 0.125
        %v1351 = vmul.f32 %v1301, 0.125
        %v1352 = vmul.f32 %v1306, 0.125
        %v1353 = vmul.f32 %v1311, 0.125
        %v1354 = vmul.f32 %v1316, 0.125
        %v1355 = vmul.f32 %v1321, 0.125
        %v1356 = vmul.f32 %v1326, 0.125
        %v1357 = vmul.f32 %v1331, 0.125
        %v1358 = vmul.f32 %v1336, 0.125
        %v1359 = vmul.f32 %v1341, 0.125
        %v1360 = vadd.f32 %v298, %v1344
        %v1361 = vadd.f32 %v299, %v1345
        %v1362 = vadd.f32 %v300, %v1346
        %v1363 = vadd.f32 %v301, %v1347
        %v1364 = vadd.f32 %v302, %v1348
        %v1365 = vadd.f32 %v303, %v1349
        %v1366 = vadd.f32 %v304, %v1350
        %v1367 = vadd.f32 %v305, %v1351
        %v1368 = vadd.f32 %v306, %v1352
        %v1369 = vadd.f32 %v307, %v1353
        %v1370 = vadd.f32 %v308, %v1354
        %v1371 = vadd.f32 %v309, %v1355
        %v1372 = vadd.f32 %v310, %v1356
        %v1373 = vadd.f32 %v311, %v1357
        %v1374 = vadd.f32 %v312, %v1358
        %v1375 = vadd.f32 %v313, %v1359
        %1376 = vmatprep.subr.mxu0 0.0
        %1377 = vmatpush1.msra.mxu0 %v1375
        %1378 = vmatprep.subr.mxu0 0.0
        %1379 = vmatpush1.msra.mxu0 %v1374
        %1380 = vmatprep.subr.mxu0 0.0
        %1381 = vmatpush1.msra.mxu0 %v1373
        %1382 = vmatprep.subr.mxu0 0.0
        %1383 = vmatpush1.msra.mxu0 %v1372
        %1384 = vmatprep.subr.mxu0 0.0
        %1385 = vmatpush1.msra.mxu0 %v1371
        %1386 = vmatprep.subr.mxu0 0.0
        %1387 = vmatpush1.msra.mxu0 %v1370
        %1388 = vmatprep.subr.mxu0 0.0
        %1389 = vmatpush1.msra.mxu0 %v1369
        %1390 = vmatprep.subr.mxu0 0.0
        %1391 = vmatpush1.msra.mxu0 %v1368
        %1392 = vmatprep.subr.mxu0 0.0
        %1393 = vmatpush1.msra.mxu0 %v1367
        %1394 = vmatprep.subr.mxu0 0.0
        %1395 = vmatpush1.msra.mxu0 %v1366
        %1396 = vmatprep.subr.mxu0 0.0
        %1397 = vmatpush1.msra.mxu0 %v1365
        %1398 = vmatprep.subr.mxu0 0.0
        %1399 = vmatpush1.msra.mxu0 %v1364
        %1400 = vmatprep.subr.mxu0 0.0
        %1401 = vmatpush1.msra.mxu0 %v1363
        %1402 = vmatprep.subr.mxu0 0.0
        %1403 = vmatpush1.msra.mxu0 %v1362
        %1404 = vmatprep.subr.mxu0 0.0
        %1405 = vmatpush1.msra.mxu0 %v1361
        %1406 = vmatprep.subr.mxu0 0.0
        %1407 = vmatpush1.msra.mxu0 %v1360
        %1408 = vmatprep.subr.mxu0 0.0
        %1409 = vmatpush2.msra.mxu0 0.0
        %1410 = vmatprep.subr.mxu0 0.0
        %1411 = vmatpush2.msra.mxu0 0.0
        %1412 = vmatprep.subr.mxu0 0.0
        %1413 = vmatpush2.msra.mxu0 0.0
        %1414 = vmatprep.subr.mxu0 0.0
        %1415 = vmatpush2.msra.mxu0 0.0
        %1416 = vmatprep.subr.mxu0 0.0
        %1417 = vmatpush2.msra.mxu0 0.0
        %1418 = vmatprep.subr.mxu0 0.0
        %1419 = vmatpush2.msra.mxu0 0.0
        %1420 = vmatprep.subr.mxu0 0.0
        %1421 = vmatpush2.msra.mxu0 0.0
        %1422 = vmatprep.subr.mxu0 0.0
        %1423 = vmatpush2.msra.mxu0 0.0
        %1424 = vmatprep.subr.mxu0 0.0
        %1425 = vmatpush2.msra.mxu0 0.0
        %1426 = vmatprep.subr.mxu0 0.0
        %1427 = vmatpush2.msra.mxu0 0.0
        %1428 = vmatprep.subr.mxu0 0.0
        %1429 = vmatpush2.msra.mxu0 0.0
        %1430 = vmatprep.subr.mxu0 0.0
        %1431 = vmatpush2.msra.mxu0 0.0
        %1432 = vmatprep.subr.mxu0 0.0
        %1433 = vmatpush2.msra.mxu0 0.0
        %1434 = vmatprep.subr.mxu0 0.0
        %1435 = vmatpush2.msra.mxu0 0.0
        %1436 = vmatprep.subr.mxu0 0.0
        %1437 = vmatpush2.msra.mxu0 0.0
        %1438 = vmatprep.subr.mxu0 0.0
        %1439 = vmatpush2.msra.mxu0 0.0
        %1440 = vmatprep.mubr.f32.mxu0 0.0
        %1441 = vmatmul.mubr.f32.gmra.mxu0 %v247
        %v1442 = vpop.f32.mrf.mxu0
        %v1443 = vadd.f32 0.0, %v1442
        %v1444 = vpop.f32.mrf.mxu0
        %1445 = vmatprep.mubr.f32.mxu0 0.0
        %1446 = vmatmul.mubr.f32.gmra.mxu0 %v248
        %v1447 = vpop.f32.mrf.mxu0
        %v1448 = vadd.f32 0.0, %v1447
        %v1449 = vpop.f32.mrf.mxu0
        %1450 = vmatprep.mubr.f32.mxu0 0.0
        %1451 = vmatmul.mubr.f32.gmra.mxu0 %v249
        %v1452 = vpop.f32.mrf.mxu0
        %v1453 = vadd.f32 0.0, %v1452
        %v1454 = vpop.f32.mrf.mxu0
        %1455 = vmatprep.mubr.f32.mxu0 0.0
        %1456 = vmatmul.mubr.f32.gmra.mxu0 %v250
        %v1457 = vpop.f32.mrf.mxu0
        %v1458 = vadd.f32 0.0, %v1457
        %v1459 = vpop.f32.mrf.mxu0
        %1460 = vmatprep.mubr.f32.mxu0 0.0
        %1461 = vmatmul.mubr.f32.gmra.mxu0 %v251
        %v1462 = vpop.f32.mrf.mxu0
        %v1463 = vadd.f32 0.0, %v1462
        %v1464 = vpop.f32.mrf.mxu0
        %1465 = vmatprep.mubr.f32.mxu0 0.0
        %1466 = vmatmul.mubr.f32.gmra.mxu0 %v252
        %v1467 = vpop.f32.mrf.mxu0
        %v1468 = vadd.f32 0.0, %v1467
        %v1469 = vpop.f32.mrf.mxu0
        %1470 = vmatprep.mubr.f32.mxu0 0.0
        %1471 = vmatmul.mubr.f32.gmra.mxu0 %v253
        %v1472 = vpop.f32.mrf.mxu0
        %v1473 = vadd.f32 0.0, %v1472
        %v1474 = vpop.f32.mrf.mxu0
        %1475 = vmatprep.mubr.f32.mxu0 0.0
        %1476 = vmatmul.mubr.f32.gmra.mxu0 %v254
        %v1477 = vpop.f32.mrf.mxu0
        %v1478 = vadd.f32 0.0, %v1477
        %v1479 = vpop.f32.mrf.mxu0
        %1480 = vmatprep.mubr.f32.mxu0 0.0
        %1481 = vmatmul.mubr.f32.gmra.mxu0 %v255
        %v1482 = vpop.f32.mrf.mxu0
        %v1483 = vadd.f32 0.0, %v1482
        %v1484 = vpop.f32.mrf.mxu0
        %1485 = vmatprep.mubr.f32.mxu0 0.0
        %1486 = vmatmul.mubr.f32.gmra.mxu0 %v256
        %v1487 = vpop.f32.mrf.mxu0
        %v1488 = vadd.f32 0.0, %v1487
        %v1489 = vpop.f32.mrf.mxu0
        %1490 = vmatprep.mubr.f32.mxu0 0.0
        %1491 = vmatmul.mubr.f32.gmra.mxu0 %v257
        %v1492 = vpop.f32.mrf.mxu0
        %v1493 = vadd.f32 0.0, %v1492
        %v1494 = vpop.f32.mrf.mxu0
        %1495 = vmatprep.mubr.f32.mxu0 0.0
        %1496 = vmatmul.mubr.f32.gmra.mxu0 %v258
        %v1497 = vpop.f32.mrf.mxu0
        %v1498 = vadd.f32 0.0, %v1497
        %v1499 = vpop.f32.mrf.mxu0
        %1500 = vmatprep.mubr.f32.mxu0 0.0
        %1501 = vmatmul.mubr.f32.gmra.mxu0 %v259
        %v1502 = vpop.f32.mrf.mxu0
        %v1503 = vadd.f32 0.0, %v1502
        %v1504 = vpop.f32.mrf.mxu0
        %1505 = vmatprep.mubr.f32.mxu0 0.0
        %1506 = vmatmul.mubr.f32.gmra.mxu0 %v260
        %v1507 = vpop.f32.mrf.mxu0
        %v1508 = vadd.f32 0.0, %v1507
        %v1509 = vpop.f32.mrf.mxu0
        %1510 = vmatprep.mubr.f32.mxu0 0.0
        %1511 = vmatmul.mubr.f32.gmra.mxu0 %v261
        %v1512 = vpop.f32.mrf.mxu0
        %v1513 = vadd.f32 0.0, %v1512
        %v1514 = vpop.f32.mrf.mxu0
        %1515 = vmatprep.mubr.f32.mxu0 0.0
        %1516 = vmatmul.mubr.f32.gmra.mxu0 %v262
        %v1517 = vpop.f32.mrf.mxu0
        %v1518 = vadd.f32 0.0, %v1517
        %v1519 = vpop.f32.mrf.mxu0
        %1520 = vdwg.mxu0
        %v1521 = vmul.f32 %v1443, 0.14285715
        %v1522 = vmul.f32 %v1448, 0.14285715
        %v1523 = vmul.f32 %v1453, 0.14285715
        %v1524 = vmul.f32 %v1458, 0.14285715
        %v1525 = vmul.f32 %v1463, 0.14285715
        %v1526 = vmul.f32 %v1468, 0.14285715
        %v1527 = vmul.f32 %v1473, 0.14285715
        %v1528 = vmul.f32 %v1478, 0.14285715
        %v1529 = vmul.f32 %v1483, 0.14285715
        %v1530 = vmul.f32 %v1488, 0.14285715
        %v1531 = vmul.f32 %v1493, 0.14285715
        %v1532 = vmul.f32 %v1498, 0.14285715
        %v1533 = vmul.f32 %v1503, 0.14285715
        %v1534 = vmul.f32 %v1508, 0.14285715
        %v1535 = vmul.f32 %v1513, 0.14285715
        %v1536 = vmul.f32 %v1518, 0.14285715
        %v1537 = vadd.f32 %v298, %v1521
        %v1538 = vadd.f32 %v299, %v1522
        %v1539 = vadd.f32 %v300, %v1523
        %v1540 = vadd.f32 %v301, %v1524
        %v1541 = vadd.f32 %v302, %v1525
        %v1542 = vadd.f32 %v303, %v1526
        %v1543 = vadd.f32 %v304, %v1527
        %v1544 = vadd.f32 %v305, %v1528
        %v1545 = vadd.f32 %v306, %v1529
        %v1546 = vadd.f32 %v307, %v1530
        %v1547 = vadd.f32 %v308, %v1531
        %v1548 = vadd.f32 %v309, %v1532
        %v1549 = vadd.f32 %v310, %v1533
        %v1550 = vadd.f32 %v311, %v1534
        %v1551 = vadd.f32 %v312, %v1535
        %v1552 = vadd.f32 %v313, %v1536
        %1553 = vmatprep.subr.mxu0 0.0
        %1554 = vmatpush1.msra.mxu0 %v1552
        %1555 = vmatprep.subr.mxu0 0.0
        %1556 = vmatpush1.msra.mxu0 %v1551
        %1557 = vmatprep.subr.mxu0 0.0
        %1558 = vmatpush1.msra.mxu0 %v1550
        %1559 = vmatprep.subr.mxu0 0.0
        %1560 = vmatpush1.msra.mxu0 %v1549
        %1561 = vmatprep.subr.mxu0 0.0
        %1562 = vmatpush1.msra.mxu0 %v1548
        %1563 = vmatprep.subr.mxu0 0.0
        %1564 = vmatpush1.msra.mxu0 %v1547
        %1565 = vmatprep.subr.mxu0 0.0
        %1566 = vmatpush1.msra.mxu0 %v1546
        %1567 = vmatprep.subr.mxu0 0.0
        %1568 = vmatpush1.msra.mxu0 %v1545
        %1569 = vmatprep.subr.mxu0 0.0
        %1570 = vmatpush1.msra.mxu0 %v1544
        %1571 = vmatprep.subr.mxu0 0.0
        %1572 = vmatpush1.msra.mxu0 %v1543
        %1573 = vmatprep.subr.mxu0 0.0
        %1574 = vmatpush1.msra.mxu0 %v1542
        %1575 = vmatprep.subr.mxu0 0.0
        %1576 = vmatpush1.msra.mxu0 %v1541
        %1577 = vmatprep.subr.mxu0 0.0
        %1578 = vmatpush1.msra.mxu0 %v1540
        %1579 = vmatprep.subr.mxu0 0.0
        %1580 = vmatpush1.msra.mxu0 %v1539
        %1581 = vmatprep.subr.mxu0 0.0
        %1582 = vmatpush1.msra.mxu0 %v1538
        %1583 = vmatprep.subr.mxu0 0.0
        %1584 = vmatpush1.msra.mxu0 %v1537
        %1585 = vmatprep.subr.mxu0 0.0
        %1586 = vmatpush2.msra.mxu0 0.0
        %1587 = vmatprep.subr.mxu0 0.0
        %1588 = vmatpush2.msra.mxu0 0.0
        %1589 = vmatprep.subr.mxu0 0.0
        %1590 = vmatpush2.msra.mxu0 0.0
        %1591 = vmatprep.subr.mxu0 0.0
        %1592 = vmatpush2.msra.mxu0 0.0
        %1593 = vmatprep.subr.mxu0 0.0
        %1594 = vmatpush2.msra.mxu0 0.0
        %1595 = vmatprep.subr.mxu0 0.0
        %1596 = vmatpush2.msra.mxu0 0.0
        %1597 = vmatprep.subr.mxu0 0.0
        %1598 = vmatpush2.msra.mxu0 0.0
        %1599 = vmatprep.subr.mxu0 0.0
        %1600 = vmatpush2.msra.mxu0 0.0
        %1601 = vmatprep.subr.mxu0 0.0
        %1602 = vmatpush2.msra.mxu0 0.0
        %1603 = vmatprep.subr.mxu0 0.0
        %1604 = vmatpush2.msra.mxu0 0.0
        %1605 = vmatprep.subr.mxu0 0.0
        %1606 = vmatpush2.msra.mxu0 0.0
        %1607 = vmatprep.subr.mxu0 0.0
        %1608 = vmatpush2.msra.mxu0 0.0
        %1609 = vmatprep.subr.mxu0 0.0
        %1610 = vmatpush2.msra.mxu0 0.0
        %1611 = vmatprep.subr.mxu0 0.0
        %1612 = vmatpush2.msra.mxu0 0.0
        %1613 = vmatprep.subr.mxu0 0.0
        %1614 = vmatpush2.msra.mxu0 0.0
        %1615 = vmatprep.subr.mxu0 0.0
        %1616 = vmatpush2.msra.mxu0 0.0
        %1617 = vmatprep.mubr.f32.mxu0 0.0
        %1618 = vmatmul.mubr.f32.gmra.mxu0 %v247
        %v1619 = vpop.f32.mrf.mxu0
        %v1620 = vadd.f32 0.0, %v1619
        %v1621 = vpop.f32.mrf.mxu0
        %1622 = vmatprep.mubr.f32.mxu0 0.0
        %1623 = vmatmul.mubr.f32.gmra.mxu0 %v248
        %v1624 = vpop.f32.mrf.mxu0
        %v1625 = vadd.f32 0.0, %v1624
        %v1626 = vpop.f32.mrf.mxu0
        %1627 = vmatprep.mubr.f32.mxu0 0.0
        %1628 = vmatmul.mubr.f32.gmra.mxu0 %v249
        %v1629 = vpop.f32.mrf.mxu0
        %v1630 = vadd.f32 0.0, %v1629
        %v1631 = vpop.f32.mrf.mxu0
        %1632 = vmatprep.mubr.f32.mxu0 0.0
        %1633 = vmatmul.mubr.f32.gmra.mxu0 %v250
        %v1634 = vpop.f32.mrf.mxu0
        %v1635 = vadd.f32 0.0, %v1634
        %v1636 = vpop.f32.mrf.mxu0
        %1637 = vmatprep.mubr.f32.mxu0 0.0
        %1638 = vmatmul.mubr.f32.gmra.mxu0 %v251
        %v1639 = vpop.f32.mrf.mxu0
        %v1640 = vadd.f32 0.0, %v1639
        %v1641 = vpop.f32.mrf.mxu0
        %1642 = vmatprep.mubr.f32.mxu0 0.0
        %1643 = vmatmul.mubr.f32.gmra.mxu0 %v252
        %v1644 = vpop.f32.mrf.mxu0
        %v1645 = vadd.f32 0.0, %v1644
        %v1646 = vpop.f32.mrf.mxu0
        %1647 = vmatprep.mubr.f32.mxu0 0.0
        %1648 = vmatmul.mubr.f32.gmra.mxu0 %v253
        %v1649 = vpop.f32.mrf.mxu0
        %v1650 = vadd.f32 0.0, %v1649
        %v1651 = vpop.f32.mrf.mxu0
        %1652 = vmatprep.mubr.f32.mxu0 0.0
        %1653 = vmatmul.mubr.f32.gmra.mxu0 %v254
        %v1654 = vpop.f32.mrf.mxu0
        %v1655 = vadd.f32 0.0, %v1654
        %v1656 = vpop.f32.mrf.mxu0
        %1657 = vmatprep.mubr.f32.mxu0 0.0
        %1658 = vmatmul.mubr.f32.gmra.mxu0 %v255
        %v1659 = vpop.f32.mrf.mxu0
        %v1660 = vadd.f32 0.0, %v1659
        %v1661 = vpop.f32.mrf.mxu0
        %1662 = vmatprep.mubr.f32.mxu0 0.0
        %1663 = vmatmul.mubr.f32.gmra.mxu0 %v256
        %v1664 = vpop.f32.mrf.mxu0
        %v1665 = vadd.f32 0.0, %v1664
        %v1666 = vpop.f32.mrf.mxu0
        %1667 = vmatprep.mubr.f32.mxu0 0.0
        %1668 = vmatmul.mubr.f32.gmra.mxu0 %v257
        %v1669 = vpop.f32.mrf.mxu0
        %v1670 = vadd.f32 0.0, %v1669
        %v1671 = vpop.f32.mrf.mxu0
        %1672 = vmatprep.mubr.f32.mxu0 0.0
        %1673 = vmatmul.mubr.f32.gmra.mxu0 %v258
        %v1674 = vpop.f32.mrf.mxu0
        %v1675 = vadd.f32 0.0, %v1674
        %v1676 = vpop.f32.mrf.mxu0
        %1677 = vmatprep.mubr.f32.mxu0 0.0
        %1678 = vmatmul.mubr.f32.gmra.mxu0 %v259
        %v1679 = vpop.f32.mrf.mxu0
        %v1680 = vadd.f32 0.0, %v1679
        %v1681 = vpop.f32.mrf.mxu0
        %1682 = vmatprep.mubr.f32.mxu0 0.0
        %1683 = vmatmul.mubr.f32.gmra.mxu0 %v260
        %v1684 = vpop.f32.mrf.mxu0
        %v1685 = vadd.f32 0.0, %v1684
        %v1686 = vpop.f32.mrf.mxu0
        %1687 = vmatprep.mubr.f32.mxu0 0.0
        %1688 = vmatmul.mubr.f32.gmra.mxu0 %v261
        %v1689 = vpop.f32.mrf.mxu0
        %v1690 = vadd.f32 0.0, %v1689
        %v1691 = vpop.f32.mrf.mxu0
        %1692 = vmatprep.mubr.f32.mxu0 0.0
        %1693 = vmatmul.mubr.f32.gmra.mxu0 %v262
        %v1694 = vpop.f32.mrf.mxu0
        %v1695 = vadd.f32 0.0, %v1694
        %v1696 = vpop.f32.mrf.mxu0
        %1697 = vdwg.mxu0
        %v1698 = vmul.f32 %v1620, 0.16666667
        %v1699 = vmul.f32 %v1625, 0.16666667
        %v1700 = vmul.f32 %v1630, 0.16666667
        %v1701 = vmul.f32 %v1635, 0.16666667
        %v1702 = vmul.f32 %v1640, 0.16666667
        %v1703 = vmul.f32 %v1645, 0.16666667
        %v1704 = vmul.f32 %v1650, 0.16666667
        %v1705 = vmul.f32 %v1655, 0.16666667
        %v1706 = vmul.f32 %v1660, 0.16666667
        %v1707 = vmul.f32 %v1665, 0.16666667
        %v1708 = vmul.f32 %v1670, 0.16666667
        %v1709 = vmul.f32 %v1675, 0.16666667
        %v1710 = vmul.f32 %v1680, 0.16666667
        %v1711 = vmul.f32 %v1685, 0.16666667
        %v1712 = vmul.f32 %v1690, 0.16666667
        %v1713 = vmul.f32 %v1695, 0.16666667
        %v1714 = vadd.f32 %v298, %v1698
        %v1715 = vadd.f32 %v299, %v1699
        %v1716 = vadd.f32 %v300, %v1700
        %v1717 = vadd.f32 %v301, %v1701
        %v1718 = vadd.f32 %v302, %v1702
        %v1719 = vadd.f32 %v303, %v1703
        %v1720 = vadd.f32 %v304, %v1704
        %v1721 = vadd.f32 %v305, %v1705
        %v1722 = vadd.f32 %v306, %v1706
        %v1723 = vadd.f32 %v307, %v1707
        %v1724 = vadd.f32 %v308, %v1708
        %v1725 = vadd.f32 %v309, %v1709
        %v1726 = vadd.f32 %v310, %v1710
        %v1727 = vadd.f32 %v311, %v1711
        %v1728 = vadd.f32 %v312, %v1712
        %v1729 = vadd.f32 %v313, %v1713
        %1730 = vmatprep.subr.mxu0 0.0
        %1731 = vmatpush1.msra.mxu0 %v1729
        %1732 = vmatprep.subr.mxu0 0.0
        %1733 = vmatpush1.msra.mxu0 %v1728
        %1734 = vmatprep.subr.mxu0 0.0
        %1735 = vmatpush1.msra.mxu0 %v1727
        %1736 = vmatprep.subr.mxu0 0.0
        %1737 = vmatpush1.msra.mxu0 %v1726
        %1738 = vmatprep.subr.mxu0 0.0
        %1739 = vmatpush1.msra.mxu0 %v1725
        %1740 = vmatprep.subr.mxu0 0.0
        %1741 = vmatpush1.msra.mxu0 %v1724
        %1742 = vmatprep.subr.mxu0 0.0
        %1743 = vmatpush1.msra.mxu0 %v1723
        %1744 = vmatprep.subr.mxu0 0.0
        %1745 = vmatpush1.msra.mxu0 %v1722
        %1746 = vmatprep.subr.mxu0 0.0
        %1747 = vmatpush1.msra.mxu0 %v1721
        %1748 = vmatprep.subr.mxu0 0.0
        %1749 = vmatpush1.msra.mxu0 %v1720
        %1750 = vmatprep.subr.mxu0 0.0
        %1751 = vmatpush1.msra.mxu0 %v1719
        %1752 = vmatprep.subr.mxu0 0.0
        %1753 = vmatpush1.msra.mxu0 %v1718
        %1754 = vmatprep.subr.mxu0 0.0
        %1755 = vmatpush1.msra.mxu0 %v1717
        %1756 = vmatprep.subr.mxu0 0.0
        %1757 = vmatpush1.msra.mxu0 %v1716
        %1758 = vmatprep.subr.mxu0 0.0
        %1759 = vmatpush1.msra.mxu0 %v1715
        %1760 = vmatprep.subr.mxu0 0.0
        %1761 = vmatpush1.msra.mxu0 %v1714
        %1762 = vmatprep.subr.mxu0 0.0
        %1763 = vmatpush2.msra.mxu0 0.0
        %1764 = vmatprep.subr.mxu0 0.0
        %1765 = vmatpush2.msra.mxu0 0.0
        %1766 = vmatprep.subr.mxu0 0.0
        %1767 = vmatpush2.msra.mxu0 0.0
        %1768 = vmatprep.subr.mxu0 0.0
        %1769 = vmatpush2.msra.mxu0 0.0
        %1770 = vmatprep.subr.mxu0 0.0
        %1771 = vmatpush2.msra.mxu0 0.0
        %1772 = vmatprep.subr.mxu0 0.0
        %1773 = vmatpush2.msra.mxu0 0.0
        %1774 = vmatprep.subr.mxu0 0.0
        %1775 = vmatpush2.msra.mxu0 0.0
        %1776 = vmatprep.subr.mxu0 0.0
        %1777 = vmatpush2.msra.mxu0 0.0
        %1778 = vmatprep.subr.mxu0 0.0
        %1779 = vmatpush2.msra.mxu0 0.0
        %1780 = vmatprep.subr.mxu0 0.0
        %1781 = vmatpush2.msra.mxu0 0.0
        %1782 = vmatprep.subr.mxu0 0.0
        %1783 = vmatpush2.msra.mxu0 0.0
        %1784 = vmatprep.subr.mxu0 0.0
        %1785 = vmatpush2.msra.mxu0 0.0
        %1786 = vmatprep.subr.mxu0 0.0
        %1787 = vmatpush2.msra.mxu0 0.0
        %1788 = vmatprep.subr.mxu0 0.0
        %1789 = vmatpush2.msra.mxu0 0.0
        %1790 = vmatprep.subr.mxu0 0.0
        %1791 = vmatpush2.msra.mxu0 0.0
        %1792 = vmatprep.subr.mxu0 0.0
        %1793 = vmatpush2.msra.mxu0 0.0
        %1794 = vmatprep.mubr.f32.mxu0 0.0
        %1795 = vmatmul.mubr.f32.gmra.mxu0 %v247
        %v1796 = vpop.f32.mrf.mxu0
        %v1797 = vadd.f32 0.0, %v1796
        %v1798 = vpop.f32.mrf.mxu0
        %1799 = vmatprep.mubr.f32.mxu0 0.0
        %1800 = vmatmul.mubr.f32.gmra.mxu0 %v248
        %v1801 = vpop.f32.mrf.mxu0
        %v1802 = vadd.f32 0.0, %v1801
        %v1803 = vpop.f32.mrf.mxu0
        %1804 = vmatprep.mubr.f32.mxu0 0.0
        %1805 = vmatmul.mubr.f32.gmra.mxu0 %v249
        %v1806 = vpop.f32.mrf.mxu0
        %v1807 = vadd.f32 0.0, %v1806
        %v1808 = vpop.f32.mrf.mxu0
        %1809 = vmatprep.mubr.f32.mxu0 0.0
        %1810 = vmatmul.mubr.f32.gmra.mxu0 %v250
        %v1811 = vpop.f32.mrf.mxu0
        %v1812 = vadd.f32 0.0, %v1811
        %v1813 = vpop.f32.mrf.mxu0
        %1814 = vmatprep.mubr.f32.mxu0 0.0
        %1815 = vmatmul.mubr.f32.gmra.mxu0 %v251
        %v1816 = vpop.f32.mrf.mxu0
        %v1817 = vadd.f32 0.0, %v1816
        %v1818 = vpop.f32.mrf.mxu0
        %1819 = vmatprep.mubr.f32.mxu0 0.0
        %1820 = vmatmul.mubr.f32.gmra.mxu0 %v252
        %v1821 = vpop.f32.mrf.mxu0
        %v1822 = vadd.f32 0.0, %v1821
        %v1823 = vpop.f32.mrf.mxu0
        %1824 = vmatprep.mubr.f32.mxu0 0.0
        %1825 = vmatmul.mubr.f32.gmra.mxu0 %v253
        %v1826 = vpop.f32.mrf.mxu0
        %v1827 = vadd.f32 0.0, %v1826
        %v1828 = vpop.f32.mrf.mxu0
        %1829 = vmatprep.mubr.f32.mxu0 0.0
        %1830 = vmatmul.mubr.f32.gmra.mxu0 %v254
        %v1831 = vpop.f32.mrf.mxu0
        %v1832 = vadd.f32 0.0, %v1831
        %v1833 = vpop.f32.mrf.mxu0
        %1834 = vmatprep.mubr.f32.mxu0 0.0
        %1835 = vmatmul.mubr.f32.gmra.mxu0 %v255
        %v1836 = vpop.f32.mrf.mxu0
        %v1837 = vadd.f32 0.0, %v1836
        %v1838 = vpop.f32.mrf.mxu0
        %1839 = vmatprep.mubr.f32.mxu0 0.0
        %1840 = vmatmul.mubr.f32.gmra.mxu0 %v256
        %v1841 = vpop.f32.mrf.mxu0
        %v1842 = vadd.f32 0.0, %v1841
        %v1843 = vpop.f32.mrf.mxu0
        %1844 = vmatprep.mubr.f32.mxu0 0.0
        %1845 = vmatmul.mubr.f32.gmra.mxu0 %v257
        %v1846 = vpop.f32.mrf.mxu0
        %v1847 = vadd.f32 0.0, %v1846
        %v1848 = vpop.f32.mrf.mxu0
        %1849 = vmatprep.mubr.f32.mxu0 0.0
        %1850 = vmatmul.mubr.f32.gmra.mxu0 %v258
        %v1851 = vpop.f32.mrf.mxu0
        %v1852 = vadd.f32 0.0, %v1851
        %v1853 = vpop.f32.mrf.mxu0
        %1854 = vmatprep.mubr.f32.mxu0 0.0
        %1855 = vmatmul.mubr.f32.gmra.mxu0 %v259
        %v1856 = vpop.f32.mrf.mxu0
        %v1857 = vadd.f32 0.0, %v1856
        %v1858 = vpop.f32.mrf.mxu0
        %1859 = vmatprep.mubr.f32.mxu0 0.0
        %1860 = vmatmul.mubr.f32.gmra.mxu0 %v260
        %v1861 = vpop.f32.mrf.mxu0
        %v1862 = vadd.f32 0.0, %v1861
        %v1863 = vpop.f32.mrf.mxu0
        %1864 = vmatprep.mubr.f32.mxu0 0.0
        %1865 = vmatmul.mubr.f32.gmra.mxu0 %v261
        %v1866 = vpop.f32.mrf.mxu0
        %v1867 = vadd.f32 0.0, %v1866
        %v1868 = vpop.f32.mrf.mxu0
        %1869 = vmatprep.mubr.f32.mxu0 0.0
        %1870 = vmatmul.mubr.f32.gmra.mxu0 %v262
        %v1871 = vpop.f32.mrf.mxu0
        %v1872 = vadd.f32 0.0, %v1871
        %v1873 = vpop.f32.mrf.mxu0
        %1874 = vdwg.mxu0
        %v1875 = vmul.f32 %v1797, 0.2
        %v1876 = vmul.f32 %v1802, 0.2
        %v1877 = vmul.f32 %v1807, 0.2
        %v1878 = vmul.f32 %v1812, 0.2
        %v1879 = vmul.f32 %v1817, 0.2
        %v1880 = vmul.f32 %v1822, 0.2
        %v1881 = vmul.f32 %v1827, 0.2
        %v1882 = vmul.f32 %v1832, 0.2
        %v1883 = vmul.f32 %v1837, 0.2
        %v1884 = vmul.f32 %v1842, 0.2
        %v1885 = vmul.f32 %v1847, 0.2
        %v1886 = vmul.f32 %v1852, 0.2
        %v1887 = vmul.f32 %v1857, 0.2
        %v1888 = vmul.f32 %v1862, 0.2
        %v1889 = vmul.f32 %v1867, 0.2
        %v1890 = vmul.f32 %v1872, 0.2
        %v1891 = vadd.f32 %v298, %v1875
        %v1892 = vadd.f32 %v299, %v1876
        %v1893 = vadd.f32 %v300, %v1877
        %v1894 = vadd.f32 %v301, %v1878
        %v1895 = vadd.f32 %v302, %v1879
        %v1896 = vadd.f32 %v303, %v1880
        %v1897 = vadd.f32 %v304, %v1881
        %v1898 = vadd.f32 %v305, %v1882
        %v1899 = vadd.f32 %v306, %v1883
        %v1900 = vadd.f32 %v307, %v1884
        %v1901 = vadd.f32 %v308, %v1885
        %v1902 = vadd.f32 %v309, %v1886
        %v1903 = vadd.f32 %v310, %v1887
        %v1904 = vadd.f32 %v311, %v1888
        %v1905 = vadd.f32 %v312, %v1889
        %v1906 = vadd.f32 %v313, %v1890
        %1907 = vmatprep.subr.mxu0 0.0
        %1908 = vmatpush1.msra.mxu0 %v1906
        %1909 = vmatprep.subr.mxu0 0.0
        %1910 = vmatpush1.msra.mxu0 %v1905
        %1911 = vmatprep.subr.mxu0 0.0
        %1912 = vmatpush1.msra.mxu0 %v1904
        %1913 = vmatprep.subr.mxu0 0.0
        %1914 = vmatpush1.msra.mxu0 %v1903
        %1915 = vmatprep.subr.mxu0 0.0
        %1916 = vmatpush1.msra.mxu0 %v1902
        %1917 = vmatprep.subr.mxu0 0.0
        %1918 = vmatpush1.msra.mxu0 %v1901
        %1919 = vmatprep.subr.mxu0 0.0
        %1920 = vmatpush1.msra.mxu0 %v1900
        %1921 = vmatprep.subr.mxu0 0.0
        %1922 = vmatpush1.msra.mxu0 %v1899
        %1923 = vmatprep.subr.mxu0 0.0
        %1924 = vmatpush1.msra.mxu0 %v1898
        %1925 = vmatprep.subr.mxu0 0.0
        %1926 = vmatpush1.msra.mxu0 %v1897
        %1927 = vmatprep.subr.mxu0 0.0
        %1928 = vmatpush1.msra.mxu0 %v1896
        %1929 = vmatprep.subr.mxu0 0.0
        %1930 = vmatpush1.msra.mxu0 %v1895
        %1931 = vmatprep.subr.mxu0 0.0
        %1932 = vmatpush1.msra.mxu0 %v1894
        %1933 = vmatprep.subr.mxu0 0.0
        %1934 = vmatpush1.msra.mxu0 %v1893
        %1935 = vmatprep.subr.mxu0 0.0
        %1936 = vmatpush1.msra.mxu0 %v1892
        %1937 = vmatprep.subr.mxu0 0.0
        %1938 = vmatpush1.msra.mxu0 %v1891
        %1939 = vmatprep.subr.mxu0 0.0
        %1940 = vmatpush2.msra.mxu0 0.0
        %1941 = vmatprep.subr.mxu0 0.0
        %1942 = vmatpush2.msra.mxu0 0.0
        %1943 = vmatprep.subr.mxu0 0.0
        %1944 = vmatpush2.msra.mxu0 0.0
        %1945 = vmatprep.subr.mxu0 0.0
        %1946 = vmatpush2.msra.mxu0 0.0
        %1947 = vmatprep.subr.mxu0 0.0
        %1948 = vmatpush2.msra.mxu0 0.0
        %1949 = vmatprep.subr.mxu0 0.0
        %1950 = vmatpush2.msra.mxu0 0.0
        %1951 = vmatprep.subr.mxu0 0.0
        %1952 = vmatpush2.msra.mxu0 0.0
        %1953 = vmatprep.subr.mxu0 0.0
        %1954 = vmatpush2.msra.mxu0 0.0
        %1955 = vmatprep.subr.mxu0 0.0
        %1956 = vmatpush2.msra.mxu0 0.0
        %1957 = vmatprep.subr.mxu0 0.0
        %1958 = vmatpush2.msra.mxu0 0.0
        %1959 = vmatprep.subr.mxu0 0.0
        %1960 = vmatpush2.msra.mxu0 0.0
        %1961 = vmatprep.subr.mxu0 0.0
        %1962 = vmatpush2.msra.mxu0 0.0
        %1963 = vmatprep.subr.mxu0 0.0
        %1964 = vmatpush2.msra.mxu0 0.0
        %1965 = vmatprep.subr.mxu0 0.0
        %1966 = vmatpush2.msra.mxu0 0.0
        %1967 = vmatprep.subr.mxu0 0.0
        %1968 = vmatpush2.msra.mxu0 0.0
        %1969 = vmatprep.subr.mxu0 0.0
        %1970 = vmatpush2.msra.mxu0 0.0
        %1971 = vmatprep.mubr.f32.mxu0 0.0
        %1972 = vmatmul.mubr.f32.gmra.mxu0 %v247
        %v1973 = vpop.f32.mrf.mxu0
        %v1974 = vadd.f32 0.0, %v1973
        %v1975 = vpop.f32.mrf.mxu0
        %1976 = vmatprep.mubr.f32.mxu0 0.0
        %1977 = vmatmul.mubr.f32.gmra.mxu0 %v248
        %v1978 = vpop.f32.mrf.mxu0
        %v1979 = vadd.f32 0.0, %v1978
        %v1980 = vpop.f32.mrf.mxu0
        %1981 = vmatprep.mubr.f32.mxu0 0.0
        %1982 = vmatmul.mubr.f32.gmra.mxu0 %v249
        %v1983 = vpop.f32.mrf.mxu0
        %v1984 = vadd.f32 0.0, %v1983
        %v1985 = vpop.f32.mrf.mxu0
        %1986 = vmatprep.mubr.f32.mxu0 0.0
        %1987 = vmatmul.mubr.f32.gmra.mxu0 %v250
        %v1988 = vpop.f32.mrf.mxu0
        %v1989 = vadd.f32 0.0, %v1988
        %v1990 = vpop.f32.mrf.mxu0
        %1991 = vmatprep.mubr.f32.mxu0 0.0
        %1992 = vmatmul.mubr.f32.gmra.mxu0 %v251
        %v1993 = vpop.f32.mrf.mxu0
        %v1994 = vadd.f32 0.0, %v1993
        %v1995 = vpop.f32.mrf.mxu0
        %1996 = vmatprep.mubr.f32.mxu0 0.0
        %1997 = vmatmul.mubr.f32.gmra.mxu0 %v252
        %v1998 = vpop.f32.mrf.mxu0
        %v1999 = vadd.f32 0.0, %v1998
        %v2000 = vpop.f32.mrf.mxu0
        %2001 = vmatprep.mubr.f32.mxu0 0.0
        %2002 = vmatmul.mubr.f32.gmra.mxu0 %v253
        %v2003 = vpop.f32.mrf.mxu0
        %v2004 = vadd.f32 0.0, %v2003
        %v2005 = vpop.f32.mrf.mxu0
        %2006 = vmatprep.mubr.f32.mxu0 0.0
        %2007 = vmatmul.mubr.f32.gmra.mxu0 %v254
        %v2008 = vpop.f32.mrf.mxu0
        %v2009 = vadd.f32 0.0, %v2008
        %v2010 = vpop.f32.mrf.mxu0
        %2011 = vmatprep.mubr.f32.mxu0 0.0
        %2012 = vmatmul.mubr.f32.gmra.mxu0 %v255
        %v2013 = vpop.f32.mrf.mxu0
        %v2014 = vadd.f32 0.0, %v2013
        %v2015 = vpop.f32.mrf.mxu0
        %2016 = vmatprep.mubr.f32.mxu0 0.0
        %2017 = vmatmul.mubr.f32.gmra.mxu0 %v256
        %v2018 = vpop.f32.mrf.mxu0
        %v2019 = vadd.f32 0.0, %v2018
        %v2020 = vpop.f32.mrf.mxu0
        %2021 = vmatprep.mubr.f32.mxu0 0.0
        %2022 = vmatmul.mubr.f32.gmra.mxu0 %v257
        %v2023 = vpop.f32.mrf.mxu0
        %v2024 = vadd.f32 0.0, %v2023
        %v2025 = vpop.f32.mrf.mxu0
        %2026 = vmatprep.mubr.f32.mxu0 0.0
        %2027 = vmatmul.mubr.f32.gmra.mxu0 %v258
        %v2028 = vpop.f32.mrf.mxu0
        %v2029 = vadd.f32 0.0, %v2028
        %v2030 = vpop.f32.mrf.mxu0
        %2031 = vmatprep.mubr.f32.mxu0 0.0
        %2032 = vmatmul.mubr.f32.gmra.mxu0 %v259
        %v2033 = vpop.f32.mrf.mxu0
        %v2034 = vadd.f32 0.0, %v2033
        %v2035 = vpop.f32.mrf.mxu0
        %2036 = vmatprep.mubr.f32.mxu0 0.0
        %2037 = vmatmul.mubr.f32.gmra.mxu0 %v260
        %v2038 = vpop.f32.mrf.mxu0
        %v2039 = vadd.f32 0.0, %v2038
        %v2040 = vpop.f32.mrf.mxu0
        %2041 = vmatprep.mubr.f32.mxu0 0.0
        %2042 = vmatmul.mubr.f32.gmra.mxu0 %v261
        %v2043 = vpop.f32.mrf.mxu0
        %v2044 = vadd.f32 0.0, %v2043
        %v2045 = vpop.f32.mrf.mxu0
        %2046 = vmatprep.mubr.f32.mxu0 0.0
        %2047 = vmatmul.mubr.f32.gmra.mxu0 %v262
        %v2048 = vpop.f32.mrf.mxu0
        %v2049 = vadd.f32 0.0, %v2048
        %v2050 = vpop.f32.mrf.mxu0
        %2051 = vdwg.mxu0
        %v2052 = vmul.f32 %v1974, 0.25
        %v2053 = vmul.f32 %v1979, 0.25
        %v2054 = vmul.f32 %v1984, 0.25
        %v2055 = vmul.f32 %v1989, 0.25
        %v2056 = vmul.f32 %v1994, 0.25
        %v2057 = vmul.f32 %v1999, 0.25
        %v2058 = vmul.f32 %v2004, 0.25
        %v2059 = vmul.f32 %v2009, 0.25
        %v2060 = vmul.f32 %v2014, 0.25
        %v2061 = vmul.f32 %v2019, 0.25
        %v2062 = vmul.f32 %v2024, 0.25
        %v2063 = vmul.f32 %v2029, 0.25
        %v2064 = vmul.f32 %v2034, 0.25
        %v2065 = vmul.f32 %v2039, 0.25
        %v2066 = vmul.f32 %v2044, 0.25
        %v2067 = vmul.f32 %v2049, 0.25
        %v2068 = vadd.f32 %v298, %v2052
        %v2069 = vadd.f32 %v299, %v2053
        %v2070 = vadd.f32 %v300, %v2054
        %v2071 = vadd.f32 %v301, %v2055
        %v2072 = vadd.f32 %v302, %v2056
        %v2073 = vadd.f32 %v303, %v2057
        %v2074 = vadd.f32 %v304, %v2058
        %v2075 = vadd.f32 %v305, %v2059
        %v2076 = vadd.f32 %v306, %v2060
        %v2077 = vadd.f32 %v307, %v2061
        %v2078 = vadd.f32 %v308, %v2062
        %v2079 = vadd.f32 %v309, %v2063
        %v2080 = vadd.f32 %v310, %v2064
        %v2081 = vadd.f32 %v311, %v2065
        %v2082 = vadd.f32 %v312, %v2066
        %v2083 = vadd.f32 %v313, %v2067
        %2084 = vmatprep.subr.mxu0 0.0
        %2085 = vmatpush1.msra.mxu0 %v2083
        %2086 = vmatprep.subr.mxu0 0.0
        %2087 = vmatpush1.msra.mxu0 %v2082
        %2088 = vmatprep.subr.mxu0 0.0
        %2089 = vmatpush1.msra.mxu0 %v2081
        %2090 = vmatprep.subr.mxu0 0.0
        %2091 = vmatpush1.msra.mxu0 %v2080
        %2092 = vmatprep.subr.mxu0 0.0
        %2093 = vmatpush1.msra.mxu0 %v2079
        %2094 = vmatprep.subr.mxu0 0.0
        %2095 = vmatpush1.msra.mxu0 %v2078
        %2096 = vmatprep.subr.mxu0 0.0
        %2097 = vmatpush1.msra.mxu0 %v2077
        %2098 = vmatprep.subr.mxu0 0.0
        %2099 = vmatpush1.msra.mxu0 %v2076
        %2100 = vmatprep.subr.mxu0 0.0
        %2101 = vmatpush1.msra.mxu0 %v2075
        %2102 = vmatprep.subr.mxu0 0.0
        %2103 = vmatpush1.msra.mxu0 %v2074
        %2104 = vmatprep.subr.mxu0 0.0
        %2105 = vmatpush1.msra.mxu0 %v2073
        %2106 = vmatprep.subr.mxu0 0.0
        %2107 = vmatpush1.msra.mxu0 %v2072
        %2108 = vmatprep.subr.mxu0 0.0
        %2109 = vmatpush1.msra.mxu0 %v2071
        %2110 = vmatprep.subr.mxu0 0.0
        %2111 = vmatpush1.msra.mxu0 %v2070
        %2112 = vmatprep.subr.mxu0 0.0
        %2113 = vmatpush1.msra.mxu0 %v2069
        %2114 = vmatprep.subr.mxu0 0.0
        %2115 = vmatpush1.msra.mxu0 %v2068
        %2116 = vmatprep.subr.mxu0 0.0
        %2117 = vmatpush2.msra.mxu0 0.0
        %2118 = vmatprep.subr.mxu0 0.0
        %2119 = vmatpush2.msra.mxu0 0.0
        %2120 = vmatprep.subr.mxu0 0.0
        %2121 = vmatpush2.msra.mxu0 0.0
        %2122 = vmatprep.subr.mxu0 0.0
        %2123 = vmatpush2.msra.mxu0 0.0
        %2124 = vmatprep.subr.mxu0 0.0
        %2125 = vmatpush2.msra.mxu0 0.0
        %2126 = vmatprep.subr.mxu0 0.0
        %2127 = vmatpush2.msra.mxu0 0.0
        %2128 = vmatprep.subr.mxu0 0.0
        %2129 = vmatpush2.msra.mxu0 0.0
        %2130 = vmatprep.subr.mxu0 0.0
        %2131 = vmatpush2.msra.mxu0 0.0
        %2132 = vmatprep.subr.mxu0 0.0
        %2133 = vmatpush2.msra.mxu0 0.0
        %2134 = vmatprep.subr.mxu0 0.0
        %2135 = vmatpush2.msra.mxu0 0.0
        %2136 = vmatprep.subr.mxu0 0.0
        %2137 = vmatpush2.msra.mxu0 0.0
        %2138 = vmatprep.subr.mxu0 0.0
        %2139 = vmatpush2.msra.mxu0 0.0
        %2140 = vmatprep.subr.mxu0 0.0
        %2141 = vmatpush2.msra.mxu0 0.0
        %2142 = vmatprep.subr.mxu0 0.0
        %2143 = vmatpush2.msra.mxu0 0.0
        %2144 = vmatprep.subr.mxu0 0.0
        %2145 = vmatpush2.msra.mxu0 0.0
        %2146 = vmatprep.subr.mxu0 0.0
        %2147 = vmatpush2.msra.mxu0 0.0
        %2148 = vmatprep.mubr.f32.mxu0 0.0
        %2149 = vmatmul.mubr.f32.gmra.mxu0 %v247
        %v2150 = vpop.f32.mrf.mxu0
        %v2151 = vadd.f32 0.0, %v2150
        %v2152 = vpop.f32.mrf.mxu0
        %2153 = vmatprep.mubr.f32.mxu0 0.0
        %2154 = vmatmul.mubr.f32.gmra.mxu0 %v248
        %v2155 = vpop.f32.mrf.mxu0
        %v2156 = vadd.f32 0.0, %v2155
        %v2157 = vpop.f32.mrf.mxu0
        %2158 = vmatprep.mubr.f32.mxu0 0.0
        %2159 = vmatmul.mubr.f32.gmra.mxu0 %v249
        %v2160 = vpop.f32.mrf.mxu0
        %v2161 = vadd.f32 0.0, %v2160
        %v2162 = vpop.f32.mrf.mxu0
        %2163 = vmatprep.mubr.f32.mxu0 0.0
        %2164 = vmatmul.mubr.f32.gmra.mxu0 %v250
        %v2165 = vpop.f32.mrf.mxu0
        %v2166 = vadd.f32 0.0, %v2165
        %v2167 = vpop.f32.mrf.mxu0
        %2168 = vmatprep.mubr.f32.mxu0 0.0
        %2169 = vmatmul.mubr.f32.gmra.mxu0 %v251
        %v2170 = vpop.f32.mrf.mxu0
        %v2171 = vadd.f32 0.0, %v2170
        %v2172 = vpop.f32.mrf.mxu0
        %2173 = vmatprep.mubr.f32.mxu0 0.0
        %2174 = vmatmul.mubr.f32.gmra.mxu0 %v252
        %v2175 = vpop.f32.mrf.mxu0
        %v2176 = vadd.f32 0.0, %v2175
        %v2177 = vpop.f32.mrf.mxu0
        %2178 = vmatprep.mubr.f32.mxu0 0.0
        %2179 = vmatmul.mubr.f32.gmra.mxu0 %v253
        %v2180 = vpop.f32.mrf.mxu0
        %v2181 = vadd.f32 0.0, %v2180
        %v2182 = vpop.f32.mrf.mxu0
        %2183 = vmatprep.mubr.f32.mxu0 0.0
        %2184 = vmatmul.mubr.f32.gmra.mxu0 %v254
        %v2185 = vpop.f32.mrf.mxu0
        %v2186 = vadd.f32 0.0, %v2185
        %v2187 = vpop.f32.mrf.mxu0
        %2188 = vmatprep.mubr.f32.mxu0 0.0
        %2189 = vmatmul.mubr.f32.gmra.mxu0 %v255
        %v2190 = vpop.f32.mrf.mxu0
        %v2191 = vadd.f32 0.0, %v2190
        %v2192 = vpop.f32.mrf.mxu0
        %2193 = vmatprep.mubr.f32.mxu0 0.0
        %2194 = vmatmul.mubr.f32.gmra.mxu0 %v256
        %v2195 = vpop.f32.mrf.mxu0
        %v2196 = vadd.f32 0.0, %v2195
        %v2197 = vpop.f32.mrf.mxu0
        %2198 = vmatprep.mubr.f32.mxu0 0.0
        %2199 = vmatmul.mubr.f32.gmra.mxu0 %v257
        %v2200 = vpop.f32.mrf.mxu0
        %v2201 = vadd.f32 0.0, %v2200
        %v2202 = vpop.f32.mrf.mxu0
        %2203 = vmatprep.mubr.f32.mxu0 0.0
        %2204 = vmatmul.mubr.f32.gmra.mxu0 %v258
        %v2205 = vpop.f32.mrf.mxu0
        %v2206 = vadd.f32 0.0, %v2205
        %v2207 = vpop.f32.mrf.mxu0
        %2208 = vmatprep.mubr.f32.mxu0 0.0
        %2209 = vmatmul.mubr.f32.gmra.mxu0 %v259
        %v2210 = vpop.f32.mrf.mxu0
        %v2211 = vadd.f32 0.0, %v2210
        %v2212 = vpop.f32.mrf.mxu0
        %2213 = vmatprep.mubr.f32.mxu0 0.0
        %2214 = vmatmul.mubr.f32.gmra.mxu0 %v260
        %v2215 = vpop.f32.mrf.mxu0
        %v2216 = vadd.f32 0.0, %v2215
        %v2217 = vpop.f32.mrf.mxu0
        %2218 = vmatprep.mubr.f32.mxu0 0.0
        %2219 = vmatmul.mubr.f32.gmra.mxu0 %v261
        %v2220 = vpop.f32.mrf.mxu0
        %v2221 = vadd.f32 0.0, %v2220
        %v2222 = vpop.f32.mrf.mxu0
        %2223 = vmatprep.mubr.f32.mxu0 0.0
        %2224 = vmatmul.mubr.f32.gmra.mxu0 %v262
        %v2225 = vpop.f32.mrf.mxu0
        %v2226 = vadd.f32 0.0, %v2225
        %v2227 = vpop.f32.mrf.mxu0
        %2228 = vdwg.mxu0
        %v2229 = vmul.f32 %v2151, 0.33333334
        %v2230 = vmul.f32 %v2156, 0.33333334
        %v2231 = vmul.f32 %v2161, 0.33333334
        %v2232 = vmul.f32 %v2166, 0.33333334
        %v2233 = vmul.f32 %v2171, 0.33333334
        %v2234 = vmul.f32 %v2176, 0.33333334
        %v2235 = vmul.f32 %v2181, 0.33333334
        %v2236 = vmul.f32 %v2186, 0.33333334
        %v2237 = vmul.f32 %v2191, 0.33333334
        %v2238 = vmul.f32 %v2196, 0.33333334
        %v2239 = vmul.f32 %v2201, 0.33333334
        %v2240 = vmul.f32 %v2206, 0.33333334
        %v2241 = vmul.f32 %v2211, 0.33333334
        %v2242 = vmul.f32 %v2216, 0.33333334
        %v2243 = vmul.f32 %v2221, 0.33333334
        %v2244 = vmul.f32 %v2226, 0.33333334
        %v2245 = vadd.f32 %v298, %v2229
        %v2246 = vadd.f32 %v299, %v2230
        %v2247 = vadd.f32 %v300, %v2231
        %v2248 = vadd.f32 %v301, %v2232
        %v2249 = vadd.f32 %v302, %v2233
        %v2250 = vadd.f32 %v303, %v2234
        %v2251 = vadd.f32 %v304, %v2235
        %v2252 = vadd.f32 %v305, %v2236
        %v2253 = vadd.f32 %v306, %v2237
        %v2254 = vadd.f32 %v307, %v2238
        %v2255 = vadd.f32 %v308, %v2239
        %v2256 = vadd.f32 %v309, %v2240
        %v2257 = vadd.f32 %v310, %v2241
        %v2258 = vadd.f32 %v311, %v2242
        %v2259 = vadd.f32 %v312, %v2243
        %v2260 = vadd.f32 %v313, %v2244
        %2261 = vmatprep.subr.mxu0 0.0
        %2262 = vmatpush1.msra.mxu0 %v2260
        %2263 = vmatprep.subr.mxu0 0.0
        %2264 = vmatpush1.msra.mxu0 %v2259
        %2265 = vmatprep.subr.mxu0 0.0
        %2266 = vmatpush1.msra.mxu0 %v2258
        %2267 = vmatprep.subr.mxu0 0.0
        %2268 = vmatpush1.msra.mxu0 %v2257
        %2269 = vmatprep.subr.mxu0 0.0
        %2270 = vmatpush1.msra.mxu0 %v2256
        %2271 = vmatprep.subr.mxu0 0.0
        %2272 = vmatpush1.msra.mxu0 %v2255
        %2273 = vmatprep.subr.mxu0 0.0
        %2274 = vmatpush1.msra.mxu0 %v2254
        %2275 = vmatprep.subr.mxu0 0.0
        %2276 = vmatpush1.msra.mxu0 %v2253
        %2277 = vmatprep.subr.mxu0 0.0
        %2278 = vmatpush1.msra.mxu0 %v2252
        %2279 = vmatprep.subr.mxu0 0.0
        %2280 = vmatpush1.msra.mxu0 %v2251
        %2281 = vmatprep.subr.mxu0 0.0
        %2282 = vmatpush1.msra.mxu0 %v2250
        %2283 = vmatprep.subr.mxu0 0.0
        %2284 = vmatpush1.msra.mxu0 %v2249
        %2285 = vmatprep.subr.mxu0 0.0
        %2286 = vmatpush1.msra.mxu0 %v2248
        %2287 = vmatprep.subr.mxu0 0.0
        %2288 = vmatpush1.msra.mxu0 %v2247
        %2289 = vmatprep.subr.mxu0 0.0
        %2290 = vmatpush1.msra.mxu0 %v2246
        %2291 = vmatprep.subr.mxu0 0.0
        %2292 = vmatpush1.msra.mxu0 %v2245
        %2293 = vmatprep.subr.mxu0 0.0
        %2294 = vmatpush2.msra.mxu0 0.0
        %2295 = vmatprep.subr.mxu0 0.0
        %2296 = vmatpush2.msra.mxu0 0.0
        %2297 = vmatprep.subr.mxu0 0.0
        %2298 = vmatpush2.msra.mxu0 0.0
        %2299 = vmatprep.subr.mxu0 0.0
        %2300 = vmatpush2.msra.mxu0 0.0
        %2301 = vmatprep.subr.mxu0 0.0
        %2302 = vmatpush2.msra.mxu0 0.0
        %2303 = vmatprep.subr.mxu0 0.0
        %2304 = vmatpush2.msra.mxu0 0.0
        %2305 = vmatprep.subr.mxu0 0.0
        %2306 = vmatpush2.msra.mxu0 0.0
        %2307 = vmatprep.subr.mxu0 0.0
        %2308 = vmatpush2.msra.mxu0 0.0
        %2309 = vmatprep.subr.mxu0 0.0
        %2310 = vmatpush2.msra.mxu0 0.0
        %2311 = vmatprep.subr.mxu0 0.0
        %2312 = vmatpush2.msra.mxu0 0.0
        %2313 = vmatprep.subr.mxu0 0.0
        %2314 = vmatpush2.msra.mxu0 0.0
        %2315 = vmatprep.subr.mxu0 0.0
        %2316 = vmatpush2.msra.mxu0 0.0
        %2317 = vmatprep.subr.mxu0 0.0
        %2318 = vmatpush2.msra.mxu0 0.0
        %2319 = vmatprep.subr.mxu0 0.0
        %2320 = vmatpush2.msra.mxu0 0.0
        %2321 = vmatprep.subr.mxu0 0.0
        %2322 = vmatpush2.msra.mxu0 0.0
        %2323 = vmatprep.subr.mxu0 0.0
        %2324 = vmatpush2.msra.mxu0 0.0
        %2325 = vmatprep.mubr.f32.mxu0 0.0
        %2326 = vmatmul.mubr.f32.gmra.mxu0 %v247
        %v2327 = vpop.f32.mrf.mxu0
        %v2328 = vadd.f32 0.0, %v2327
        %v2329 = vpop.f32.mrf.mxu0
        %2330 = vmatprep.mubr.f32.mxu0 0.0
        %2331 = vmatmul.mubr.f32.gmra.mxu0 %v248
        %v2332 = vpop.f32.mrf.mxu0
        %v2333 = vadd.f32 0.0, %v2332
        %v2334 = vpop.f32.mrf.mxu0
        %2335 = vmatprep.mubr.f32.mxu0 0.0
        %2336 = vmatmul.mubr.f32.gmra.mxu0 %v249
        %v2337 = vpop.f32.mrf.mxu0
        %v2338 = vadd.f32 0.0, %v2337
        %v2339 = vpop.f32.mrf.mxu0
        %2340 = vmatprep.mubr.f32.mxu0 0.0
        %2341 = vmatmul.mubr.f32.gmra.mxu0 %v250
        %v2342 = vpop.f32.mrf.mxu0
        %v2343 = vadd.f32 0.0, %v2342
        %v2344 = vpop.f32.mrf.mxu0
        %2345 = vmatprep.mubr.f32.mxu0 0.0
        %2346 = vmatmul.mubr.f32.gmra.mxu0 %v251
        %v2347 = vpop.f32.mrf.mxu0
        %v2348 = vadd.f32 0.0, %v2347
        %v2349 = vpop.f32.mrf.mxu0
        %2350 = vmatprep.mubr.f32.mxu0 0.0
        %2351 = vmatmul.mubr.f32.gmra.mxu0 %v252
        %v2352 = vpop.f32.mrf.mxu0
        %v2353 = vadd.f32 0.0, %v2352
        %v2354 = vpop.f32.mrf.mxu0
        %2355 = vmatprep.mubr.f32.mxu0 0.0
        %2356 = vmatmul.mubr.f32.gmra.mxu0 %v253
        %v2357 = vpop.f32.mrf.mxu0
        %v2358 = vadd.f32 0.0, %v2357
        %v2359 = vpop.f32.mrf.mxu0
        %2360 = vmatprep.mubr.f32.mxu0 0.0
        %2361 = vmatmul.mubr.f32.gmra.mxu0 %v254
        %v2362 = vpop.f32.mrf.mxu0
        %v2363 = vadd.f32 0.0, %v2362
        %v2364 = vpop.f32.mrf.mxu0
        %2365 = vmatprep.mubr.f32.mxu0 0.0
        %2366 = vmatmul.mubr.f32.gmra.mxu0 %v255
        %v2367 = vpop.f32.mrf.mxu0
        %v2368 = vadd.f32 0.0, %v2367
        %v2369 = vpop.f32.mrf.mxu0
        %2370 = vmatprep.mubr.f32.mxu0 0.0
        %2371 = vmatmul.mubr.f32.gmra.mxu0 %v256
        %v2372 = vpop.f32.mrf.mxu0
        %v2373 = vadd.f32 0.0, %v2372
        %v2374 = vpop.f32.mrf.mxu0
        %2375 = vmatprep.mubr.f32.mxu0 0.0
        %2376 = vmatmul.mubr.f32.gmra.mxu0 %v257
        %v2377 = vpop.f32.mrf.mxu0
        %v2378 = vadd.f32 0.0, %v2377
        %v2379 = vpop.f32.mrf.mxu0
        %2380 = vmatprep.mubr.f32.mxu0 0.0
        %2381 = vmatmul.mubr.f32.gmra.mxu0 %v258
        %v2382 = vpop.f32.mrf.mxu0
        %v2383 = vadd.f32 0.0, %v2382
        %v2384 = vpop.f32.mrf.mxu0
        %2385 = vmatprep.mubr.f32.mxu0 0.0
        %2386 = vmatmul.mubr.f32.gmra.mxu0 %v259
        %v2387 = vpop.f32.mrf.mxu0
        %v2388 = vadd.f32 0.0, %v2387
        %v2389 = vpop.f32.mrf.mxu0
        %2390 = vmatprep.mubr.f32.mxu0 0.0
        %2391 = vmatmul.mubr.f32.gmra.mxu0 %v260
        %v2392 = vpop.f32.mrf.mxu0
        %v2393 = vadd.f32 0.0, %v2392
        %v2394 = vpop.f32.mrf.mxu0
        %2395 = vmatprep.mubr.f32.mxu0 0.0
        %2396 = vmatmul.mubr.f32.gmra.mxu0 %v261
        %v2397 = vpop.f32.mrf.mxu0
        %v2398 = vadd.f32 0.0, %v2397
        %v2399 = vpop.f32.mrf.mxu0
        %2400 = vmatprep.mubr.f32.mxu0 0.0
        %2401 = vmatmul.mubr.f32.gmra.mxu0 %v262
        %v2402 = vpop.f32.mrf.mxu0
        %v2403 = vadd.f32 0.0, %v2402
        %v2404 = vpop.f32.mrf.mxu0
        %2405 = vdwg.mxu0
        %v2406 = vmul.f32 %v2328, 0.5
        %v2407 = vmul.f32 %v2333, 0.5
        %v2408 = vmul.f32 %v2338, 0.5
        %v2409 = vmul.f32 %v2343, 0.5
        %v2410 = vmul.f32 %v2348, 0.5
        %v2411 = vmul.f32 %v2353, 0.5
        %v2412 = vmul.f32 %v2358, 0.5
        %v2413 = vmul.f32 %v2363, 0.5
        %v2414 = vmul.f32 %v2368, 0.5
        %v2415 = vmul.f32 %v2373, 0.5
        %v2416 = vmul.f32 %v2378, 0.5
        %v2417 = vmul.f32 %v2383, 0.5
        %v2418 = vmul.f32 %v2388, 0.5
        %v2419 = vmul.f32 %v2393, 0.5
        %v2420 = vmul.f32 %v2398, 0.5
        %v2421 = vmul.f32 %v2403, 0.5
        %v2422 = vadd.f32 %v298, %v2406
        %v2423 = vadd.f32 %v299, %v2407
        %v2424 = vadd.f32 %v300, %v2408
        %v2425 = vadd.f32 %v301, %v2409
        %v2426 = vadd.f32 %v302, %v2410
        %v2427 = vadd.f32 %v303, %v2411
        %v2428 = vadd.f32 %v304, %v2412
        %v2429 = vadd.f32 %v305, %v2413
        %v2430 = vadd.f32 %v306, %v2414
        %v2431 = vadd.f32 %v307, %v2415
        %v2432 = vadd.f32 %v308, %v2416
        %v2433 = vadd.f32 %v309, %v2417
        %v2434 = vadd.f32 %v310, %v2418
        %v2435 = vadd.f32 %v311, %v2419
        %v2436 = vadd.f32 %v312, %v2420
        %v2437 = vadd.f32 %v313, %v2421
        %2438 = vmatprep.subr.mxu0 0.0
        %2439 = vmatpush1.msra.mxu0 %v2437
        %2440 = vmatprep.subr.mxu0 0.0
        %2441 = vmatpush1.msra.mxu0 %v2436
        %2442 = vmatprep.subr.mxu0 0.0
        %2443 = vmatpush1.msra.mxu0 %v2435
        %2444 = vmatprep.subr.mxu0 0.0
        %2445 = vmatpush1.msra.mxu0 %v2434
        %2446 = vmatprep.subr.mxu0 0.0
        %2447 = vmatpush1.msra.mxu0 %v2433
        %2448 = vmatprep.subr.mxu0 0.0
        %2449 = vmatpush1.msra.mxu0 %v2432
        %2450 = vmatprep.subr.mxu0 0.0
        %2451 = vmatpush1.msra.mxu0 %v2431
        %2452 = vmatprep.subr.mxu0 0.0
        %2453 = vmatpush1.msra.mxu0 %v2430
        %2454 = vmatprep.subr.mxu0 0.0
        %2455 = vmatpush1.msra.mxu0 %v2429
        %2456 = vmatprep.subr.mxu0 0.0
        %2457 = vmatpush1.msra.mxu0 %v2428
        %2458 = vmatprep.subr.mxu0 0.0
        %2459 = vmatpush1.msra.mxu0 %v2427
        %2460 = vmatprep.subr.mxu0 0.0
        %2461 = vmatpush1.msra.mxu0 %v2426
        %2462 = vmatprep.subr.mxu0 0.0
        %2463 = vmatpush1.msra.mxu0 %v2425
        %2464 = vmatprep.subr.mxu0 0.0
        %2465 = vmatpush1.msra.mxu0 %v2424
        %2466 = vmatprep.subr.mxu0 0.0
        %2467 = vmatpush1.msra.mxu0 %v2423
        %2468 = vmatprep.subr.mxu0 0.0
        %2469 = vmatpush1.msra.mxu0 %v2422
        %2470 = vmatprep.subr.mxu0 0.0
        %2471 = vmatpush2.msra.mxu0 0.0
        %2472 = vmatprep.subr.mxu0 0.0
        %2473 = vmatpush2.msra.mxu0 0.0
        %2474 = vmatprep.subr.mxu0 0.0
        %2475 = vmatpush2.msra.mxu0 0.0
        %2476 = vmatprep.subr.mxu0 0.0
        %2477 = vmatpush2.msra.mxu0 0.0
        %2478 = vmatprep.subr.mxu0 0.0
        %2479 = vmatpush2.msra.mxu0 0.0
        %2480 = vmatprep.subr.mxu0 0.0
        %2481 = vmatpush2.msra.mxu0 0.0
        %2482 = vmatprep.subr.mxu0 0.0
        %2483 = vmatpush2.msra.mxu0 0.0
        %2484 = vmatprep.subr.mxu0 0.0
        %2485 = vmatpush2.msra.mxu0 0.0
        %2486 = vmatprep.subr.mxu0 0.0
        %2487 = vmatpush2.msra.mxu0 0.0
        %2488 = vmatprep.subr.mxu0 0.0
        %2489 = vmatpush2.msra.mxu0 0.0
        %2490 = vmatprep.subr.mxu0 0.0
        %2491 = vmatpush2.msra.mxu0 0.0
        %2492 = vmatprep.subr.mxu0 0.0
        %2493 = vmatpush2.msra.mxu0 0.0
        %2494 = vmatprep.subr.mxu0 0.0
        %2495 = vmatpush2.msra.mxu0 0.0
        %2496 = vmatprep.subr.mxu0 0.0
        %2497 = vmatpush2.msra.mxu0 0.0
        %2498 = vmatprep.subr.mxu0 0.0
        %2499 = vmatpush2.msra.mxu0 0.0
        %2500 = vmatprep.subr.mxu0 0.0
        %2501 = vmatpush2.msra.mxu0 0.0
        %2502 = vmatprep.mubr.f32.mxu0 0.0
        %2503 = vmatmul.mubr.f32.gmra.mxu0 %v247
        %v2504 = vpop.f32.mrf.mxu0
        %v2505 = vadd.f32 0.0, %v2504
        %v2506 = vpop.f32.mrf.mxu0
        %2507 = vmatprep.mubr.f32.mxu0 0.0
        %2508 = vmatmul.mubr.f32.gmra.mxu0 %v248
        %v2509 = vpop.f32.mrf.mxu0
        %v2510 = vadd.f32 0.0, %v2509
        %v2511 = vpop.f32.mrf.mxu0
        %2512 = vmatprep.mubr.f32.mxu0 0.0
        %2513 = vmatmul.mubr.f32.gmra.mxu0 %v249
        %v2514 = vpop.f32.mrf.mxu0
        %v2515 = vadd.f32 0.0, %v2514
        %v2516 = vpop.f32.mrf.mxu0
        %2517 = vmatprep.mubr.f32.mxu0 0.0
        %2518 = vmatmul.mubr.f32.gmra.mxu0 %v250
        %v2519 = vpop.f32.mrf.mxu0
        %v2520 = vadd.f32 0.0, %v2519
        %v2521 = vpop.f32.mrf.mxu0
        %2522 = vmatprep.mubr.f32.mxu0 0.0
        %2523 = vmatmul.mubr.f32.gmra.mxu0 %v251
        %v2524 = vpop.f32.mrf.mxu0
        %v2525 = vadd.f32 0.0, %v2524
        %v2526 = vpop.f32.mrf.mxu0
        %2527 = vmatprep.mubr.f32.mxu0 0.0
        %2528 = vmatmul.mubr.f32.gmra.mxu0 %v252
        %v2529 = vpop.f32.mrf.mxu0
        %v2530 = vadd.f32 0.0, %v2529
        %v2531 = vpop.f32.mrf.mxu0
        %2532 = vmatprep.mubr.f32.mxu0 0.0
        %2533 = vmatmul.mubr.f32.gmra.mxu0 %v253
        %v2534 = vpop.f32.mrf.mxu0
        %v2535 = vadd.f32 0.0, %v2534
        %v2536 = vpop.f32.mrf.mxu0
        %2537 = vmatprep.mubr.f32.mxu0 0.0
        %2538 = vmatmul.mubr.f32.gmra.mxu0 %v254
        %v2539 = vpop.f32.mrf.mxu0
        %v2540 = vadd.f32 0.0, %v2539
        %v2541 = vpop.f32.mrf.mxu0
        %2542 = vmatprep.mubr.f32.mxu0 0.0
        %2543 = vmatmul.mubr.f32.gmra.mxu0 %v255
        %v2544 = vpop.f32.mrf.mxu0
        %v2545 = vadd.f32 0.0, %v2544
        %v2546 = vpop.f32.mrf.mxu0
        %2547 = vmatprep.mubr.f32.mxu0 0.0
        %2548 = vmatmul.mubr.f32.gmra.mxu0 %v256
        %v2549 = vpop.f32.mrf.mxu0
        %v2550 = vadd.f32 0.0, %v2549
        %v2551 = vpop.f32.mrf.mxu0
        %2552 = vmatprep.mubr.f32.mxu0 0.0
        %2553 = vmatmul.mubr.f32.gmra.mxu0 %v257
        %v2554 = vpop.f32.mrf.mxu0
        %v2555 = vadd.f32 0.0, %v2554
        %v2556 = vpop.f32.mrf.mxu0
        %2557 = vmatprep.mubr.f32.mxu0 0.0
        %2558 = vmatmul.mubr.f32.gmra.mxu0 %v258
        %v2559 = vpop.f32.mrf.mxu0
        %v2560 = vadd.f32 0.0, %v2559
        %v2561 = vpop.f32.mrf.mxu0
        %2562 = vmatprep.mubr.f32.mxu0 0.0
        %2563 = vmatmul.mubr.f32.gmra.mxu0 %v259
        %v2564 = vpop.f32.mrf.mxu0
        %v2565 = vadd.f32 0.0, %v2564
        %v2566 = vpop.f32.mrf.mxu0
        %2567 = vmatprep.mubr.f32.mxu0 0.0
        %2568 = vmatmul.mubr.f32.gmra.mxu0 %v260
        %v2569 = vpop.f32.mrf.mxu0
        %v2570 = vadd.f32 0.0, %v2569
        %v2571 = vpop.f32.mrf.mxu0
        %2572 = vmatprep.mubr.f32.mxu0 0.0
        %2573 = vmatmul.mubr.f32.gmra.mxu0 %v261
        %v2574 = vpop.f32.mrf.mxu0
        %v2575 = vadd.f32 0.0, %v2574
        %v2576 = vpop.f32.mrf.mxu0
        %2577 = vmatprep.mubr.f32.mxu0 0.0
        %2578 = vmatmul.mubr.f32.gmra.mxu0 %v262
        %v2579 = vpop.f32.mrf.mxu0
        %v2580 = vadd.f32 0.0, %v2579
        %v2581 = vpop.f32.mrf.mxu0
        %2582 = vdwg.mxu0
        %v2583 = vadd.f32 %v298, %v2505
        %v2584 = vadd.f32 %v299, %v2510
        %v2585 = vadd.f32 %v300, %v2515
        %v2586 = vadd.f32 %v301, %v2520
        %v2587 = vadd.f32 %v302, %v2525
        %v2588 = vadd.f32 %v303, %v2530
        %v2589 = vadd.f32 %v304, %v2535
        %v2590 = vadd.f32 %v305, %v2540
        %v2591 = vadd.f32 %v306, %v2545
        %v2592 = vadd.f32 %v307, %v2550
        %v2593 = vadd.f32 %v308, %v2555
        %v2594 = vadd.f32 %v309, %v2560
        %v2595 = vadd.f32 %v310, %v2565
        %v2596 = vadd.f32 %v311, %v2570
        %v2597 = vadd.f32 %v312, %v2575
        %v2598 = vadd.f32 %v313, %v2580
        %2599 = vmatprep.subr.mxu0 0.0
        %2600 = vmatpush1.msra.mxu0 %v2598
        %2601 = vmatprep.subr.mxu0 0.0
        %2602 = vmatpush1.msra.mxu0 %v2597
        %2603 = vmatprep.subr.mxu0 0.0
        %2604 = vmatpush1.msra.mxu0 %v2596
        %2605 = vmatprep.subr.mxu0 0.0
        %2606 = vmatpush1.msra.mxu0 %v2595
        %2607 = vmatprep.subr.mxu0 0.0
        %2608 = vmatpush1.msra.mxu0 %v2594
        %2609 = vmatprep.subr.mxu0 0.0
        %2610 = vmatpush1.msra.mxu0 %v2593
        %2611 = vmatprep.subr.mxu0 0.0
        %2612 = vmatpush1.msra.mxu0 %v2592
        %2613 = vmatprep.subr.mxu0 0.0
        %2614 = vmatpush1.msra.mxu0 %v2591
        %2615 = vmatprep.subr.mxu0 0.0
        %2616 = vmatpush1.msra.mxu0 %v2590
        %2617 = vmatprep.subr.mxu0 0.0
        %2618 = vmatpush1.msra.mxu0 %v2589
        %2619 = vmatprep.subr.mxu0 0.0
        %2620 = vmatpush1.msra.mxu0 %v2588
        %2621 = vmatprep.subr.mxu0 0.0
        %2622 = vmatpush1.msra.mxu0 %v2587
        %2623 = vmatprep.subr.mxu0 0.0
        %2624 = vmatpush1.msra.mxu0 %v2586
        %2625 = vmatprep.subr.mxu0 0.0
        %2626 = vmatpush1.msra.mxu0 %v2585
        %2627 = vmatprep.subr.mxu0 0.0
        %2628 = vmatpush1.msra.mxu0 %v2584
        %2629 = vmatprep.subr.mxu0 0.0
        %2630 = vmatpush1.msra.mxu0 %v2583
        %2631 = vmatprep.subr.mxu0 0.0
        %2632 = vmatpush2.msra.mxu0 0.0
        %2633 = vmatprep.subr.mxu0 0.0
        %2634 = vmatpush2.msra.mxu0 0.0
        %2635 = vmatprep.subr.mxu0 0.0
        %2636 = vmatpush2.msra.mxu0 0.0
        %2637 = vmatprep.subr.mxu0 0.0
        %2638 = vmatpush2.msra.mxu0 0.0
        %2639 = vmatprep.subr.mxu0 0.0
        %2640 = vmatpush2.msra.mxu0 0.0
        %2641 = vmatprep.subr.mxu0 0.0
        %2642 = vmatpush2.msra.mxu0 0.0
        %2643 = vmatprep.subr.mxu0 0.0
        %2644 = vmatpush2.msra.mxu0 0.0
        %2645 = vmatprep.subr.mxu0 0.0
        %2646 = vmatpush2.msra.mxu0 0.0
        %2647 = vmatprep.subr.mxu0 0.0
        %2648 = vmatpush2.msra.mxu0 0.0
        %2649 = vmatprep.subr.mxu0 0.0
        %2650 = vmatpush2.msra.mxu0 0.0
        %2651 = vmatprep.subr.mxu0 0.0
        %2652 = vmatpush2.msra.mxu0 0.0
        %2653 = vmatprep.subr.mxu0 0.0
        %2654 = vmatpush2.msra.mxu0 0.0
        %2655 = vmatprep.subr.mxu0 0.0
        %2656 = vmatpush2.msra.mxu0 0.0
        %2657 = vmatprep.subr.mxu0 0.0
        %2658 = vmatpush2.msra.mxu0 0.0
        %2659 = vmatprep.subr.mxu0 0.0
        %2660 = vmatpush2.msra.mxu0 0.0
        %2661 = vmatprep.subr.mxu0 0.0
        %2662 = vmatpush2.msra.mxu0 0.0
        %2663 = vmatprep.mubr.f32.mxu0 0.0
        %2664 = vmatmul.mubr.f32.gmra.mxu0 %v2583
        %v2665 = vpop.f32.mrf.mxu0
        %v2666 = vadd.f32 0.0, %v2665
        %v2667 = vpop.f32.mrf.mxu0
        %2668 = vmatprep.mubr.f32.mxu0 0.0
        %2669 = vmatmul.mubr.f32.gmra.mxu0 %v2584
        %v2670 = vpop.f32.mrf.mxu0
        %v2671 = vadd.f32 0.0, %v2670
        %v2672 = vpop.f32.mrf.mxu0
        %2673 = vmatprep.mubr.f32.mxu0 0.0
        %2674 = vmatmul.mubr.f32.gmra.mxu0 %v2585
        %v2675 = vpop.f32.mrf.mxu0
        %v2676 = vadd.f32 0.0, %v2675
        %v2677 = vpop.f32.mrf.mxu0
        %2678 = vmatprep.mubr.f32.mxu0 0.0
        %2679 = vmatmul.mubr.f32.gmra.mxu0 %v2586
        %v2680 = vpop.f32.mrf.mxu0
        %v2681 = vadd.f32 0.0, %v2680
        %v2682 = vpop.f32.mrf.mxu0
        %2683 = vmatprep.mubr.f32.mxu0 0.0
        %2684 = vmatmul.mubr.f32.gmra.mxu0 %v2587
        %v2685 = vpop.f32.mrf.mxu0
        %v2686 = vadd.f32 0.0, %v2685
        %v2687 = vpop.f32.mrf.mxu0
        %2688 = vmatprep.mubr.f32.mxu0 0.0
        %2689 = vmatmul.mubr.f32.gmra.mxu0 %v2588
        %v2690 = vpop.f32.mrf.mxu0
        %v2691 = vadd.f32 0.0, %v2690
        %v2692 = vpop.f32.mrf.mxu0
        %2693 = vmatprep.mubr.f32.mxu0 0.0
        %2694 = vmatmul.mubr.f32.gmra.mxu0 %v2589
        %v2695 = vpop.f32.mrf.mxu0
        %v2696 = vadd.f32 0.0, %v2695
        %v2697 = vpop.f32.mrf.mxu0
        %2698 = vmatprep.mubr.f32.mxu0 0.0
        %2699 = vmatmul.mubr.f32.gmra.mxu0 %v2590
        %v2700 = vpop.f32.mrf.mxu0
        %v2701 = vadd.f32 0.0, %v2700
        %v2702 = vpop.f32.mrf.mxu0
        %2703 = vmatprep.mubr.f32.mxu0 0.0
        %2704 = vmatmul.mubr.f32.gmra.mxu0 %v2591
        %v2705 = vpop.f32.mrf.mxu0
        %v2706 = vadd.f32 0.0, %v2705
        %v2707 = vpop.f32.mrf.mxu0
        %2708 = vmatprep.mubr.f32.mxu0 0.0
        %2709 = vmatmul.mubr.f32.gmra.mxu0 %v2592
        %v2710 = vpop.f32.mrf.mxu0
        %v2711 = vadd.f32 0.0, %v2710
        %v2712 = vpop.f32.mrf.mxu0
        %2713 = vmatprep.mubr.f32.mxu0 0.0
        %2714 = vmatmul.mubr.f32.gmra.mxu0 %v2593
        %v2715 = vpop.f32.mrf.mxu0
        %v2716 = vadd.f32 0.0, %v2715
        %v2717 = vpop.f32.mrf.mxu0
        %2718 = vmatprep.mubr.f32.mxu0 0.0
        %2719 = vmatmul.mubr.f32.gmra.mxu0 %v2594
        %v2720 = vpop.f32.mrf.mxu0
        %v2721 = vadd.f32 0.0, %v2720
        %v2722 = vpop.f32.mrf.mxu0
        %2723 = vmatprep.mubr.f32.mxu0 0.0
        %2724 = vmatmul.mubr.f32.gmra.mxu0 %v2595
        %v2725 = vpop.f32.mrf.mxu0
        %v2726 = vadd.f32 0.0, %v2725
        %v2727 = vpop.f32.mrf.mxu0
        %2728 = vmatprep.mubr.f32.mxu0 0.0
        %2729 = vmatmul.mubr.f32.gmra.mxu0 %v2596
        %v2730 = vpop.f32.mrf.mxu0
        %v2731 = vadd.f32 0.0, %v2730
        %v2732 = vpop.f32.mrf.mxu0
        %2733 = vmatprep.mubr.f32.mxu0 0.0
        %2734 = vmatmul.mubr.f32.gmra.mxu0 %v2597
        %v2735 = vpop.f32.mrf.mxu0
        %v2736 = vadd.f32 0.0, %v2735
        %v2737 = vpop.f32.mrf.mxu0
        %2738 = vmatprep.mubr.f32.mxu0 0.0
        %2739 = vmatmul.mubr.f32.gmra.mxu0 %v2598
        %v2740 = vpop.f32.mrf.mxu0
        %v2741 = vadd.f32 0.0, %v2740
        %v2742 = vpop.f32.mrf.mxu0
        %2743 = vdwg.mxu0
        %vm2744 = vcmp.lt.f32.partialorder 0.0, %v242
        %v2745 = vsel %vm2744, 1.0, 0.0
        %v2746 = vmul.f32 %v2745, %v2666
        %v2747 = vmul.f32 %v2745, %v2671
        %v2748 = vmul.f32 %v2745, %v2676
        %v2749 = vmul.f32 %v2745, %v2681
        %v2750 = vmul.f32 %v2745, %v2686
        %v2751 = vmul.f32 %v2745, %v2691
        %v2752 = vmul.f32 %v2745, %v2696
        %v2753 = vmul.f32 %v2745, %v2701
        %v2754 = vmul.f32 %v2745, %v2706
        %v2755 = vmul.f32 %v2745, %v2711
        %v2756 = vmul.f32 %v2745, %v2716
        %v2757 = vmul.f32 %v2745, %v2721
        %v2758 = vmul.f32 %v2745, %v2726
        %v2759 = vmul.f32 %v2745, %v2731
        %v2760 = vmul.f32 %v2745, %v2736
        %v2761 = vmul.f32 %v2745, %v2741
        %v2762 = vsub.f32 1.0, %v2745
        %v2763 = vmul.f32 %v2762, %v2583
        %v2764 = vmul.f32 %v2762, %v2584
        %v2765 = vmul.f32 %v2762, %v2585
        %v2766 = vmul.f32 %v2762, %v2586
        %v2767 = vmul.f32 %v2762, %v2587
        %v2768 = vmul.f32 %v2762, %v2588
        %v2769 = vmul.f32 %v2762, %v2589
        %v2770 = vmul.f32 %v2762, %v2590
        %v2771 = vmul.f32 %v2762, %v2591
        %v2772 = vmul.f32 %v2762, %v2592
        %v2773 = vmul.f32 %v2762, %v2593
        %v2774 = vmul.f32 %v2762, %v2594
        %v2775 = vmul.f32 %v2762, %v2595
        %v2776 = vmul.f32 %v2762, %v2596
        %v2777 = vmul.f32 %v2762, %v2597
        %v2778 = vmul.f32 %v2762, %v2598
        %v2779 = vadd.f32 %v2746, %v2763
        %v2780 = vadd.f32 %v2747, %v2764
        %v2781 = vadd.f32 %v2748, %v2765
        %v2782 = vadd.f32 %v2749, %v2766
        %v2783 = vadd.f32 %v2750, %v2767
        %v2784 = vadd.f32 %v2751, %v2768
        %v2785 = vadd.f32 %v2752, %v2769
        %v2786 = vadd.f32 %v2753, %v2770
        %v2787 = vadd.f32 %v2754, %v2771
        %v2788 = vadd.f32 %v2755, %v2772
        %v2789 = vadd.f32 %v2756, %v2773
        %v2790 = vadd.f32 %v2757, %v2774
        %v2791 = vadd.f32 %v2758, %v2775
        %v2792 = vadd.f32 %v2759, %v2776
        %v2793 = vadd.f32 %v2760, %v2777
        %v2794 = vadd.f32 %v2761, %v2778
        %2795 = vmatprep.subr.mxu0 0.0
        %2796 = vmatpush1.msra.mxu0 %v2794
        %2797 = vmatprep.subr.mxu0 0.0
        %2798 = vmatpush1.msra.mxu0 %v2793
        %2799 = vmatprep.subr.mxu0 0.0
        %2800 = vmatpush1.msra.mxu0 %v2792
        %2801 = vmatprep.subr.mxu0 0.0
        %2802 = vmatpush1.msra.mxu0 %v2791
        %2803 = vmatprep.subr.mxu0 0.0
        %2804 = vmatpush1.msra.mxu0 %v2790
        %2805 = vmatprep.subr.mxu0 0.0
        %2806 = vmatpush1.msra.mxu0 %v2789
        %2807 = vmatprep.subr.mxu0 0.0
        %2808 = vmatpush1.msra.mxu0 %v2788
        %2809 = vmatprep.subr.mxu0 0.0
        %2810 = vmatpush1.msra.mxu0 %v2787
        %2811 = vmatprep.subr.mxu0 0.0
        %2812 = vmatpush1.msra.mxu0 %v2786
        %2813 = vmatprep.subr.mxu0 0.0
        %2814 = vmatpush1.msra.mxu0 %v2785
        %2815 = vmatprep.subr.mxu0 0.0
        %2816 = vmatpush1.msra.mxu0 %v2784
        %2817 = vmatprep.subr.mxu0 0.0
        %2818 = vmatpush1.msra.mxu0 %v2783
        %2819 = vmatprep.subr.mxu0 0.0
        %2820 = vmatpush1.msra.mxu0 %v2782
        %2821 = vmatprep.subr.mxu0 0.0
        %2822 = vmatpush1.msra.mxu0 %v2781
        %2823 = vmatprep.subr.mxu0 0.0
        %2824 = vmatpush1.msra.mxu0 %v2780
        %2825 = vmatprep.subr.mxu0 0.0
        %2826 = vmatpush1.msra.mxu0 %v2779
        %2827 = vmatprep.subr.mxu0 0.0
        %2828 = vmatpush2.msra.mxu0 0.0
        %2829 = vmatprep.subr.mxu0 0.0
        %2830 = vmatpush2.msra.mxu0 0.0
        %2831 = vmatprep.subr.mxu0 0.0
        %2832 = vmatpush2.msra.mxu0 0.0
        %2833 = vmatprep.subr.mxu0 0.0
        %2834 = vmatpush2.msra.mxu0 0.0
        %2835 = vmatprep.subr.mxu0 0.0
        %2836 = vmatpush2.msra.mxu0 0.0
        %2837 = vmatprep.subr.mxu0 0.0
        %2838 = vmatpush2.msra.mxu0 0.0
        %2839 = vmatprep.subr.mxu0 0.0
        %2840 = vmatpush2.msra.mxu0 0.0
        %2841 = vmatprep.subr.mxu0 0.0
        %2842 = vmatpush2.msra.mxu0 0.0
        %2843 = vmatprep.subr.mxu0 0.0
        %2844 = vmatpush2.msra.mxu0 0.0
        %2845 = vmatprep.subr.mxu0 0.0
        %2846 = vmatpush2.msra.mxu0 0.0
        %2847 = vmatprep.subr.mxu0 0.0
        %2848 = vmatpush2.msra.mxu0 0.0
        %2849 = vmatprep.subr.mxu0 0.0
        %2850 = vmatpush2.msra.mxu0 0.0
        %2851 = vmatprep.subr.mxu0 0.0
        %2852 = vmatpush2.msra.mxu0 0.0
        %2853 = vmatprep.subr.mxu0 0.0
        %2854 = vmatpush2.msra.mxu0 0.0
        %2855 = vmatprep.subr.mxu0 0.0
        %2856 = vmatpush2.msra.mxu0 0.0
        %2857 = vmatprep.subr.mxu0 0.0
        %2858 = vmatpush2.msra.mxu0 0.0
        %2859 = vmatprep.mubr.f32.mxu0 0.0
        %2860 = vmatmul.mubr.f32.gmra.mxu0 %v2779
        %v2861 = vpop.f32.mrf.mxu0
        %v2862 = vadd.f32 0.0, %v2861
        %v2863 = vpop.f32.mrf.mxu0
        %2864 = vmatprep.mubr.f32.mxu0 0.0
        %2865 = vmatmul.mubr.f32.gmra.mxu0 %v2780
        %v2866 = vpop.f32.mrf.mxu0
        %v2867 = vadd.f32 0.0, %v2866
        %v2868 = vpop.f32.mrf.mxu0
        %2869 = vmatprep.mubr.f32.mxu0 0.0
        %2870 = vmatmul.mubr.f32.gmra.mxu0 %v2781
        %v2871 = vpop.f32.mrf.mxu0
        %v2872 = vadd.f32 0.0, %v2871
        %v2873 = vpop.f32.mrf.mxu0
        %2874 = vmatprep.mubr.f32.mxu0 0.0
        %2875 = vmatmul.mubr.f32.gmra.mxu0 %v2782
        %v2876 = vpop.f32.mrf.mxu0
        %v2877 = vadd.f32 0.0, %v2876
        %v2878 = vpop.f32.mrf.mxu0
        %2879 = vmatprep.mubr.f32.mxu0 0.0
        %2880 = vmatmul.mubr.f32.gmra.mxu0 %v2783
        %v2881 = vpop.f32.mrf.mxu0
        %v2882 = vadd.f32 0.0, %v2881
        %v2883 = vpop.f32.mrf.mxu0
        %2884 = vmatprep.mubr.f32.mxu0 0.0
        %2885 = vmatmul.mubr.f32.gmra.mxu0 %v2784
        %v2886 = vpop.f32.mrf.mxu0
        %v2887 = vadd.f32 0.0, %v2886
        %v2888 = vpop.f32.mrf.mxu0
        %2889 = vmatprep.mubr.f32.mxu0 0.0
        %2890 = vmatmul.mubr.f32.gmra.mxu0 %v2785
        %v2891 = vpop.f32.mrf.mxu0
        %v2892 = vadd.f32 0.0, %v2891
        %v2893 = vpop.f32.mrf.mxu0
        %2894 = vmatprep.mubr.f32.mxu0 0.0
        %2895 = vmatmul.mubr.f32.gmra.mxu0 %v2786
        %v2896 = vpop.f32.mrf.mxu0
        %v2897 = vadd.f32 0.0, %v2896
        %v2898 = vpop.f32.mrf.mxu0
        %2899 = vmatprep.mubr.f32.mxu0 0.0
        %2900 = vmatmul.mubr.f32.gmra.mxu0 %v2787
        %v2901 = vpop.f32.mrf.mxu0
        %v2902 = vadd.f32 0.0, %v2901
        %v2903 = vpop.f32.mrf.mxu0
        %2904 = vmatprep.mubr.f32.mxu0 0.0
        %2905 = vmatmul.mubr.f32.gmra.mxu0 %v2788
        %v2906 = vpop.f32.mrf.mxu0
        %v2907 = vadd.f32 0.0, %v2906
        %v2908 = vpop.f32.mrf.mxu0
        %2909 = vmatprep.mubr.f32.mxu0 0.0
        %2910 = vmatmul.mubr.f32.gmra.mxu0 %v2789
        %v2911 = vpop.f32.mrf.mxu0
        %v2912 = vadd.f32 0.0, %v2911
        %v2913 = vpop.f32.mrf.mxu0
        %2914 = vmatprep.mubr.f32.mxu0 0.0
        %2915 = vmatmul.mubr.f32.gmra.mxu0 %v2790
        %v2916 = vpop.f32.mrf.mxu0
        %v2917 = vadd.f32 0.0, %v2916
        %v2918 = vpop.f32.mrf.mxu0
        %2919 = vmatprep.mubr.f32.mxu0 0.0
        %2920 = vmatmul.mubr.f32.gmra.mxu0 %v2791
        %v2921 = vpop.f32.mrf.mxu0
        %v2922 = vadd.f32 0.0, %v2921
        %v2923 = vpop.f32.mrf.mxu0
        %2924 = vmatprep.mubr.f32.mxu0 0.0
        %2925 = vmatmul.mubr.f32.gmra.mxu0 %v2792
        %v2926 = vpop.f32.mrf.mxu0
        %v2927 = vadd.f32 0.0, %v2926
        %v2928 = vpop.f32.mrf.mxu0
        %2929 = vmatprep.mubr.f32.mxu0 0.0
        %2930 = vmatmul.mubr.f32.gmra.mxu0 %v2793
        %v2931 = vpop.f32.mrf.mxu0
        %v2932 = vadd.f32 0.0, %v2931
        %v2933 = vpop.f32.mrf.mxu0
        %2934 = vmatprep.mubr.f32.mxu0 0.0
        %2935 = vmatmul.mubr.f32.gmra.mxu0 %v2794
        %v2936 = vpop.f32.mrf.mxu0
        %v2937 = vadd.f32 0.0, %v2936
        %v2938 = vpop.f32.mrf.mxu0
        %2939 = vdwg.mxu0
        %vm2940 = vcmp.lt.f32.partialorder 1.0, %v242
        %v2941 = vsel %vm2940, 1.0, 0.0
        %v2942 = vmul.f32 %v2941, %v2862
        %v2943 = vmul.f32 %v2941, %v2867
        %v2944 = vmul.f32 %v2941, %v2872
        %v2945 = vmul.f32 %v2941, %v2877
        %v2946 = vmul.f32 %v2941, %v2882
        %v2947 = vmul.f32 %v2941, %v2887
        %v2948 = vmul.f32 %v2941, %v2892
        %v2949 = vmul.f32 %v2941, %v2897
        %v2950 = vmul.f32 %v2941, %v2902
        %v2951 = vmul.f32 %v2941, %v2907
        %v2952 = vmul.f32 %v2941, %v2912
        %v2953 = vmul.f32 %v2941, %v2917
        %v2954 = vmul.f32 %v2941, %v2922
        %v2955 = vmul.f32 %v2941, %v2927
        %v2956 = vmul.f32 %v2941, %v2932
        %v2957 = vmul.f32 %v2941, %v2937
        %v2958 = vsub.f32 1.0, %v2941
        %v2959 = vmul.f32 %v2958, %v2779
        %v2960 = vmul.f32 %v2958, %v2780
        %v2961 = vmul.f32 %v2958, %v2781
        %v2962 = vmul.f32 %v2958, %v2782
        %v2963 = vmul.f32 %v2958, %v2783
        %v2964 = vmul.f32 %v2958, %v2784
        %v2965 = vmul.f32 %v2958, %v2785
        %v2966 = vmul.f32 %v2958, %v2786
        %v2967 = vmul.f32 %v2958, %v2787
        %v2968 = vmul.f32 %v2958, %v2788
        %v2969 = vmul.f32 %v2958, %v2789
        %v2970 = vmul.f32 %v2958, %v2790
        %v2971 = vmul.f32 %v2958, %v2791
        %v2972 = vmul.f32 %v2958, %v2792
        %v2973 = vmul.f32 %v2958, %v2793
        %v2974 = vmul.f32 %v2958, %v2794
        %v2975 = vadd.f32 %v2942, %v2959
        %v2976 = vadd.f32 %v2943, %v2960
        %v2977 = vadd.f32 %v2944, %v2961
        %v2978 = vadd.f32 %v2945, %v2962
        %v2979 = vadd.f32 %v2946, %v2963
        %v2980 = vadd.f32 %v2947, %v2964
        %v2981 = vadd.f32 %v2948, %v2965
        %v2982 = vadd.f32 %v2949, %v2966
        %v2983 = vadd.f32 %v2950, %v2967
        %v2984 = vadd.f32 %v2951, %v2968
        %v2985 = vadd.f32 %v2952, %v2969
        %v2986 = vadd.f32 %v2953, %v2970
        %v2987 = vadd.f32 %v2954, %v2971
        %v2988 = vadd.f32 %v2955, %v2972
        %v2989 = vadd.f32 %v2956, %v2973
        %v2990 = vadd.f32 %v2957, %v2974
        %2991 = vmatprep.subr.mxu0 0.0
        %2992 = vmatpush1.msra.mxu0 %v2990
        %2993 = vmatprep.subr.mxu0 0.0
        %2994 = vmatpush1.msra.mxu0 %v2989
        %2995 = vmatprep.subr.mxu0 0.0
        %2996 = vmatpush1.msra.mxu0 %v2988
        %2997 = vmatprep.subr.mxu0 0.0
        %2998 = vmatpush1.msra.mxu0 %v2987
        %2999 = vmatprep.subr.mxu0 0.0
        %3000 = vmatpush1.msra.mxu0 %v2986
        %3001 = vmatprep.subr.mxu0 0.0
        %3002 = vmatpush1.msra.mxu0 %v2985
        %3003 = vmatprep.subr.mxu0 0.0
        %3004 = vmatpush1.msra.mxu0 %v2984
        %3005 = vmatprep.subr.mxu0 0.0
        %3006 = vmatpush1.msra.mxu0 %v2983
        %3007 = vmatprep.subr.mxu0 0.0
        %3008 = vmatpush1.msra.mxu0 %v2982
        %3009 = vmatprep.subr.mxu0 0.0
        %3010 = vmatpush1.msra.mxu0 %v2981
        %3011 = vmatprep.subr.mxu0 0.0
        %3012 = vmatpush1.msra.mxu0 %v2980
        %3013 = vmatprep.subr.mxu0 0.0
        %3014 = vmatpush1.msra.mxu0 %v2979
        %3015 = vmatprep.subr.mxu0 0.0
        %3016 = vmatpush1.msra.mxu0 %v2978
        %3017 = vmatprep.subr.mxu0 0.0
        %3018 = vmatpush1.msra.mxu0 %v2977
        %3019 = vmatprep.subr.mxu0 0.0
        %3020 = vmatpush1.msra.mxu0 %v2976
        %3021 = vmatprep.subr.mxu0 0.0
        %3022 = vmatpush1.msra.mxu0 %v2975
        %3023 = vmatprep.subr.mxu0 0.0
        %3024 = vmatpush2.msra.mxu0 0.0
        %3025 = vmatprep.subr.mxu0 0.0
        %3026 = vmatpush2.msra.mxu0 0.0
        %3027 = vmatprep.subr.mxu0 0.0
        %3028 = vmatpush2.msra.mxu0 0.0
        %3029 = vmatprep.subr.mxu0 0.0
        %3030 = vmatpush2.msra.mxu0 0.0
        %3031 = vmatprep.subr.mxu0 0.0
        %3032 = vmatpush2.msra.mxu0 0.0
        %3033 = vmatprep.subr.mxu0 0.0
        %3034 = vmatpush2.msra.mxu0 0.0
        %3035 = vmatprep.subr.mxu0 0.0
        %3036 = vmatpush2.msra.mxu0 0.0
        %3037 = vmatprep.subr.mxu0 0.0
        %3038 = vmatpush2.msra.mxu0 0.0
        %3039 = vmatprep.subr.mxu0 0.0
        %3040 = vmatpush2.msra.mxu0 0.0
        %3041 = vmatprep.subr.mxu0 0.0
        %3042 = vmatpush2.msra.mxu0 0.0
        %3043 = vmatprep.subr.mxu0 0.0
        %3044 = vmatpush2.msra.mxu0 0.0
        %3045 = vmatprep.subr.mxu0 0.0
        %3046 = vmatpush2.msra.mxu0 0.0
        %3047 = vmatprep.subr.mxu0 0.0
        %3048 = vmatpush2.msra.mxu0 0.0
        %3049 = vmatprep.subr.mxu0 0.0
        %3050 = vmatpush2.msra.mxu0 0.0
        %3051 = vmatprep.subr.mxu0 0.0
        %3052 = vmatpush2.msra.mxu0 0.0
        %3053 = vmatprep.subr.mxu0 0.0
        %3054 = vmatpush2.msra.mxu0 0.0
        %3055 = vmatprep.mubr.f32.mxu0 0.0
        %3056 = vmatmul.mubr.f32.gmra.mxu0 %v2975
        %v3057 = vpop.f32.mrf.mxu0
        %v3058 = vadd.f32 0.0, %v3057
        %v3059 = vpop.f32.mrf.mxu0
        %3060 = vmatprep.mubr.f32.mxu0 0.0
        %3061 = vmatmul.mubr.f32.gmra.mxu0 %v2976
        %v3062 = vpop.f32.mrf.mxu0
        %v3063 = vadd.f32 0.0, %v3062
        %v3064 = vpop.f32.mrf.mxu0
        %3065 = vmatprep.mubr.f32.mxu0 0.0
        %3066 = vmatmul.mubr.f32.gmra.mxu0 %v2977
        %v3067 = vpop.f32.mrf.mxu0
        %v3068 = vadd.f32 0.0, %v3067
        %v3069 = vpop.f32.mrf.mxu0
        %3070 = vmatprep.mubr.f32.mxu0 0.0
        %3071 = vmatmul.mubr.f32.gmra.mxu0 %v2978
        %v3072 = vpop.f32.mrf.mxu0
        %v3073 = vadd.f32 0.0, %v3072
        %v3074 = vpop.f32.mrf.mxu0
        %3075 = vmatprep.mubr.f32.mxu0 0.0
        %3076 = vmatmul.mubr.f32.gmra.mxu0 %v2979
        %v3077 = vpop.f32.mrf.mxu0
        %v3078 = vadd.f32 0.0, %v3077
        %v3079 = vpop.f32.mrf.mxu0
        %3080 = vmatprep.mubr.f32.mxu0 0.0
        %3081 = vmatmul.mubr.f32.gmra.mxu0 %v2980
        %v3082 = vpop.f32.mrf.mxu0
        %v3083 = vadd.f32 0.0, %v3082
        %v3084 = vpop.f32.mrf.mxu0
        %3085 = vmatprep.mubr.f32.mxu0 0.0
        %3086 = vmatmul.mubr.f32.gmra.mxu0 %v2981
        %v3087 = vpop.f32.mrf.mxu0
        %v3088 = vadd.f32 0.0, %v3087
        %v3089 = vpop.f32.mrf.mxu0
        %3090 = vmatprep.mubr.f32.mxu0 0.0
        %3091 = vmatmul.mubr.f32.gmra.mxu0 %v2982
        %v3092 = vpop.f32.mrf.mxu0
        %v3093 = vadd.f32 0.0, %v3092
        %v3094 = vpop.f32.mrf.mxu0
        %3095 = vmatprep.mubr.f32.mxu0 0.0
        %3096 = vmatmul.mubr.f32.gmra.mxu0 %v2983
        %v3097 = vpop.f32.mrf.mxu0
        %v3098 = vadd.f32 0.0, %v3097
        %v3099 = vpop.f32.mrf.mxu0
        %3100 = vmatprep.mubr.f32.mxu0 0.0
        %3101 = vmatmul.mubr.f32.gmra.mxu0 %v2984
        %v3102 = vpop.f32.mrf.mxu0
        %v3103 = vadd.f32 0.0, %v3102
        %v3104 = vpop.f32.mrf.mxu0
        %3105 = vmatprep.mubr.f32.mxu0 0.0
        %3106 = vmatmul.mubr.f32.gmra.mxu0 %v2985
        %v3107 = vpop.f32.mrf.mxu0
        %v3108 = vadd.f32 0.0, %v3107
        %v3109 = vpop.f32.mrf.mxu0
        %3110 = vmatprep.mubr.f32.mxu0 0.0
        %3111 = vmatmul.mubr.f32.gmra.mxu0 %v2986
        %v3112 = vpop.f32.mrf.mxu0
        %v3113 = vadd.f32 0.0, %v3112
        %v3114 = vpop.f32.mrf.mxu0
        %3115 = vmatprep.mubr.f32.mxu0 0.0
        %3116 = vmatmul.mubr.f32.gmra.mxu0 %v2987
        %v3117 = vpop.f32.mrf.mxu0
        %v3118 = vadd.f32 0.0, %v3117
        %v3119 = vpop.f32.mrf.mxu0
        %3120 = vmatprep.mubr.f32.mxu0 0.0
        %3121 = vmatmul.mubr.f32.gmra.mxu0 %v2988
        %v3122 = vpop.f32.mrf.mxu0
        %v3123 = vadd.f32 0.0, %v3122
        %v3124 = vpop.f32.mrf.mxu0
        %3125 = vmatprep.mubr.f32.mxu0 0.0
        %3126 = vmatmul.mubr.f32.gmra.mxu0 %v2989
        %v3127 = vpop.f32.mrf.mxu0
        %v3128 = vadd.f32 0.0, %v3127
        %v3129 = vpop.f32.mrf.mxu0
        %3130 = vmatprep.mubr.f32.mxu0 0.0
        %3131 = vmatmul.mubr.f32.gmra.mxu0 %v2990
        %v3132 = vpop.f32.mrf.mxu0
        %v3133 = vadd.f32 0.0, %v3132
        %v3134 = vpop.f32.mrf.mxu0
        %3135 = vdwg.mxu0
        %vm3136 = vcmp.lt.f32.partialorder 2.0, %v242
        %v3137 = vsel %vm3136, 1.0, 0.0
        %v3138 = vmul.f32 %v3137, %v3058
        %v3139 = vmul.f32 %v3137, %v3063
        %v3140 = vmul.f32 %v3137, %v3068
        %v3141 = vmul.f32 %v3137, %v3073
        %v3142 = vmul.f32 %v3137, %v3078
        %v3143 = vmul.f32 %v3137, %v3083
        %v3144 = vmul.f32 %v3137, %v3088
        %v3145 = vmul.f32 %v3137, %v3093
        %v3146 = vmul.f32 %v3137, %v3098
        %v3147 = vmul.f32 %v3137, %v3103
        %v3148 = vmul.f32 %v3137, %v3108
        %v3149 = vmul.f32 %v3137, %v3113
        %v3150 = vmul.f32 %v3137, %v3118
        %v3151 = vmul.f32 %v3137, %v3123
        %v3152 = vmul.f32 %v3137, %v3128
        %v3153 = vmul.f32 %v3137, %v3133
        %v3154 = vsub.f32 1.0, %v3137
        %v3155 = vmul.f32 %v3154, %v2975
        %v3156 = vmul.f32 %v3154, %v2976
        %v3157 = vmul.f32 %v3154, %v2977
        %v3158 = vmul.f32 %v3154, %v2978
        %v3159 = vmul.f32 %v3154, %v2979
        %v3160 = vmul.f32 %v3154, %v2980
        %v3161 = vmul.f32 %v3154, %v2981
        %v3162 = vmul.f32 %v3154, %v2982
        %v3163 = vmul.f32 %v3154, %v2983
        %v3164 = vmul.f32 %v3154, %v2984
        %v3165 = vmul.f32 %v3154, %v2985
        %v3166 = vmul.f32 %v3154, %v2986
        %v3167 = vmul.f32 %v3154, %v2987
        %v3168 = vmul.f32 %v3154, %v2988
        %v3169 = vmul.f32 %v3154, %v2989
        %v3170 = vmul.f32 %v3154, %v2990
        %v3171 = vadd.f32 %v3138, %v3155
        %v3172 = vadd.f32 %v3139, %v3156
        %v3173 = vadd.f32 %v3140, %v3157
        %v3174 = vadd.f32 %v3141, %v3158
        %v3175 = vadd.f32 %v3142, %v3159
        %v3176 = vadd.f32 %v3143, %v3160
        %v3177 = vadd.f32 %v3144, %v3161
        %v3178 = vadd.f32 %v3145, %v3162
        %v3179 = vadd.f32 %v3146, %v3163
        %v3180 = vadd.f32 %v3147, %v3164
        %v3181 = vadd.f32 %v3148, %v3165
        %v3182 = vadd.f32 %v3149, %v3166
        %v3183 = vadd.f32 %v3150, %v3167
        %v3184 = vadd.f32 %v3151, %v3168
        %v3185 = vadd.f32 %v3152, %v3169
        %v3186 = vadd.f32 %v3153, %v3170
        %3187 = vmatprep.subr.mxu0 0.0
        %3188 = vmatpush1.msra.mxu0 %v3186
        %3189 = vmatprep.subr.mxu0 0.0
        %3190 = vmatpush1.msra.mxu0 %v3185
        %3191 = vmatprep.subr.mxu0 0.0
        %3192 = vmatpush1.msra.mxu0 %v3184
        %3193 = vmatprep.subr.mxu0 0.0
        %3194 = vmatpush1.msra.mxu0 %v3183
        %3195 = vmatprep.subr.mxu0 0.0
        %3196 = vmatpush1.msra.mxu0 %v3182
        %3197 = vmatprep.subr.mxu0 0.0
        %3198 = vmatpush1.msra.mxu0 %v3181
        %3199 = vmatprep.subr.mxu0 0.0
        %3200 = vmatpush1.msra.mxu0 %v3180
        %3201 = vmatprep.subr.mxu0 0.0
        %3202 = vmatpush1.msra.mxu0 %v3179
        %3203 = vmatprep.subr.mxu0 0.0
        %3204 = vmatpush1.msra.mxu0 %v3178
        %3205 = vmatprep.subr.mxu0 0.0
        %3206 = vmatpush1.msra.mxu0 %v3177
        %3207 = vmatprep.subr.mxu0 0.0
        %3208 = vmatpush1.msra.mxu0 %v3176
        %3209 = vmatprep.subr.mxu0 0.0
        %3210 = vmatpush1.msra.mxu0 %v3175
        %3211 = vmatprep.subr.mxu0 0.0
        %3212 = vmatpush1.msra.mxu0 %v3174
        %3213 = vmatprep.subr.mxu0 0.0
        %3214 = vmatpush1.msra.mxu0 %v3173
        %3215 = vmatprep.subr.mxu0 0.0
        %3216 = vmatpush1.msra.mxu0 %v3172
        %3217 = vmatprep.subr.mxu0 0.0
        %3218 = vmatpush1.msra.mxu0 %v3171
        %3219 = vmatprep.subr.mxu0 0.0
        %3220 = vmatpush2.msra.mxu0 0.0
        %3221 = vmatprep.subr.mxu0 0.0
        %3222 = vmatpush2.msra.mxu0 0.0
        %3223 = vmatprep.subr.mxu0 0.0
        %3224 = vmatpush2.msra.mxu0 0.0
        %3225 = vmatprep.subr.mxu0 0.0
        %3226 = vmatpush2.msra.mxu0 0.0
        %3227 = vmatprep.subr.mxu0 0.0
        %3228 = vmatpush2.msra.mxu0 0.0
        %3229 = vmatprep.subr.mxu0 0.0
        %3230 = vmatpush2.msra.mxu0 0.0
        %3231 = vmatprep.subr.mxu0 0.0
        %3232 = vmatpush2.msra.mxu0 0.0
        %3233 = vmatprep.subr.mxu0 0.0
        %3234 = vmatpush2.msra.mxu0 0.0
        %3235 = vmatprep.subr.mxu0 0.0
        %3236 = vmatpush2.msra.mxu0 0.0
        %3237 = vmatprep.subr.mxu0 0.0
        %3238 = vmatpush2.msra.mxu0 0.0
        %3239 = vmatprep.subr.mxu0 0.0
        %3240 = vmatpush2.msra.mxu0 0.0
        %3241 = vmatprep.subr.mxu0 0.0
        %3242 = vmatpush2.msra.mxu0 0.0
        %3243 = vmatprep.subr.mxu0 0.0
        %3244 = vmatpush2.msra.mxu0 0.0
        %3245 = vmatprep.subr.mxu0 0.0
        %3246 = vmatpush2.msra.mxu0 0.0
        %3247 = vmatprep.subr.mxu0 0.0
        %3248 = vmatpush2.msra.mxu0 0.0
        %3249 = vmatprep.subr.mxu0 0.0
        %3250 = vmatpush2.msra.mxu0 0.0
        %3251 = vmatprep.mubr.f32.mxu0 0.0
        %3252 = vmatmul.mubr.f32.gmra.mxu0 %v3171
        %v3253 = vpop.f32.mrf.mxu0
        %v3254 = vadd.f32 0.0, %v3253
        %v3255 = vpop.f32.mrf.mxu0
        %3256 = vmatprep.mubr.f32.mxu0 0.0
        %3257 = vmatmul.mubr.f32.gmra.mxu0 %v3172
        %v3258 = vpop.f32.mrf.mxu0
        %v3259 = vadd.f32 0.0, %v3258
        %v3260 = vpop.f32.mrf.mxu0
        %3261 = vmatprep.mubr.f32.mxu0 0.0
        %3262 = vmatmul.mubr.f32.gmra.mxu0 %v3173
        %v3263 = vpop.f32.mrf.mxu0
        %v3264 = vadd.f32 0.0, %v3263
        %v3265 = vpop.f32.mrf.mxu0
        %3266 = vmatprep.mubr.f32.mxu0 0.0
        %3267 = vmatmul.mubr.f32.gmra.mxu0 %v3174
        %v3268 = vpop.f32.mrf.mxu0
        %v3269 = vadd.f32 0.0, %v3268
        %v3270 = vpop.f32.mrf.mxu0
        %3271 = vmatprep.mubr.f32.mxu0 0.0
        %3272 = vmatmul.mubr.f32.gmra.mxu0 %v3175
        %v3273 = vpop.f32.mrf.mxu0
        %v3274 = vadd.f32 0.0, %v3273
        %v3275 = vpop.f32.mrf.mxu0
        %3276 = vmatprep.mubr.f32.mxu0 0.0
        %3277 = vmatmul.mubr.f32.gmra.mxu0 %v3176
        %v3278 = vpop.f32.mrf.mxu0
        %v3279 = vadd.f32 0.0, %v3278
        %v3280 = vpop.f32.mrf.mxu0
        %3281 = vmatprep.mubr.f32.mxu0 0.0
        %3282 = vmatmul.mubr.f32.gmra.mxu0 %v3177
        %v3283 = vpop.f32.mrf.mxu0
        %v3284 = vadd.f32 0.0, %v3283
        %v3285 = vpop.f32.mrf.mxu0
        %3286 = vmatprep.mubr.f32.mxu0 0.0
        %3287 = vmatmul.mubr.f32.gmra.mxu0 %v3178
        %v3288 = vpop.f32.mrf.mxu0
        %v3289 = vadd.f32 0.0, %v3288
        %v3290 = vpop.f32.mrf.mxu0
        %3291 = vmatprep.mubr.f32.mxu0 0.0
        %3292 = vmatmul.mubr.f32.gmra.mxu0 %v3179
        %v3293 = vpop.f32.mrf.mxu0
        %v3294 = vadd.f32 0.0, %v3293
        %v3295 = vpop.f32.mrf.mxu0
        %3296 = vmatprep.mubr.f32.mxu0 0.0
        %3297 = vmatmul.mubr.f32.gmra.mxu0 %v3180
        %v3298 = vpop.f32.mrf.mxu0
        %v3299 = vadd.f32 0.0, %v3298
        %v3300 = vpop.f32.mrf.mxu0
        %3301 = vmatprep.mubr.f32.mxu0 0.0
        %3302 = vmatmul.mubr.f32.gmra.mxu0 %v3181
        %v3303 = vpop.f32.mrf.mxu0
        %v3304 = vadd.f32 0.0, %v3303
        %v3305 = vpop.f32.mrf.mxu0
        %3306 = vmatprep.mubr.f32.mxu0 0.0
        %3307 = vmatmul.mubr.f32.gmra.mxu0 %v3182
        %v3308 = vpop.f32.mrf.mxu0
        %v3309 = vadd.f32 0.0, %v3308
        %v3310 = vpop.f32.mrf.mxu0
        %3311 = vmatprep.mubr.f32.mxu0 0.0
        %3312 = vmatmul.mubr.f32.gmra.mxu0 %v3183
        %v3313 = vpop.f32.mrf.mxu0
        %v3314 = vadd.f32 0.0, %v3313
        %v3315 = vpop.f32.mrf.mxu0
        %3316 = vmatprep.mubr.f32.mxu0 0.0
        %3317 = vmatmul.mubr.f32.gmra.mxu0 %v3184
        %v3318 = vpop.f32.mrf.mxu0
        %v3319 = vadd.f32 0.0, %v3318
        %v3320 = vpop.f32.mrf.mxu0
        %3321 = vmatprep.mubr.f32.mxu0 0.0
        %3322 = vmatmul.mubr.f32.gmra.mxu0 %v3185
        %v3323 = vpop.f32.mrf.mxu0
        %v3324 = vadd.f32 0.0, %v3323
        %v3325 = vpop.f32.mrf.mxu0
        %3326 = vmatprep.mubr.f32.mxu0 0.0
        %3327 = vmatmul.mubr.f32.gmra.mxu0 %v3186
        %v3328 = vpop.f32.mrf.mxu0
        %v3329 = vadd.f32 0.0, %v3328
        %v3330 = vpop.f32.mrf.mxu0
        %3331 = vdwg.mxu0
        %vm3332 = vcmp.lt.f32.partialorder 3.0, %v242
        %v3333 = vsel %vm3332, 1.0, 0.0
        %v3334 = vmul.f32 %v3333, %v3254
        %v3335 = vmul.f32 %v3333, %v3259
        %v3336 = vmul.f32 %v3333, %v3264
        %v3337 = vmul.f32 %v3333, %v3269
        %v3338 = vmul.f32 %v3333, %v3274
        %v3339 = vmul.f32 %v3333, %v3279
        %v3340 = vmul.f32 %v3333, %v3284
        %v3341 = vmul.f32 %v3333, %v3289
        %v3342 = vmul.f32 %v3333, %v3294
        %v3343 = vmul.f32 %v3333, %v3299
        %v3344 = vmul.f32 %v3333, %v3304
        %v3345 = vmul.f32 %v3333, %v3309
        %v3346 = vmul.f32 %v3333, %v3314
        %v3347 = vmul.f32 %v3333, %v3319
        %v3348 = vmul.f32 %v3333, %v3324
        %v3349 = vmul.f32 %v3333, %v3329
        %v3350 = vsub.f32 1.0, %v3333
        %v3351 = vmul.f32 %v3350, %v3171
        %v3352 = vmul.f32 %v3350, %v3172
        %v3353 = vmul.f32 %v3350, %v3173
        %v3354 = vmul.f32 %v3350, %v3174
        %v3355 = vmul.f32 %v3350, %v3175
        %v3356 = vmul.f32 %v3350, %v3176
        %v3357 = vmul.f32 %v3350, %v3177
        %v3358 = vmul.f32 %v3350, %v3178
        %v3359 = vmul.f32 %v3350, %v3179
        %v3360 = vmul.f32 %v3350, %v3180
        %v3361 = vmul.f32 %v3350, %v3181
        %v3362 = vmul.f32 %v3350, %v3182
        %v3363 = vmul.f32 %v3350, %v3183
        %v3364 = vmul.f32 %v3350, %v3184
        %v3365 = vmul.f32 %v3350, %v3185
        %v3366 = vmul.f32 %v3350, %v3186
        %v3367 = vadd.f32 %v3334, %v3351
        %v3368 = vadd.f32 %v3335, %v3352
        %v3369 = vadd.f32 %v3336, %v3353
        %v3370 = vadd.f32 %v3337, %v3354
        %v3371 = vadd.f32 %v3338, %v3355
        %v3372 = vadd.f32 %v3339, %v3356
        %v3373 = vadd.f32 %v3340, %v3357
        %v3374 = vadd.f32 %v3341, %v3358
        %v3375 = vadd.f32 %v3342, %v3359
        %v3376 = vadd.f32 %v3343, %v3360
        %v3377 = vadd.f32 %v3344, %v3361
        %v3378 = vadd.f32 %v3345, %v3362
        %v3379 = vadd.f32 %v3346, %v3363
        %v3380 = vadd.f32 %v3347, %v3364
        %v3381 = vadd.f32 %v3348, %v3365
        %v3382 = vadd.f32 %v3349, %v3366
        %3383 = vmatprep.subr.mxu0 0.0
        %3384 = vmatpush1.msra.mxu0 %v3382
        %3385 = vmatprep.subr.mxu0 0.0
        %3386 = vmatpush1.msra.mxu0 %v3381
        %3387 = vmatprep.subr.mxu0 0.0
        %3388 = vmatpush1.msra.mxu0 %v3380
        %3389 = vmatprep.subr.mxu0 0.0
        %3390 = vmatpush1.msra.mxu0 %v3379
        %3391 = vmatprep.subr.mxu0 0.0
        %3392 = vmatpush1.msra.mxu0 %v3378
        %3393 = vmatprep.subr.mxu0 0.0
        %3394 = vmatpush1.msra.mxu0 %v3377
        %3395 = vmatprep.subr.mxu0 0.0
        %3396 = vmatpush1.msra.mxu0 %v3376
        %3397 = vmatprep.subr.mxu0 0.0
        %3398 = vmatpush1.msra.mxu0 %v3375
        %3399 = vmatprep.subr.mxu0 0.0
        %3400 = vmatpush1.msra.mxu0 %v3374
        %3401 = vmatprep.subr.mxu0 0.0
        %3402 = vmatpush1.msra.mxu0 %v3373
        %3403 = vmatprep.subr.mxu0 0.0
        %3404 = vmatpush1.msra.mxu0 %v3372
        %3405 = vmatprep.subr.mxu0 0.0
        %3406 = vmatpush1.msra.mxu0 %v3371
        %3407 = vmatprep.subr.mxu0 0.0
        %3408 = vmatpush1.msra.mxu0 %v3370
        %3409 = vmatprep.subr.mxu0 0.0
        %3410 = vmatpush1.msra.mxu0 %v3369
        %3411 = vmatprep.subr.mxu0 0.0
        %3412 = vmatpush1.msra.mxu0 %v3368
        %3413 = vmatprep.subr.mxu0 0.0
        %3414 = vmatpush1.msra.mxu0 %v3367
        %3415 = vmatprep.subr.mxu0 0.0
        %3416 = vmatpush2.msra.mxu0 0.0
        %3417 = vmatprep.subr.mxu0 0.0
        %3418 = vmatpush2.msra.mxu0 0.0
        %3419 = vmatprep.subr.mxu0 0.0
        %3420 = vmatpush2.msra.mxu0 0.0
        %3421 = vmatprep.subr.mxu0 0.0
        %3422 = vmatpush2.msra.mxu0 0.0
        %3423 = vmatprep.subr.mxu0 0.0
        %3424 = vmatpush2.msra.mxu0 0.0
        %3425 = vmatprep.subr.mxu0 0.0
        %3426 = vmatpush2.msra.mxu0 0.0
        %3427 = vmatprep.subr.mxu0 0.0
        %3428 = vmatpush2.msra.mxu0 0.0
        %3429 = vmatprep.subr.mxu0 0.0
        %3430 = vmatpush2.msra.mxu0 0.0
        %3431 = vmatprep.subr.mxu0 0.0
        %3432 = vmatpush2.msra.mxu0 0.0
        %3433 = vmatprep.subr.mxu0 0.0
        %3434 = vmatpush2.msra.mxu0 0.0
        %3435 = vmatprep.subr.mxu0 0.0
        %3436 = vmatpush2.msra.mxu0 0.0
        %3437 = vmatprep.subr.mxu0 0.0
        %3438 = vmatpush2.msra.mxu0 0.0
        %3439 = vmatprep.subr.mxu0 0.0
        %3440 = vmatpush2.msra.mxu0 0.0
        %3441 = vmatprep.subr.mxu0 0.0
        %3442 = vmatpush2.msra.mxu0 0.0
        %3443 = vmatprep.subr.mxu0 0.0
        %3444 = vmatpush2.msra.mxu0 0.0
        %3445 = vmatprep.subr.mxu0 0.0
        %3446 = vmatpush2.msra.mxu0 0.0
        %3447 = vmatprep.mubr.f32.mxu0 0.0
        %3448 = vmatmul.mubr.f32.gmra.mxu0 %v3367
        %v3449 = vpop.f32.mrf.mxu0
        %v3450 = vadd.f32 0.0, %v3449
        %v3451 = vpop.f32.mrf.mxu0
        %3452 = vmatprep.mubr.f32.mxu0 0.0
        %3453 = vmatmul.mubr.f32.gmra.mxu0 %v3368
        %v3454 = vpop.f32.mrf.mxu0
        %v3455 = vadd.f32 0.0, %v3454
        %v3456 = vpop.f32.mrf.mxu0
        %3457 = vmatprep.mubr.f32.mxu0 0.0
        %3458 = vmatmul.mubr.f32.gmra.mxu0 %v3369
        %v3459 = vpop.f32.mrf.mxu0
        %v3460 = vadd.f32 0.0, %v3459
        %v3461 = vpop.f32.mrf.mxu0
        %3462 = vmatprep.mubr.f32.mxu0 0.0
        %3463 = vmatmul.mubr.f32.gmra.mxu0 %v3370
        %v3464 = vpop.f32.mrf.mxu0
        %v3465 = vadd.f32 0.0, %v3464
        %v3466 = vpop.f32.mrf.mxu0
        %3467 = vmatprep.mubr.f32.mxu0 0.0
        %3468 = vmatmul.mubr.f32.gmra.mxu0 %v3371
        %v3469 = vpop.f32.mrf.mxu0
        %v3470 = vadd.f32 0.0, %v3469
        %v3471 = vpop.f32.mrf.mxu0
        %3472 = vmatprep.mubr.f32.mxu0 0.0
        %3473 = vmatmul.mubr.f32.gmra.mxu0 %v3372
        %v3474 = vpop.f32.mrf.mxu0
        %v3475 = vadd.f32 0.0, %v3474
        %v3476 = vpop.f32.mrf.mxu0
        %3477 = vmatprep.mubr.f32.mxu0 0.0
        %3478 = vmatmul.mubr.f32.gmra.mxu0 %v3373
        %v3479 = vpop.f32.mrf.mxu0
        %v3480 = vadd.f32 0.0, %v3479
        %v3481 = vpop.f32.mrf.mxu0
        %3482 = vmatprep.mubr.f32.mxu0 0.0
        %3483 = vmatmul.mubr.f32.gmra.mxu0 %v3374
        %v3484 = vpop.f32.mrf.mxu0
        %v3485 = vadd.f32 0.0, %v3484
        %v3486 = vpop.f32.mrf.mxu0
        %3487 = vmatprep.mubr.f32.mxu0 0.0
        %3488 = vmatmul.mubr.f32.gmra.mxu0 %v3375
        %v3489 = vpop.f32.mrf.mxu0
        %v3490 = vadd.f32 0.0, %v3489
        %v3491 = vpop.f32.mrf.mxu0
        %3492 = vmatprep.mubr.f32.mxu0 0.0
        %3493 = vmatmul.mubr.f32.gmra.mxu0 %v3376
        %v3494 = vpop.f32.mrf.mxu0
        %v3495 = vadd.f32 0.0, %v3494
        %v3496 = vpop.f32.mrf.mxu0
        %3497 = vmatprep.mubr.f32.mxu0 0.0
        %3498 = vmatmul.mubr.f32.gmra.mxu0 %v3377
        %v3499 = vpop.f32.mrf.mxu0
        %v3500 = vadd.f32 0.0, %v3499
        %v3501 = vpop.f32.mrf.mxu0
        %3502 = vmatprep.mubr.f32.mxu0 0.0
        %3503 = vmatmul.mubr.f32.gmra.mxu0 %v3378
        %v3504 = vpop.f32.mrf.mxu0
        %v3505 = vadd.f32 0.0, %v3504
        %v3506 = vpop.f32.mrf.mxu0
        %3507 = vmatprep.mubr.f32.mxu0 0.0
        %3508 = vmatmul.mubr.f32.gmra.mxu0 %v3379
        %v3509 = vpop.f32.mrf.mxu0
        %v3510 = vadd.f32 0.0, %v3509
        %v3511 = vpop.f32.mrf.mxu0
        %3512 = vmatprep.mubr.f32.mxu0 0.0
        %3513 = vmatmul.mubr.f32.gmra.mxu0 %v3380
        %v3514 = vpop.f32.mrf.mxu0
        %v3515 = vadd.f32 0.0, %v3514
        %v3516 = vpop.f32.mrf.mxu0
        %3517 = vmatprep.mubr.f32.mxu0 0.0
        %3518 = vmatmul.mubr.f32.gmra.mxu0 %v3381
        %v3519 = vpop.f32.mrf.mxu0
        %v3520 = vadd.f32 0.0, %v3519
        %v3521 = vpop.f32.mrf.mxu0
        %3522 = vmatprep.mubr.f32.mxu0 0.0
        %3523 = vmatmul.mubr.f32.gmra.mxu0 %v3382
        %v3524 = vpop.f32.mrf.mxu0
        %v3525 = vadd.f32 0.0, %v3524
        %v3526 = vpop.f32.mrf.mxu0
        %3527 = vdwg.mxu0
        %vm3528 = vcmp.lt.f32.partialorder 4.0, %v242
        %v3529 = vsel %vm3528, 1.0, 0.0
        %v3530 = vmul.f32 %v3529, %v3450
        %v3531 = vmul.f32 %v3529, %v3455
        %v3532 = vmul.f32 %v3529, %v3460
        %v3533 = vmul.f32 %v3529, %v3465
        %v3534 = vmul.f32 %v3529, %v3470
        %v3535 = vmul.f32 %v3529, %v3475
        %v3536 = vmul.f32 %v3529, %v3480
        %v3537 = vmul.f32 %v3529, %v3485
        %v3538 = vmul.f32 %v3529, %v3490
        %v3539 = vmul.f32 %v3529, %v3495
        %v3540 = vmul.f32 %v3529, %v3500
        %v3541 = vmul.f32 %v3529, %v3505
        %v3542 = vmul.f32 %v3529, %v3510
        %v3543 = vmul.f32 %v3529, %v3515
        %v3544 = vmul.f32 %v3529, %v3520
        %v3545 = vmul.f32 %v3529, %v3525
        %v3546 = vsub.f32 1.0, %v3529
        %v3547 = vmul.f32 %v3546, %v3367
        %v3548 = vmul.f32 %v3546, %v3368
        %v3549 = vmul.f32 %v3546, %v3369
        %v3550 = vmul.f32 %v3546, %v3370
        %v3551 = vmul.f32 %v3546, %v3371
        %v3552 = vmul.f32 %v3546, %v3372
        %v3553 = vmul.f32 %v3546, %v3373
        %v3554 = vmul.f32 %v3546, %v3374
        %v3555 = vmul.f32 %v3546, %v3375
        %v3556 = vmul.f32 %v3546, %v3376
        %v3557 = vmul.f32 %v3546, %v3377
        %v3558 = vmul.f32 %v3546, %v3378
        %v3559 = vmul.f32 %v3546, %v3379
        %v3560 = vmul.f32 %v3546, %v3380
        %v3561 = vmul.f32 %v3546, %v3381
        %v3562 = vmul.f32 %v3546, %v3382
        %v3563 = vadd.f32 %v3530, %v3547
        %v3564 = vadd.f32 %v3531, %v3548
        %v3565 = vadd.f32 %v3532, %v3549
        %v3566 = vadd.f32 %v3533, %v3550
        %v3567 = vadd.f32 %v3534, %v3551
        %v3568 = vadd.f32 %v3535, %v3552
        %v3569 = vadd.f32 %v3536, %v3553
        %v3570 = vadd.f32 %v3537, %v3554
        %v3571 = vadd.f32 %v3538, %v3555
        %v3572 = vadd.f32 %v3539, %v3556
        %v3573 = vadd.f32 %v3540, %v3557
        %v3574 = vadd.f32 %v3541, %v3558
        %v3575 = vadd.f32 %v3542, %v3559
        %v3576 = vadd.f32 %v3543, %v3560
        %v3577 = vadd.f32 %v3544, %v3561
        %v3578 = vadd.f32 %v3545, %v3562
        %3579 = vmatprep.subr.mxu0 0.0
        %3580 = vmatpush1.msra.mxu0 %v3578
        %3581 = vmatprep.subr.mxu0 0.0
        %3582 = vmatpush1.msra.mxu0 %v3577
        %3583 = vmatprep.subr.mxu0 0.0
        %3584 = vmatpush1.msra.mxu0 %v3576
        %3585 = vmatprep.subr.mxu0 0.0
        %3586 = vmatpush1.msra.mxu0 %v3575
        %3587 = vmatprep.subr.mxu0 0.0
        %3588 = vmatpush1.msra.mxu0 %v3574
        %3589 = vmatprep.subr.mxu0 0.0
        %3590 = vmatpush1.msra.mxu0 %v3573
        %3591 = vmatprep.subr.mxu0 0.0
        %3592 = vmatpush1.msra.mxu0 %v3572
        %3593 = vmatprep.subr.mxu0 0.0
        %3594 = vmatpush1.msra.mxu0 %v3571
        %3595 = vmatprep.subr.mxu0 0.0
        %3596 = vmatpush1.msra.mxu0 %v3570
        %3597 = vmatprep.subr.mxu0 0.0
        %3598 = vmatpush1.msra.mxu0 %v3569
        %3599 = vmatprep.subr.mxu0 0.0
        %3600 = vmatpush1.msra.mxu0 %v3568
        %3601 = vmatprep.subr.mxu0 0.0
        %3602 = vmatpush1.msra.mxu0 %v3567
        %3603 = vmatprep.subr.mxu0 0.0
        %3604 = vmatpush1.msra.mxu0 %v3566
        %3605 = vmatprep.subr.mxu0 0.0
        %3606 = vmatpush1.msra.mxu0 %v3565
        %3607 = vmatprep.subr.mxu0 0.0
        %3608 = vmatpush1.msra.mxu0 %v3564
        %3609 = vmatprep.subr.mxu0 0.0
        %3610 = vmatpush1.msra.mxu0 %v3563
        %3611 = vmatprep.subr.mxu0 0.0
        %3612 = vmatpush2.msra.mxu0 0.0
        %3613 = vmatprep.subr.mxu0 0.0
        %3614 = vmatpush2.msra.mxu0 0.0
        %3615 = vmatprep.subr.mxu0 0.0
        %3616 = vmatpush2.msra.mxu0 0.0
        %3617 = vmatprep.subr.mxu0 0.0
        %3618 = vmatpush2.msra.mxu0 0.0
        %3619 = vmatprep.subr.mxu0 0.0
        %3620 = vmatpush2.msra.mxu0 0.0
        %3621 = vmatprep.subr.mxu0 0.0
        %3622 = vmatpush2.msra.mxu0 0.0
        %3623 = vmatprep.subr.mxu0 0.0
        %3624 = vmatpush2.msra.mxu0 0.0
        %3625 = vmatprep.subr.mxu0 0.0
        %3626 = vmatpush2.msra.mxu0 0.0
        %3627 = vmatprep.subr.mxu0 0.0
        %3628 = vmatpush2.msra.mxu0 0.0
        %3629 = vmatprep.subr.mxu0 0.0
        %3630 = vmatpush2.msra.mxu0 0.0
        %3631 = vmatprep.subr.mxu0 0.0
        %3632 = vmatpush2.msra.mxu0 0.0
        %3633 = vmatprep.subr.mxu0 0.0
        %3634 = vmatpush2.msra.mxu0 0.0
        %3635 = vmatprep.subr.mxu0 0.0
        %3636 = vmatpush2.msra.mxu0 0.0
        %3637 = vmatprep.subr.mxu0 0.0
        %3638 = vmatpush2.msra.mxu0 0.0
        %3639 = vmatprep.subr.mxu0 0.0
        %3640 = vmatpush2.msra.mxu0 0.0
        %3641 = vmatprep.subr.mxu0 0.0
        %3642 = vmatpush2.msra.mxu0 0.0
        %3643 = vmatprep.mubr.f32.mxu0 0.0
        %3644 = vmatmul.mubr.f32.gmra.mxu0 %v3563
        %v3645 = vpop.f32.mrf.mxu0
        %v3646 = vadd.f32 0.0, %v3645
        %v3647 = vpop.f32.mrf.mxu0
        %3648 = vmatprep.mubr.f32.mxu0 0.0
        %3649 = vmatmul.mubr.f32.gmra.mxu0 %v3564
        %v3650 = vpop.f32.mrf.mxu0
        %v3651 = vadd.f32 0.0, %v3650
        %v3652 = vpop.f32.mrf.mxu0
        %3653 = vmatprep.mubr.f32.mxu0 0.0
        %3654 = vmatmul.mubr.f32.gmra.mxu0 %v3565
        %v3655 = vpop.f32.mrf.mxu0
        %v3656 = vadd.f32 0.0, %v3655
        %v3657 = vpop.f32.mrf.mxu0
        %3658 = vmatprep.mubr.f32.mxu0 0.0
        %3659 = vmatmul.mubr.f32.gmra.mxu0 %v3566
        %v3660 = vpop.f32.mrf.mxu0
        %v3661 = vadd.f32 0.0, %v3660
        %v3662 = vpop.f32.mrf.mxu0
        %3663 = vmatprep.mubr.f32.mxu0 0.0
        %3664 = vmatmul.mubr.f32.gmra.mxu0 %v3567
        %v3665 = vpop.f32.mrf.mxu0
        %v3666 = vadd.f32 0.0, %v3665
        %v3667 = vpop.f32.mrf.mxu0
        %3668 = vmatprep.mubr.f32.mxu0 0.0
        %3669 = vmatmul.mubr.f32.gmra.mxu0 %v3568
        %v3670 = vpop.f32.mrf.mxu0
        %v3671 = vadd.f32 0.0, %v3670
        %v3672 = vpop.f32.mrf.mxu0
        %3673 = vmatprep.mubr.f32.mxu0 0.0
        %3674 = vmatmul.mubr.f32.gmra.mxu0 %v3569
        %v3675 = vpop.f32.mrf.mxu0
        %v3676 = vadd.f32 0.0, %v3675
        %v3677 = vpop.f32.mrf.mxu0
        %3678 = vmatprep.mubr.f32.mxu0 0.0
        %3679 = vmatmul.mubr.f32.gmra.mxu0 %v3570
        %v3680 = vpop.f32.mrf.mxu0
        %v3681 = vadd.f32 0.0, %v3680
        %v3682 = vpop.f32.mrf.mxu0
        %3683 = vmatprep.mubr.f32.mxu0 0.0
        %3684 = vmatmul.mubr.f32.gmra.mxu0 %v3571
        %v3685 = vpop.f32.mrf.mxu0
        %v3686 = vadd.f32 0.0, %v3685
        %v3687 = vpop.f32.mrf.mxu0
        %3688 = vmatprep.mubr.f32.mxu0 0.0
        %3689 = vmatmul.mubr.f32.gmra.mxu0 %v3572
        %v3690 = vpop.f32.mrf.mxu0
        %v3691 = vadd.f32 0.0, %v3690
        %v3692 = vpop.f32.mrf.mxu0
        %3693 = vmatprep.mubr.f32.mxu0 0.0
        %3694 = vmatmul.mubr.f32.gmra.mxu0 %v3573
        %v3695 = vpop.f32.mrf.mxu0
        %v3696 = vadd.f32 0.0, %v3695
        %v3697 = vpop.f32.mrf.mxu0
        %3698 = vmatprep.mubr.f32.mxu0 0.0
        %3699 = vmatmul.mubr.f32.gmra.mxu0 %v3574
        %v3700 = vpop.f32.mrf.mxu0
        %v3701 = vadd.f32 0.0, %v3700
        %v3702 = vpop.f32.mrf.mxu0
        %3703 = vmatprep.mubr.f32.mxu0 0.0
        %3704 = vmatmul.mubr.f32.gmra.mxu0 %v3575
        %v3705 = vpop.f32.mrf.mxu0
        %v3706 = vadd.f32 0.0, %v3705
        %v3707 = vpop.f32.mrf.mxu0
        %3708 = vmatprep.mubr.f32.mxu0 0.0
        %3709 = vmatmul.mubr.f32.gmra.mxu0 %v3576
        %v3710 = vpop.f32.mrf.mxu0
        %v3711 = vadd.f32 0.0, %v3710
        %v3712 = vpop.f32.mrf.mxu0
        %3713 = vmatprep.mubr.f32.mxu0 0.0
        %3714 = vmatmul.mubr.f32.gmra.mxu0 %v3577
        %v3715 = vpop.f32.mrf.mxu0
        %v3716 = vadd.f32 0.0, %v3715
        %v3717 = vpop.f32.mrf.mxu0
        %3718 = vmatprep.mubr.f32.mxu0 0.0
        %3719 = vmatmul.mubr.f32.gmra.mxu0 %v3578
        %v3720 = vpop.f32.mrf.mxu0
        %v3721 = vadd.f32 0.0, %v3720
        %v3722 = vpop.f32.mrf.mxu0
        %3723 = vdwg.mxu0
        %vm3724 = vcmp.lt.f32.partialorder 5.0, %v242
        %v3725 = vsel %vm3724, 1.0, 0.0
        %v3726 = vmul.f32 %v3725, %v3646
        %v3727 = vmul.f32 %v3725, %v3651
        %v3728 = vmul.f32 %v3725, %v3656
        %v3729 = vmul.f32 %v3725, %v3661
        %v3730 = vmul.f32 %v3725, %v3666
        %v3731 = vmul.f32 %v3725, %v3671
        %v3732 = vmul.f32 %v3725, %v3676
        %v3733 = vmul.f32 %v3725, %v3681
        %v3734 = vmul.f32 %v3725, %v3686
        %v3735 = vmul.f32 %v3725, %v3691
        %v3736 = vmul.f32 %v3725, %v3696
        %v3737 = vmul.f32 %v3725, %v3701
        %v3738 = vmul.f32 %v3725, %v3706
        %v3739 = vmul.f32 %v3725, %v3711
        %v3740 = vmul.f32 %v3725, %v3716
        %v3741 = vmul.f32 %v3725, %v3721
        %v3742 = vsub.f32 1.0, %v3725
        %v3743 = vmul.f32 %v3742, %v3563
        %v3744 = vmul.f32 %v3742, %v3564
        %v3745 = vmul.f32 %v3742, %v3565
        %v3746 = vmul.f32 %v3742, %v3566
        %v3747 = vmul.f32 %v3742, %v3567
        %v3748 = vmul.f32 %v3742, %v3568
        %v3749 = vmul.f32 %v3742, %v3569
        %v3750 = vmul.f32 %v3742, %v3570
        %v3751 = vmul.f32 %v3742, %v3571
        %v3752 = vmul.f32 %v3742, %v3572
        %v3753 = vmul.f32 %v3742, %v3573
        %v3754 = vmul.f32 %v3742, %v3574
        %v3755 = vmul.f32 %v3742, %v3575
        %v3756 = vmul.f32 %v3742, %v3576
        %v3757 = vmul.f32 %v3742, %v3577
        %v3758 = vmul.f32 %v3742, %v3578
        %v3759 = vadd.f32 %v3726, %v3743
        %v3760 = vadd.f32 %v3727, %v3744
        %v3761 = vadd.f32 %v3728, %v3745
        %v3762 = vadd.f32 %v3729, %v3746
        %v3763 = vadd.f32 %v3730, %v3747
        %v3764 = vadd.f32 %v3731, %v3748
        %v3765 = vadd.f32 %v3732, %v3749
        %v3766 = vadd.f32 %v3733, %v3750
        %v3767 = vadd.f32 %v3734, %v3751
        %v3768 = vadd.f32 %v3735, %v3752
        %v3769 = vadd.f32 %v3736, %v3753
        %v3770 = vadd.f32 %v3737, %v3754
        %v3771 = vadd.f32 %v3738, %v3755
        %v3772 = vadd.f32 %v3739, %v3756
        %v3773 = vadd.f32 %v3740, %v3757
        %v3774 = vadd.f32 %v3741, %v3758
        %3775 = vmatprep.subr.mxu0 0.0
        %3776 = vmatpush1.msra.mxu0 %v3774
        %3777 = vmatprep.subr.mxu0 0.0
        %3778 = vmatpush1.msra.mxu0 %v3773
        %3779 = vmatprep.subr.mxu0 0.0
        %3780 = vmatpush1.msra.mxu0 %v3772
        %3781 = vmatprep.subr.mxu0 0.0
        %3782 = vmatpush1.msra.mxu0 %v3771
        %3783 = vmatprep.subr.mxu0 0.0
        %3784 = vmatpush1.msra.mxu0 %v3770
        %3785 = vmatprep.subr.mxu0 0.0
        %3786 = vmatpush1.msra.mxu0 %v3769
        %3787 = vmatprep.subr.mxu0 0.0
        %3788 = vmatpush1.msra.mxu0 %v3768
        %3789 = vmatprep.subr.mxu0 0.0
        %3790 = vmatpush1.msra.mxu0 %v3767
        %3791 = vmatprep.subr.mxu0 0.0
        %3792 = vmatpush1.msra.mxu0 %v3766
        %3793 = vmatprep.subr.mxu0 0.0
        %3794 = vmatpush1.msra.mxu0 %v3765
        %3795 = vmatprep.subr.mxu0 0.0
        %3796 = vmatpush1.msra.mxu0 %v3764
        %3797 = vmatprep.subr.mxu0 0.0
        %3798 = vmatpush1.msra.mxu0 %v3763
        %3799 = vmatprep.subr.mxu0 0.0
        %3800 = vmatpush1.msra.mxu0 %v3762
        %3801 = vmatprep.subr.mxu0 0.0
        %3802 = vmatpush1.msra.mxu0 %v3761
        %3803 = vmatprep.subr.mxu0 0.0
        %3804 = vmatpush1.msra.mxu0 %v3760
        %3805 = vmatprep.subr.mxu0 0.0
        %3806 = vmatpush1.msra.mxu0 %v3759
        %3807 = vmatprep.subr.mxu0 0.0
        %3808 = vmatpush2.msra.mxu0 0.0
        %3809 = vmatprep.subr.mxu0 0.0
        %3810 = vmatpush2.msra.mxu0 0.0
        %3811 = vmatprep.subr.mxu0 0.0
        %3812 = vmatpush2.msra.mxu0 0.0
        %3813 = vmatprep.subr.mxu0 0.0
        %3814 = vmatpush2.msra.mxu0 0.0
        %3815 = vmatprep.subr.mxu0 0.0
        %3816 = vmatpush2.msra.mxu0 0.0
        %3817 = vmatprep.subr.mxu0 0.0
        %3818 = vmatpush2.msra.mxu0 0.0
        %3819 = vmatprep.subr.mxu0 0.0
        %3820 = vmatpush2.msra.mxu0 0.0
        %3821 = vmatprep.subr.mxu0 0.0
        %3822 = vmatpush2.msra.mxu0 0.0
        %3823 = vmatprep.subr.mxu0 0.0
        %3824 = vmatpush2.msra.mxu0 0.0
        %3825 = vmatprep.subr.mxu0 0.0
        %3826 = vmatpush2.msra.mxu0 0.0
        %3827 = vmatprep.subr.mxu0 0.0
        %3828 = vmatpush2.msra.mxu0 0.0
        %3829 = vmatprep.subr.mxu0 0.0
        %3830 = vmatpush2.msra.mxu0 0.0
        %3831 = vmatprep.subr.mxu0 0.0
        %3832 = vmatpush2.msra.mxu0 0.0
        %3833 = vmatprep.subr.mxu0 0.0
        %3834 = vmatpush2.msra.mxu0 0.0
        %3835 = vmatprep.subr.mxu0 0.0
        %3836 = vmatpush2.msra.mxu0 0.0
        %3837 = vmatprep.subr.mxu0 0.0
        %3838 = vmatpush2.msra.mxu0 0.0
        %3839 = vmatprep.mubr.f32.mxu0 0.0
        %3840 = vmatmul.mubr.f32.gmra.mxu0 %v3759
        %v3841 = vpop.f32.mrf.mxu0
        %v3842 = vadd.f32 0.0, %v3841
        %v3843 = vpop.f32.mrf.mxu0
        %3844 = vmatprep.mubr.f32.mxu0 0.0
        %3845 = vmatmul.mubr.f32.gmra.mxu0 %v3760
        %v3846 = vpop.f32.mrf.mxu0
        %v3847 = vadd.f32 0.0, %v3846
        %v3848 = vpop.f32.mrf.mxu0
        %3849 = vmatprep.mubr.f32.mxu0 0.0
        %3850 = vmatmul.mubr.f32.gmra.mxu0 %v3761
        %v3851 = vpop.f32.mrf.mxu0
        %v3852 = vadd.f32 0.0, %v3851
        %v3853 = vpop.f32.mrf.mxu0
        %3854 = vmatprep.mubr.f32.mxu0 0.0
        %3855 = vmatmul.mubr.f32.gmra.mxu0 %v3762
        %v3856 = vpop.f32.mrf.mxu0
        %v3857 = vadd.f32 0.0, %v3856
        %v3858 = vpop.f32.mrf.mxu0
        %3859 = vmatprep.mubr.f32.mxu0 0.0
        %3860 = vmatmul.mubr.f32.gmra.mxu0 %v3763
        %v3861 = vpop.f32.mrf.mxu0
        %v3862 = vadd.f32 0.0, %v3861
        %v3863 = vpop.f32.mrf.mxu0
        %3864 = vmatprep.mubr.f32.mxu0 0.0
        %3865 = vmatmul.mubr.f32.gmra.mxu0 %v3764
        %v3866 = vpop.f32.mrf.mxu0
        %v3867 = vadd.f32 0.0, %v3866
        %v3868 = vpop.f32.mrf.mxu0
        %3869 = vmatprep.mubr.f32.mxu0 0.0
        %3870 = vmatmul.mubr.f32.gmra.mxu0 %v3765
        %v3871 = vpop.f32.mrf.mxu0
        %v3872 = vadd.f32 0.0, %v3871
        %v3873 = vpop.f32.mrf.mxu0
        %3874 = vmatprep.mubr.f32.mxu0 0.0
        %3875 = vmatmul.mubr.f32.gmra.mxu0 %v3766
        %v3876 = vpop.f32.mrf.mxu0
        %v3877 = vadd.f32 0.0, %v3876
        %v3878 = vpop.f32.mrf.mxu0
        %3879 = vmatprep.mubr.f32.mxu0 0.0
        %3880 = vmatmul.mubr.f32.gmra.mxu0 %v3767
        %v3881 = vpop.f32.mrf.mxu0
        %v3882 = vadd.f32 0.0, %v3881
        %v3883 = vpop.f32.mrf.mxu0
        %3884 = vmatprep.mubr.f32.mxu0 0.0
        %3885 = vmatmul.mubr.f32.gmra.mxu0 %v3768
        %v3886 = vpop.f32.mrf.mxu0
        %v3887 = vadd.f32 0.0, %v3886
        %v3888 = vpop.f32.mrf.mxu0
        %3889 = vmatprep.mubr.f32.mxu0 0.0
        %3890 = vmatmul.mubr.f32.gmra.mxu0 %v3769
        %v3891 = vpop.f32.mrf.mxu0
        %v3892 = vadd.f32 0.0, %v3891
        %v3893 = vpop.f32.mrf.mxu0
        %3894 = vmatprep.mubr.f32.mxu0 0.0
        %3895 = vmatmul.mubr.f32.gmra.mxu0 %v3770
        %v3896 = vpop.f32.mrf.mxu0
        %v3897 = vadd.f32 0.0, %v3896
        %v3898 = vpop.f32.mrf.mxu0
        %3899 = vmatprep.mubr.f32.mxu0 0.0
        %3900 = vmatmul.mubr.f32.gmra.mxu0 %v3771
        %v3901 = vpop.f32.mrf.mxu0
        %v3902 = vadd.f32 0.0, %v3901
        %v3903 = vpop.f32.mrf.mxu0
        %3904 = vmatprep.mubr.f32.mxu0 0.0
        %3905 = vmatmul.mubr.f32.gmra.mxu0 %v3772
        %v3906 = vpop.f32.mrf.mxu0
        %v3907 = vadd.f32 0.0, %v3906
        %v3908 = vpop.f32.mrf.mxu0
        %3909 = vmatprep.mubr.f32.mxu0 0.0
        %3910 = vmatmul.mubr.f32.gmra.mxu0 %v3773
        %v3911 = vpop.f32.mrf.mxu0
        %v3912 = vadd.f32 0.0, %v3911
        %v3913 = vpop.f32.mrf.mxu0
        %3914 = vmatprep.mubr.f32.mxu0 0.0
        %3915 = vmatmul.mubr.f32.gmra.mxu0 %v3774
        %v3916 = vpop.f32.mrf.mxu0
        %v3917 = vadd.f32 0.0, %v3916
        %v3918 = vpop.f32.mrf.mxu0
        %3919 = vdwg.mxu0
        %vm3920 = vcmp.lt.f32.partialorder 6.0, %v242
        %v3921 = vsel %vm3920, 1.0, 0.0
        %v3922 = vmul.f32 %v3921, %v3842
        %v3923 = vmul.f32 %v3921, %v3847
        %v3924 = vmul.f32 %v3921, %v3852
        %v3925 = vmul.f32 %v3921, %v3857
        %v3926 = vmul.f32 %v3921, %v3862
        %v3927 = vmul.f32 %v3921, %v3867
        %v3928 = vmul.f32 %v3921, %v3872
        %v3929 = vmul.f32 %v3921, %v3877
        %v3930 = vmul.f32 %v3921, %v3882
        %v3931 = vmul.f32 %v3921, %v3887
        %v3932 = vmul.f32 %v3921, %v3892
        %v3933 = vmul.f32 %v3921, %v3897
        %v3934 = vmul.f32 %v3921, %v3902
        %v3935 = vmul.f32 %v3921, %v3907
        %v3936 = vmul.f32 %v3921, %v3912
        %v3937 = vmul.f32 %v3921, %v3917
        %v3938 = vsub.f32 1.0, %v3921
        %v3939 = vmul.f32 %v3938, %v3759
        %v3940 = vmul.f32 %v3938, %v3760
        %v3941 = vmul.f32 %v3938, %v3761
        %v3942 = vmul.f32 %v3938, %v3762
        %v3943 = vmul.f32 %v3938, %v3763
        %v3944 = vmul.f32 %v3938, %v3764
        %v3945 = vmul.f32 %v3938, %v3765
        %v3946 = vmul.f32 %v3938, %v3766
        %v3947 = vmul.f32 %v3938, %v3767
        %v3948 = vmul.f32 %v3938, %v3768
        %v3949 = vmul.f32 %v3938, %v3769
        %v3950 = vmul.f32 %v3938, %v3770
        %v3951 = vmul.f32 %v3938, %v3771
        %v3952 = vmul.f32 %v3938, %v3772
        %v3953 = vmul.f32 %v3938, %v3773
        %v3954 = vmul.f32 %v3938, %v3774
        %v3955 = vadd.f32 %v3922, %v3939
        %v3956 = vadd.f32 %v3923, %v3940
        %v3957 = vadd.f32 %v3924, %v3941
        %v3958 = vadd.f32 %v3925, %v3942
        %v3959 = vadd.f32 %v3926, %v3943
        %v3960 = vadd.f32 %v3927, %v3944
        %v3961 = vadd.f32 %v3928, %v3945
        %v3962 = vadd.f32 %v3929, %v3946
        %v3963 = vadd.f32 %v3930, %v3947
        %v3964 = vadd.f32 %v3931, %v3948
        %v3965 = vadd.f32 %v3932, %v3949
        %v3966 = vadd.f32 %v3933, %v3950
        %v3967 = vadd.f32 %v3934, %v3951
        %v3968 = vadd.f32 %v3935, %v3952
        %v3969 = vadd.f32 %v3936, %v3953
        %v3970 = vadd.f32 %v3937, %v3954
        %3971 = vmatprep.subr.mxu0 0.0
        %3972 = vmatpush1.msra.mxu0 %v3970
        %3973 = vmatprep.subr.mxu0 0.0
        %3974 = vmatpush1.msra.mxu0 %v3969
        %3975 = vmatprep.subr.mxu0 0.0
        %3976 = vmatpush1.msra.mxu0 %v3968
        %3977 = vmatprep.subr.mxu0 0.0
        %3978 = vmatpush1.msra.mxu0 %v3967
        %3979 = vmatprep.subr.mxu0 0.0
        %3980 = vmatpush1.msra.mxu0 %v3966
        %3981 = vmatprep.subr.mxu0 0.0
        %3982 = vmatpush1.msra.mxu0 %v3965
        %3983 = vmatprep.subr.mxu0 0.0
        %3984 = vmatpush1.msra.mxu0 %v3964
        %3985 = vmatprep.subr.mxu0 0.0
        %3986 = vmatpush1.msra.mxu0 %v3963
        %3987 = vmatprep.subr.mxu0 0.0
        %3988 = vmatpush1.msra.mxu0 %v3962
        %3989 = vmatprep.subr.mxu0 0.0
        %3990 = vmatpush1.msra.mxu0 %v3961
        %3991 = vmatprep.subr.mxu0 0.0
        %3992 = vmatpush1.msra.mxu0 %v3960
        %3993 = vmatprep.subr.mxu0 0.0
        %3994 = vmatpush1.msra.mxu0 %v3959
        %3995 = vmatprep.subr.mxu0 0.0
        %3996 = vmatpush1.msra.mxu0 %v3958
        %3997 = vmatprep.subr.mxu0 0.0
        %3998 = vmatpush1.msra.mxu0 %v3957
        %3999 = vmatprep.subr.mxu0 0.0
        %4000 = vmatpush1.msra.mxu0 %v3956
        %4001 = vmatprep.subr.mxu0 0.0
        %4002 = vmatpush1.msra.mxu0 %v3955
        %4003 = vmatprep.subr.mxu0 0.0
        %4004 = vmatpush2.msra.mxu0 0.0
        %4005 = vmatprep.subr.mxu0 0.0
        %4006 = vmatpush2.msra.mxu0 0.0
        %4007 = vmatprep.subr.mxu0 0.0
        %4008 = vmatpush2.msra.mxu0 0.0
        %4009 = vmatprep.subr.mxu0 0.0
        %4010 = vmatpush2.msra.mxu0 0.0
        %4011 = vmatprep.subr.mxu0 0.0
        %4012 = vmatpush2.msra.mxu0 0.0
        %4013 = vmatprep.subr.mxu0 0.0
        %4014 = vmatpush2.msra.mxu0 0.0
        %4015 = vmatprep.subr.mxu0 0.0
        %4016 = vmatpush2.msra.mxu0 0.0
        %4017 = vmatprep.subr.mxu0 0.0
        %4018 = vmatpush2.msra.mxu0 0.0
        %4019 = vmatprep.subr.mxu0 0.0
        %4020 = vmatpush2.msra.mxu0 0.0
        %4021 = vmatprep.subr.mxu0 0.0
        %4022 = vmatpush2.msra.mxu0 0.0
        %4023 = vmatprep.subr.mxu0 0.0
        %4024 = vmatpush2.msra.mxu0 0.0
        %4025 = vmatprep.subr.mxu0 0.0
        %4026 = vmatpush2.msra.mxu0 0.0
        %4027 = vmatprep.subr.mxu0 0.0
        %4028 = vmatpush2.msra.mxu0 0.0
        %4029 = vmatprep.subr.mxu0 0.0
        %4030 = vmatpush2.msra.mxu0 0.0
        %4031 = vmatprep.subr.mxu0 0.0
        %4032 = vmatpush2.msra.mxu0 0.0
        %4033 = vmatprep.subr.mxu0 0.0
        %4034 = vmatpush2.msra.mxu0 0.0
        %4035 = vmatprep.mubr.f32.mxu0 0.0
        %4036 = vmatmul.mubr.f32.gmra.mxu0 %v3955
        %v4037 = vpop.f32.mrf.mxu0
        %v4038 = vadd.f32 0.0, %v4037
        %v4039 = vpop.f32.mrf.mxu0
        %4040 = vmatprep.mubr.f32.mxu0 0.0
        %4041 = vmatmul.mubr.f32.gmra.mxu0 %v3956
        %v4042 = vpop.f32.mrf.mxu0
        %v4043 = vadd.f32 0.0, %v4042
        %v4044 = vpop.f32.mrf.mxu0
        %4045 = vmatprep.mubr.f32.mxu0 0.0
        %4046 = vmatmul.mubr.f32.gmra.mxu0 %v3957
        %v4047 = vpop.f32.mrf.mxu0
        %v4048 = vadd.f32 0.0, %v4047
        %v4049 = vpop.f32.mrf.mxu0
        %4050 = vmatprep.mubr.f32.mxu0 0.0
        %4051 = vmatmul.mubr.f32.gmra.mxu0 %v3958
        %v4052 = vpop.f32.mrf.mxu0
        %v4053 = vadd.f32 0.0, %v4052
        %v4054 = vpop.f32.mrf.mxu0
        %4055 = vmatprep.mubr.f32.mxu0 0.0
        %4056 = vmatmul.mubr.f32.gmra.mxu0 %v3959
        %v4057 = vpop.f32.mrf.mxu0
        %v4058 = vadd.f32 0.0, %v4057
        %v4059 = vpop.f32.mrf.mxu0
        %4060 = vmatprep.mubr.f32.mxu0 0.0
        %4061 = vmatmul.mubr.f32.gmra.mxu0 %v3960
        %v4062 = vpop.f32.mrf.mxu0
        %v4063 = vadd.f32 0.0, %v4062
        %v4064 = vpop.f32.mrf.mxu0
        %4065 = vmatprep.mubr.f32.mxu0 0.0
        %4066 = vmatmul.mubr.f32.gmra.mxu0 %v3961
        %v4067 = vpop.f32.mrf.mxu0
        %v4068 = vadd.f32 0.0, %v4067
        %v4069 = vpop.f32.mrf.mxu0
        %4070 = vmatprep.mubr.f32.mxu0 0.0
        %4071 = vmatmul.mubr.f32.gmra.mxu0 %v3962
        %v4072 = vpop.f32.mrf.mxu0
        %v4073 = vadd.f32 0.0, %v4072
        %v4074 = vpop.f32.mrf.mxu0
        %4075 = vmatprep.mubr.f32.mxu0 0.0
        %4076 = vmatmul.mubr.f32.gmra.mxu0 %v3963
        %v4077 = vpop.f32.mrf.mxu0
        %v4078 = vadd.f32 0.0, %v4077
        %v4079 = vpop.f32.mrf.mxu0
        %4080 = vmatprep.mubr.f32.mxu0 0.0
        %4081 = vmatmul.mubr.f32.gmra.mxu0 %v3964
        %v4082 = vpop.f32.mrf.mxu0
        %v4083 = vadd.f32 0.0, %v4082
        %v4084 = vpop.f32.mrf.mxu0
        %4085 = vmatprep.mubr.f32.mxu0 0.0
        %4086 = vmatmul.mubr.f32.gmra.mxu0 %v3965
        %v4087 = vpop.f32.mrf.mxu0
        %v4088 = vadd.f32 0.0, %v4087
        %v4089 = vpop.f32.mrf.mxu0
        %4090 = vmatprep.mubr.f32.mxu0 0.0
        %4091 = vmatmul.mubr.f32.gmra.mxu0 %v3966
        %v4092 = vpop.f32.mrf.mxu0
        %v4093 = vadd.f32 0.0, %v4092
        %v4094 = vpop.f32.mrf.mxu0
        %4095 = vmatprep.mubr.f32.mxu0 0.0
        %4096 = vmatmul.mubr.f32.gmra.mxu0 %v3967
        %v4097 = vpop.f32.mrf.mxu0
        %v4098 = vadd.f32 0.0, %v4097
        %v4099 = vpop.f32.mrf.mxu0
        %4100 = vmatprep.mubr.f32.mxu0 0.0
        %4101 = vmatmul.mubr.f32.gmra.mxu0 %v3968
        %v4102 = vpop.f32.mrf.mxu0
        %v4103 = vadd.f32 0.0, %v4102
        %v4104 = vpop.f32.mrf.mxu0
        %4105 = vmatprep.mubr.f32.mxu0 0.0
        %4106 = vmatmul.mubr.f32.gmra.mxu0 %v3969
        %v4107 = vpop.f32.mrf.mxu0
        %v4108 = vadd.f32 0.0, %v4107
        %v4109 = vpop.f32.mrf.mxu0
        %4110 = vmatprep.mubr.f32.mxu0 0.0
        %4111 = vmatmul.mubr.f32.gmra.mxu0 %v3970
        %v4112 = vpop.f32.mrf.mxu0
        %v4113 = vadd.f32 0.0, %v4112
        %v4114 = vpop.f32.mrf.mxu0
        %4115 = vdwg.mxu0
        %vm4116 = vcmp.lt.f32.partialorder 7.0, %v242
        %v4117 = vsel %vm4116, 1.0, 0.0
        %v4118 = vmul.f32 %v4117, %v4038
        %v4119 = vmul.f32 %v4117, %v4043
        %v4120 = vmul.f32 %v4117, %v4048
        %v4121 = vmul.f32 %v4117, %v4053
        %v4122 = vmul.f32 %v4117, %v4058
        %v4123 = vmul.f32 %v4117, %v4063
        %v4124 = vmul.f32 %v4117, %v4068
        %v4125 = vmul.f32 %v4117, %v4073
        %v4126 = vmul.f32 %v4117, %v4078
        %v4127 = vmul.f32 %v4117, %v4083
        %v4128 = vmul.f32 %v4117, %v4088
        %v4129 = vmul.f32 %v4117, %v4093
        %v4130 = vmul.f32 %v4117, %v4098
        %v4131 = vmul.f32 %v4117, %v4103
        %v4132 = vmul.f32 %v4117, %v4108
        %v4133 = vmul.f32 %v4117, %v4113
        %v4134 = vsub.f32 1.0, %v4117
        %v4135 = vmul.f32 %v4134, %v3955
        %v4136 = vmul.f32 %v4134, %v3956
        %v4137 = vmul.f32 %v4134, %v3957
        %v4138 = vmul.f32 %v4134, %v3958
        %v4139 = vmul.f32 %v4134, %v3959
        %v4140 = vmul.f32 %v4134, %v3960
        %v4141 = vmul.f32 %v4134, %v3961
        %v4142 = vmul.f32 %v4134, %v3962
        %v4143 = vmul.f32 %v4134, %v3963
        %v4144 = vmul.f32 %v4134, %v3964
        %v4145 = vmul.f32 %v4134, %v3965
        %v4146 = vmul.f32 %v4134, %v3966
        %v4147 = vmul.f32 %v4134, %v3967
        %v4148 = vmul.f32 %v4134, %v3968
        %v4149 = vmul.f32 %v4134, %v3969
        %v4150 = vmul.f32 %v4134, %v3970
        %v4151 = vadd.f32 %v4118, %v4135
        %v4152 = vadd.f32 %v4119, %v4136
        %v4153 = vadd.f32 %v4120, %v4137
        %v4154 = vadd.f32 %v4121, %v4138
        %v4155 = vadd.f32 %v4122, %v4139
        %v4156 = vadd.f32 %v4123, %v4140
        %v4157 = vadd.f32 %v4124, %v4141
        %v4158 = vadd.f32 %v4125, %v4142
        %v4159 = vadd.f32 %v4126, %v4143
        %v4160 = vadd.f32 %v4127, %v4144
        %v4161 = vadd.f32 %v4128, %v4145
        %v4162 = vadd.f32 %v4129, %v4146
        %v4163 = vadd.f32 %v4130, %v4147
        %v4164 = vadd.f32 %v4131, %v4148
        %v4165 = vadd.f32 %v4132, %v4149
        %v4166 = vadd.f32 %v4133, %v4150
        %4167 = vmatprep.subr.mxu0 0.0
        %4168 = vmatpush1.msra.mxu0 %v4166
        %4169 = vmatprep.subr.mxu0 0.0
        %4170 = vmatpush1.msra.mxu0 %v4165
        %4171 = vmatprep.subr.mxu0 0.0
        %4172 = vmatpush1.msra.mxu0 %v4164
        %4173 = vmatprep.subr.mxu0 0.0
        %4174 = vmatpush1.msra.mxu0 %v4163
        %4175 = vmatprep.subr.mxu0 0.0
        %4176 = vmatpush1.msra.mxu0 %v4162
        %4177 = vmatprep.subr.mxu0 0.0
        %4178 = vmatpush1.msra.mxu0 %v4161
        %4179 = vmatprep.subr.mxu0 0.0
        %4180 = vmatpush1.msra.mxu0 %v4160
        %4181 = vmatprep.subr.mxu0 0.0
        %4182 = vmatpush1.msra.mxu0 %v4159
        %4183 = vmatprep.subr.mxu0 0.0
        %4184 = vmatpush1.msra.mxu0 %v4158
        %4185 = vmatprep.subr.mxu0 0.0
        %4186 = vmatpush1.msra.mxu0 %v4157
        %4187 = vmatprep.subr.mxu0 0.0
        %4188 = vmatpush1.msra.mxu0 %v4156
        %4189 = vmatprep.subr.mxu0 0.0
        %4190 = vmatpush1.msra.mxu0 %v4155
        %4191 = vmatprep.subr.mxu0 0.0
        %4192 = vmatpush1.msra.mxu0 %v4154
        %4193 = vmatprep.subr.mxu0 0.0
        %4194 = vmatpush1.msra.mxu0 %v4153
        %4195 = vmatprep.subr.mxu0 0.0
        %4196 = vmatpush1.msra.mxu0 %v4152
        %4197 = vmatprep.subr.mxu0 0.0
        %4198 = vmatpush1.msra.mxu0 %v4151
        %4199 = vmatprep.subr.mxu0 0.0
        %4200 = vmatpush2.msra.mxu0 0.0
        %4201 = vmatprep.subr.mxu0 0.0
        %4202 = vmatpush2.msra.mxu0 0.0
        %4203 = vmatprep.subr.mxu0 0.0
        %4204 = vmatpush2.msra.mxu0 0.0
        %4205 = vmatprep.subr.mxu0 0.0
        %4206 = vmatpush2.msra.mxu0 0.0
        %4207 = vmatprep.subr.mxu0 0.0
        %4208 = vmatpush2.msra.mxu0 0.0
        %4209 = vmatprep.subr.mxu0 0.0
        %4210 = vmatpush2.msra.mxu0 0.0
        %4211 = vmatprep.subr.mxu0 0.0
        %4212 = vmatpush2.msra.mxu0 0.0
        %4213 = vmatprep.subr.mxu0 0.0
        %4214 = vmatpush2.msra.mxu0 0.0
        %4215 = vmatprep.subr.mxu0 0.0
        %4216 = vmatpush2.msra.mxu0 0.0
        %4217 = vmatprep.subr.mxu0 0.0
        %4218 = vmatpush2.msra.mxu0 0.0
        %4219 = vmatprep.subr.mxu0 0.0
        %4220 = vmatpush2.msra.mxu0 0.0
        %4221 = vmatprep.subr.mxu0 0.0
        %4222 = vmatpush2.msra.mxu0 0.0
        %4223 = vmatprep.subr.mxu0 0.0
        %4224 = vmatpush2.msra.mxu0 0.0
        %4225 = vmatprep.subr.mxu0 0.0
        %4226 = vmatpush2.msra.mxu0 0.0
        %4227 = vmatprep.subr.mxu0 0.0
        %4228 = vmatpush2.msra.mxu0 0.0
        %4229 = vmatprep.subr.mxu0 0.0
        %4230 = vmatpush2.msra.mxu0 0.0
        %4231 = vmatprep.mubr.f32.mxu0 0.0
        %4232 = vmatmul.mubr.f32.gmra.mxu0 %v4151
        %v4233 = vpop.f32.mrf.mxu0
        %v4234 = vadd.f32 0.0, %v4233
        %v4235 = vpop.f32.mrf.mxu0
        %4236 = vmatprep.mubr.f32.mxu0 0.0
        %4237 = vmatmul.mubr.f32.gmra.mxu0 %v4152
        %v4238 = vpop.f32.mrf.mxu0
        %v4239 = vadd.f32 0.0, %v4238
        %v4240 = vpop.f32.mrf.mxu0
        %4241 = vmatprep.mubr.f32.mxu0 0.0
        %4242 = vmatmul.mubr.f32.gmra.mxu0 %v4153
        %v4243 = vpop.f32.mrf.mxu0
        %v4244 = vadd.f32 0.0, %v4243
        %v4245 = vpop.f32.mrf.mxu0
        %4246 = vmatprep.mubr.f32.mxu0 0.0
        %4247 = vmatmul.mubr.f32.gmra.mxu0 %v4154
        %v4248 = vpop.f32.mrf.mxu0
        %v4249 = vadd.f32 0.0, %v4248
        %v4250 = vpop.f32.mrf.mxu0
        %4251 = vmatprep.mubr.f32.mxu0 0.0
        %4252 = vmatmul.mubr.f32.gmra.mxu0 %v4155
        %v4253 = vpop.f32.mrf.mxu0
        %v4254 = vadd.f32 0.0, %v4253
        %v4255 = vpop.f32.mrf.mxu0
        %4256 = vmatprep.mubr.f32.mxu0 0.0
        %4257 = vmatmul.mubr.f32.gmra.mxu0 %v4156
        %v4258 = vpop.f32.mrf.mxu0
        %v4259 = vadd.f32 0.0, %v4258
        %v4260 = vpop.f32.mrf.mxu0
        %4261 = vmatprep.mubr.f32.mxu0 0.0
        %4262 = vmatmul.mubr.f32.gmra.mxu0 %v4157
        %v4263 = vpop.f32.mrf.mxu0
        %v4264 = vadd.f32 0.0, %v4263
        %v4265 = vpop.f32.mrf.mxu0
        %4266 = vmatprep.mubr.f32.mxu0 0.0
        %4267 = vmatmul.mubr.f32.gmra.mxu0 %v4158
        %v4268 = vpop.f32.mrf.mxu0
        %v4269 = vadd.f32 0.0, %v4268
        %v4270 = vpop.f32.mrf.mxu0
        %4271 = vmatprep.mubr.f32.mxu0 0.0
        %4272 = vmatmul.mubr.f32.gmra.mxu0 %v4159
        %v4273 = vpop.f32.mrf.mxu0
        %v4274 = vadd.f32 0.0, %v4273
        %v4275 = vpop.f32.mrf.mxu0
        %4276 = vmatprep.mubr.f32.mxu0 0.0
        %4277 = vmatmul.mubr.f32.gmra.mxu0 %v4160
        %v4278 = vpop.f32.mrf.mxu0
        %v4279 = vadd.f32 0.0, %v4278
        %v4280 = vpop.f32.mrf.mxu0
        %4281 = vmatprep.mubr.f32.mxu0 0.0
        %4282 = vmatmul.mubr.f32.gmra.mxu0 %v4161
        %v4283 = vpop.f32.mrf.mxu0
        %v4284 = vadd.f32 0.0, %v4283
        %v4285 = vpop.f32.mrf.mxu0
        %4286 = vmatprep.mubr.f32.mxu0 0.0
        %4287 = vmatmul.mubr.f32.gmra.mxu0 %v4162
        %v4288 = vpop.f32.mrf.mxu0
        %v4289 = vadd.f32 0.0, %v4288
        %v4290 = vpop.f32.mrf.mxu0
        %4291 = vmatprep.mubr.f32.mxu0 0.0
        %4292 = vmatmul.mubr.f32.gmra.mxu0 %v4163
        %v4293 = vpop.f32.mrf.mxu0
        %v4294 = vadd.f32 0.0, %v4293
        %v4295 = vpop.f32.mrf.mxu0
        %4296 = vmatprep.mubr.f32.mxu0 0.0
        %4297 = vmatmul.mubr.f32.gmra.mxu0 %v4164
        %v4298 = vpop.f32.mrf.mxu0
        %v4299 = vadd.f32 0.0, %v4298
        %v4300 = vpop.f32.mrf.mxu0
        %4301 = vmatprep.mubr.f32.mxu0 0.0
        %4302 = vmatmul.mubr.f32.gmra.mxu0 %v4165
        %v4303 = vpop.f32.mrf.mxu0
        %v4304 = vadd.f32 0.0, %v4303
        %v4305 = vpop.f32.mrf.mxu0
        %4306 = vmatprep.mubr.f32.mxu0 0.0
        %4307 = vmatmul.mubr.f32.gmra.mxu0 %v4166
        %v4308 = vpop.f32.mrf.mxu0
        %v4309 = vadd.f32 0.0, %v4308
        %v4310 = vpop.f32.mrf.mxu0
        %4311 = vdwg.mxu0
        %vm4312 = vcmp.lt.f32.partialorder 8.0, %v242
        %v4313 = vsel %vm4312, 1.0, 0.0
        %v4314 = vmul.f32 %v4313, %v4234
        %v4315 = vmul.f32 %v4313, %v4239
        %v4316 = vmul.f32 %v4313, %v4244
        %v4317 = vmul.f32 %v4313, %v4249
        %v4318 = vmul.f32 %v4313, %v4254
        %v4319 = vmul.f32 %v4313, %v4259
        %v4320 = vmul.f32 %v4313, %v4264
        %v4321 = vmul.f32 %v4313, %v4269
        %v4322 = vmul.f32 %v4313, %v4274
        %v4323 = vmul.f32 %v4313, %v4279
        %v4324 = vmul.f32 %v4313, %v4284
        %v4325 = vmul.f32 %v4313, %v4289
        %v4326 = vmul.f32 %v4313, %v4294
        %v4327 = vmul.f32 %v4313, %v4299
        %v4328 = vmul.f32 %v4313, %v4304
        %v4329 = vmul.f32 %v4313, %v4309
        %v4330 = vsub.f32 1.0, %v4313
        %v4331 = vmul.f32 %v4330, %v4151
        %v4332 = vmul.f32 %v4330, %v4152
        %v4333 = vmul.f32 %v4330, %v4153
        %v4334 = vmul.f32 %v4330, %v4154
        %v4335 = vmul.f32 %v4330, %v4155
        %v4336 = vmul.f32 %v4330, %v4156
        %v4337 = vmul.f32 %v4330, %v4157
        %v4338 = vmul.f32 %v4330, %v4158
        %v4339 = vmul.f32 %v4330, %v4159
        %v4340 = vmul.f32 %v4330, %v4160
        %v4341 = vmul.f32 %v4330, %v4161
        %v4342 = vmul.f32 %v4330, %v4162
        %v4343 = vmul.f32 %v4330, %v4163
        %v4344 = vmul.f32 %v4330, %v4164
        %v4345 = vmul.f32 %v4330, %v4165
        %v4346 = vmul.f32 %v4330, %v4166
        %v4347 = vadd.f32 %v4314, %v4331
        %v4348 = vadd.f32 %v4315, %v4332
        %v4349 = vadd.f32 %v4316, %v4333
        %v4350 = vadd.f32 %v4317, %v4334
        %v4351 = vadd.f32 %v4318, %v4335
        %v4352 = vadd.f32 %v4319, %v4336
        %v4353 = vadd.f32 %v4320, %v4337
        %v4354 = vadd.f32 %v4321, %v4338
        %v4355 = vadd.f32 %v4322, %v4339
        %v4356 = vadd.f32 %v4323, %v4340
        %v4357 = vadd.f32 %v4324, %v4341
        %v4358 = vadd.f32 %v4325, %v4342
        %v4359 = vadd.f32 %v4326, %v4343
        %v4360 = vadd.f32 %v4327, %v4344
        %v4361 = vadd.f32 %v4328, %v4345
        %v4362 = vadd.f32 %v4329, %v4346
        %4363 = vmatprep.subr.mxu0 0.0
        %4364 = vmatpush1.msra.mxu0 %v4362
        %4365 = vmatprep.subr.mxu0 0.0
        %4366 = vmatpush1.msra.mxu0 %v4361
        %4367 = vmatprep.subr.mxu0 0.0
        %4368 = vmatpush1.msra.mxu0 %v4360
        %4369 = vmatprep.subr.mxu0 0.0
        %4370 = vmatpush1.msra.mxu0 %v4359
        %4371 = vmatprep.subr.mxu0 0.0
        %4372 = vmatpush1.msra.mxu0 %v4358
        %4373 = vmatprep.subr.mxu0 0.0
        %4374 = vmatpush1.msra.mxu0 %v4357
        %4375 = vmatprep.subr.mxu0 0.0
        %4376 = vmatpush1.msra.mxu0 %v4356
        %4377 = vmatprep.subr.mxu0 0.0
        %4378 = vmatpush1.msra.mxu0 %v4355
        %4379 = vmatprep.subr.mxu0 0.0
        %4380 = vmatpush1.msra.mxu0 %v4354
        %4381 = vmatprep.subr.mxu0 0.0
        %4382 = vmatpush1.msra.mxu0 %v4353
        %4383 = vmatprep.subr.mxu0 0.0
        %4384 = vmatpush1.msra.mxu0 %v4352
        %4385 = vmatprep.subr.mxu0 0.0
        %4386 = vmatpush1.msra.mxu0 %v4351
        %4387 = vmatprep.subr.mxu0 0.0
        %4388 = vmatpush1.msra.mxu0 %v4350
        %4389 = vmatprep.subr.mxu0 0.0
        %4390 = vmatpush1.msra.mxu0 %v4349
        %4391 = vmatprep.subr.mxu0 0.0
        %4392 = vmatpush1.msra.mxu0 %v4348
        %4393 = vmatprep.subr.mxu0 0.0
        %4394 = vmatpush1.msra.mxu0 %v4347
        %4395 = vmatprep.subr.mxu0 0.0
        %4396 = vmatpush2.msra.mxu0 0.0
        %4397 = vmatprep.subr.mxu0 0.0
        %4398 = vmatpush2.msra.mxu0 0.0
        %4399 = vmatprep.subr.mxu0 0.0
        %4400 = vmatpush2.msra.mxu0 0.0
        %4401 = vmatprep.subr.mxu0 0.0
        %4402 = vmatpush2.msra.mxu0 0.0
        %4403 = vmatprep.subr.mxu0 0.0
        %4404 = vmatpush2.msra.mxu0 0.0
        %4405 = vmatprep.subr.mxu0 0.0
        %4406 = vmatpush2.msra.mxu0 0.0
        %4407 = vmatprep.subr.mxu0 0.0
        %4408 = vmatpush2.msra.mxu0 0.0
        %4409 = vmatprep.subr.mxu0 0.0
        %4410 = vmatpush2.msra.mxu0 0.0
        %4411 = vmatprep.subr.mxu0 0.0
        %4412 = vmatpush2.msra.mxu0 0.0
        %4413 = vmatprep.subr.mxu0 0.0
        %4414 = vmatpush2.msra.mxu0 0.0
        %4415 = vmatprep.subr.mxu0 0.0
        %4416 = vmatpush2.msra.mxu0 0.0
        %4417 = vmatprep.subr.mxu0 0.0
        %4418 = vmatpush2.msra.mxu0 0.0
        %4419 = vmatprep.subr.mxu0 0.0
        %4420 = vmatpush2.msra.mxu0 0.0
        %4421 = vmatprep.subr.mxu0 0.0
        %4422 = vmatpush2.msra.mxu0 0.0
        %4423 = vmatprep.subr.mxu0 0.0
        %4424 = vmatpush2.msra.mxu0 0.0
        %4425 = vmatprep.subr.mxu0 0.0
        %4426 = vmatpush2.msra.mxu0 0.0
        %4427 = vmatprep.mubr.f32.mxu0 0.0
        %4428 = vmatmul.mubr.f32.gmra.mxu0 %v4347
        %v4429 = vpop.f32.mrf.mxu0
        %v4430 = vadd.f32 0.0, %v4429
        %v4431 = vpop.f32.mrf.mxu0
        %4432 = vmatprep.mubr.f32.mxu0 0.0
        %4433 = vmatmul.mubr.f32.gmra.mxu0 %v4348
        %v4434 = vpop.f32.mrf.mxu0
        %v4435 = vadd.f32 0.0, %v4434
        %v4436 = vpop.f32.mrf.mxu0
        %4437 = vmatprep.mubr.f32.mxu0 0.0
        %4438 = vmatmul.mubr.f32.gmra.mxu0 %v4349
        %v4439 = vpop.f32.mrf.mxu0
        %v4440 = vadd.f32 0.0, %v4439
        %v4441 = vpop.f32.mrf.mxu0
        %4442 = vmatprep.mubr.f32.mxu0 0.0
        %4443 = vmatmul.mubr.f32.gmra.mxu0 %v4350
        %v4444 = vpop.f32.mrf.mxu0
        %v4445 = vadd.f32 0.0, %v4444
        %v4446 = vpop.f32.mrf.mxu0
        %4447 = vmatprep.mubr.f32.mxu0 0.0
        %4448 = vmatmul.mubr.f32.gmra.mxu0 %v4351
        %v4449 = vpop.f32.mrf.mxu0
        %v4450 = vadd.f32 0.0, %v4449
        %v4451 = vpop.f32.mrf.mxu0
        %4452 = vmatprep.mubr.f32.mxu0 0.0
        %4453 = vmatmul.mubr.f32.gmra.mxu0 %v4352
        %v4454 = vpop.f32.mrf.mxu0
        %v4455 = vadd.f32 0.0, %v4454
        %v4456 = vpop.f32.mrf.mxu0
        %4457 = vmatprep.mubr.f32.mxu0 0.0
        %4458 = vmatmul.mubr.f32.gmra.mxu0 %v4353
        %v4459 = vpop.f32.mrf.mxu0
        %v4460 = vadd.f32 0.0, %v4459
        %v4461 = vpop.f32.mrf.mxu0
        %4462 = vmatprep.mubr.f32.mxu0 0.0
        %4463 = vmatmul.mubr.f32.gmra.mxu0 %v4354
        %v4464 = vpop.f32.mrf.mxu0
        %v4465 = vadd.f32 0.0, %v4464
        %v4466 = vpop.f32.mrf.mxu0
        %4467 = vmatprep.mubr.f32.mxu0 0.0
        %4468 = vmatmul.mubr.f32.gmra.mxu0 %v4355
        %v4469 = vpop.f32.mrf.mxu0
        %v4470 = vadd.f32 0.0, %v4469
        %v4471 = vpop.f32.mrf.mxu0
        %4472 = vmatprep.mubr.f32.mxu0 0.0
        %4473 = vmatmul.mubr.f32.gmra.mxu0 %v4356
        %v4474 = vpop.f32.mrf.mxu0
        %v4475 = vadd.f32 0.0, %v4474
        %v4476 = vpop.f32.mrf.mxu0
        %4477 = vmatprep.mubr.f32.mxu0 0.0
        %4478 = vmatmul.mubr.f32.gmra.mxu0 %v4357
        %v4479 = vpop.f32.mrf.mxu0
        %v4480 = vadd.f32 0.0, %v4479
        %v4481 = vpop.f32.mrf.mxu0
        %4482 = vmatprep.mubr.f32.mxu0 0.0
        %4483 = vmatmul.mubr.f32.gmra.mxu0 %v4358
        %v4484 = vpop.f32.mrf.mxu0
        %v4485 = vadd.f32 0.0, %v4484
        %v4486 = vpop.f32.mrf.mxu0
        %4487 = vmatprep.mubr.f32.mxu0 0.0
        %4488 = vmatmul.mubr.f32.gmra.mxu0 %v4359
        %v4489 = vpop.f32.mrf.mxu0
        %v4490 = vadd.f32 0.0, %v4489
        %v4491 = vpop.f32.mrf.mxu0
        %4492 = vmatprep.mubr.f32.mxu0 0.0
        %4493 = vmatmul.mubr.f32.gmra.mxu0 %v4360
        %v4494 = vpop.f32.mrf.mxu0
        %v4495 = vadd.f32 0.0, %v4494
        %v4496 = vpop.f32.mrf.mxu0
        %4497 = vmatprep.mubr.f32.mxu0 0.0
        %4498 = vmatmul.mubr.f32.gmra.mxu0 %v4361
        %v4499 = vpop.f32.mrf.mxu0
        %v4500 = vadd.f32 0.0, %v4499
        %v4501 = vpop.f32.mrf.mxu0
        %4502 = vmatprep.mubr.f32.mxu0 0.0
        %4503 = vmatmul.mubr.f32.gmra.mxu0 %v4362
        %v4504 = vpop.f32.mrf.mxu0
        %v4505 = vadd.f32 0.0, %v4504
        %v4506 = vpop.f32.mrf.mxu0
        %4507 = vdwg.mxu0
        %vm4508 = vcmp.lt.f32.partialorder 9.0, %v242
        %v4509 = vsel %vm4508, 1.0, 0.0
        %v4510 = vmul.f32 %v4509, %v4430
        %v4511 = vmul.f32 %v4509, %v4435
        %v4512 = vmul.f32 %v4509, %v4440
        %v4513 = vmul.f32 %v4509, %v4445
        %v4514 = vmul.f32 %v4509, %v4450
        %v4515 = vmul.f32 %v4509, %v4455
        %v4516 = vmul.f32 %v4509, %v4460
        %v4517 = vmul.f32 %v4509, %v4465
        %v4518 = vmul.f32 %v4509, %v4470
        %v4519 = vmul.f32 %v4509, %v4475
        %v4520 = vmul.f32 %v4509, %v4480
        %v4521 = vmul.f32 %v4509, %v4485
        %v4522 = vmul.f32 %v4509, %v4490
        %v4523 = vmul.f32 %v4509, %v4495
        %v4524 = vmul.f32 %v4509, %v4500
        %v4525 = vmul.f32 %v4509, %v4505
        %v4526 = vsub.f32 1.0, %v4509
        %v4527 = vmul.f32 %v4526, %v4347
        %v4528 = vmul.f32 %v4526, %v4348
        %v4529 = vmul.f32 %v4526, %v4349
        %v4530 = vmul.f32 %v4526, %v4350
        %v4531 = vmul.f32 %v4526, %v4351
        %v4532 = vmul.f32 %v4526, %v4352
        %v4533 = vmul.f32 %v4526, %v4353
        %v4534 = vmul.f32 %v4526, %v4354
        %v4535 = vmul.f32 %v4526, %v4355
        %v4536 = vmul.f32 %v4526, %v4356
        %v4537 = vmul.f32 %v4526, %v4357
        %v4538 = vmul.f32 %v4526, %v4358
        %v4539 = vmul.f32 %v4526, %v4359
        %v4540 = vmul.f32 %v4526, %v4360
        %v4541 = vmul.f32 %v4526, %v4361
        %v4542 = vmul.f32 %v4526, %v4362
        %v4543 = vadd.f32 %v4510, %v4527
        %v4544 = vadd.f32 %v4511, %v4528
        %v4545 = vadd.f32 %v4512, %v4529
        %v4546 = vadd.f32 %v4513, %v4530
        %v4547 = vadd.f32 %v4514, %v4531
        %v4548 = vadd.f32 %v4515, %v4532
        %v4549 = vadd.f32 %v4516, %v4533
        %v4550 = vadd.f32 %v4517, %v4534
        %v4551 = vadd.f32 %v4518, %v4535
        %v4552 = vadd.f32 %v4519, %v4536
        %v4553 = vadd.f32 %v4520, %v4537
        %v4554 = vadd.f32 %v4521, %v4538
        %v4555 = vadd.f32 %v4522, %v4539
        %v4556 = vadd.f32 %v4523, %v4540
        %v4557 = vadd.f32 %v4524, %v4541
        %v4558 = vadd.f32 %v4525, %v4542
        %4559 = vmatprep.subr.mxu0 0.0
        %4560 = vmatpush1.msra.mxu0 %v4558
        %4561 = vmatprep.subr.mxu0 0.0
        %4562 = vmatpush1.msra.mxu0 %v4557
        %4563 = vmatprep.subr.mxu0 0.0
        %4564 = vmatpush1.msra.mxu0 %v4556
        %4565 = vmatprep.subr.mxu0 0.0
        %4566 = vmatpush1.msra.mxu0 %v4555
        %4567 = vmatprep.subr.mxu0 0.0
        %4568 = vmatpush1.msra.mxu0 %v4554
        %4569 = vmatprep.subr.mxu0 0.0
        %4570 = vmatpush1.msra.mxu0 %v4553
        %4571 = vmatprep.subr.mxu0 0.0
        %4572 = vmatpush1.msra.mxu0 %v4552
        %4573 = vmatprep.subr.mxu0 0.0
        %4574 = vmatpush1.msra.mxu0 %v4551
        %4575 = vmatprep.subr.mxu0 0.0
        %4576 = vmatpush1.msra.mxu0 %v4550
        %4577 = vmatprep.subr.mxu0 0.0
        %4578 = vmatpush1.msra.mxu0 %v4549
        %4579 = vmatprep.subr.mxu0 0.0
        %4580 = vmatpush1.msra.mxu0 %v4548
        %4581 = vmatprep.subr.mxu0 0.0
        %4582 = vmatpush1.msra.mxu0 %v4547
        %4583 = vmatprep.subr.mxu0 0.0
        %4584 = vmatpush1.msra.mxu0 %v4546
        %4585 = vmatprep.subr.mxu0 0.0
        %4586 = vmatpush1.msra.mxu0 %v4545
        %4587 = vmatprep.subr.mxu0 0.0
        %4588 = vmatpush1.msra.mxu0 %v4544
        %4589 = vmatprep.subr.mxu0 0.0
        %4590 = vmatpush1.msra.mxu0 %v4543
        %4591 = vmatprep.subr.mxu0 0.0
        %4592 = vmatpush2.msra.mxu0 0.0
        %4593 = vmatprep.subr.mxu0 0.0
        %4594 = vmatpush2.msra.mxu0 0.0
        %4595 = vmatprep.subr.mxu0 0.0
        %4596 = vmatpush2.msra.mxu0 0.0
        %4597 = vmatprep.subr.mxu0 0.0
        %4598 = vmatpush2.msra.mxu0 0.0
        %4599 = vmatprep.subr.mxu0 0.0
        %4600 = vmatpush2.msra.mxu0 0.0
        %4601 = vmatprep.subr.mxu0 0.0
        %4602 = vmatpush2.msra.mxu0 0.0
        %4603 = vmatprep.subr.mxu0 0.0
        %4604 = vmatpush2.msra.mxu0 0.0
        %4605 = vmatprep.subr.mxu0 0.0
        %4606 = vmatpush2.msra.mxu0 0.0
        %4607 = vmatprep.subr.mxu0 0.0
        %4608 = vmatpush2.msra.mxu0 0.0
        %4609 = vmatprep.subr.mxu0 0.0
        %4610 = vmatpush2.msra.mxu0 0.0
        %4611 = vmatprep.subr.mxu0 0.0
        %4612 = vmatpush2.msra.mxu0 0.0
        %4613 = vmatprep.subr.mxu0 0.0
        %4614 = vmatpush2.msra.mxu0 0.0
        %4615 = vmatprep.subr.mxu0 0.0
        %4616 = vmatpush2.msra.mxu0 0.0
        %4617 = vmatprep.subr.mxu0 0.0
        %4618 = vmatpush2.msra.mxu0 0.0
        %4619 = vmatprep.subr.mxu0 0.0
        %4620 = vmatpush2.msra.mxu0 0.0
        %4621 = vmatprep.subr.mxu0 0.0
        %4622 = vmatpush2.msra.mxu0 0.0
        %4623 = vmatprep.mubr.f32.mxu0 0.0
        %4624 = vmatmul.mubr.f32.gmra.mxu0 %v4543
        %v4625 = vpop.f32.mrf.mxu0
        %v4626 = vadd.f32 0.0, %v4625
        %v4627 = vpop.f32.mrf.mxu0
        %4628 = vmatprep.mubr.f32.mxu0 0.0
        %4629 = vmatmul.mubr.f32.gmra.mxu0 %v4544
        %v4630 = vpop.f32.mrf.mxu0
        %v4631 = vadd.f32 0.0, %v4630
        %v4632 = vpop.f32.mrf.mxu0
        %4633 = vmatprep.mubr.f32.mxu0 0.0
        %4634 = vmatmul.mubr.f32.gmra.mxu0 %v4545
        %v4635 = vpop.f32.mrf.mxu0
        %v4636 = vadd.f32 0.0, %v4635
        %v4637 = vpop.f32.mrf.mxu0
        %4638 = vmatprep.mubr.f32.mxu0 0.0
        %4639 = vmatmul.mubr.f32.gmra.mxu0 %v4546
        %v4640 = vpop.f32.mrf.mxu0
        %v4641 = vadd.f32 0.0, %v4640
        %v4642 = vpop.f32.mrf.mxu0
        %4643 = vmatprep.mubr.f32.mxu0 0.0
        %4644 = vmatmul.mubr.f32.gmra.mxu0 %v4547
        %v4645 = vpop.f32.mrf.mxu0
        %v4646 = vadd.f32 0.0, %v4645
        %v4647 = vpop.f32.mrf.mxu0
        %4648 = vmatprep.mubr.f32.mxu0 0.0
        %4649 = vmatmul.mubr.f32.gmra.mxu0 %v4548
        %v4650 = vpop.f32.mrf.mxu0
        %v4651 = vadd.f32 0.0, %v4650
        %v4652 = vpop.f32.mrf.mxu0
        %4653 = vmatprep.mubr.f32.mxu0 0.0
        %4654 = vmatmul.mubr.f32.gmra.mxu0 %v4549
        %v4655 = vpop.f32.mrf.mxu0
        %v4656 = vadd.f32 0.0, %v4655
        %v4657 = vpop.f32.mrf.mxu0
        %4658 = vmatprep.mubr.f32.mxu0 0.0
        %4659 = vmatmul.mubr.f32.gmra.mxu0 %v4550
        %v4660 = vpop.f32.mrf.mxu0
        %v4661 = vadd.f32 0.0, %v4660
        %v4662 = vpop.f32.mrf.mxu0
        %4663 = vmatprep.mubr.f32.mxu0 0.0
        %4664 = vmatmul.mubr.f32.gmra.mxu0 %v4551
        %v4665 = vpop.f32.mrf.mxu0
        %v4666 = vadd.f32 0.0, %v4665
        %v4667 = vpop.f32.mrf.mxu0
        %4668 = vmatprep.mubr.f32.mxu0 0.0
        %4669 = vmatmul.mubr.f32.gmra.mxu0 %v4552
        %v4670 = vpop.f32.mrf.mxu0
        %v4671 = vadd.f32 0.0, %v4670
        %v4672 = vpop.f32.mrf.mxu0
        %4673 = vmatprep.mubr.f32.mxu0 0.0
        %4674 = vmatmul.mubr.f32.gmra.mxu0 %v4553
        %v4675 = vpop.f32.mrf.mxu0
        %v4676 = vadd.f32 0.0, %v4675
        %v4677 = vpop.f32.mrf.mxu0
        %4678 = vmatprep.mubr.f32.mxu0 0.0
        %4679 = vmatmul.mubr.f32.gmra.mxu0 %v4554
        %v4680 = vpop.f32.mrf.mxu0
        %v4681 = vadd.f32 0.0, %v4680
        %v4682 = vpop.f32.mrf.mxu0
        %4683 = vmatprep.mubr.f32.mxu0 0.0
        %4684 = vmatmul.mubr.f32.gmra.mxu0 %v4555
        %v4685 = vpop.f32.mrf.mxu0
        %v4686 = vadd.f32 0.0, %v4685
        %v4687 = vpop.f32.mrf.mxu0
        %4688 = vmatprep.mubr.f32.mxu0 0.0
        %4689 = vmatmul.mubr.f32.gmra.mxu0 %v4556
        %v4690 = vpop.f32.mrf.mxu0
        %v4691 = vadd.f32 0.0, %v4690
        %v4692 = vpop.f32.mrf.mxu0
        %4693 = vmatprep.mubr.f32.mxu0 0.0
        %4694 = vmatmul.mubr.f32.gmra.mxu0 %v4557
        %v4695 = vpop.f32.mrf.mxu0
        %v4696 = vadd.f32 0.0, %v4695
        %v4697 = vpop.f32.mrf.mxu0
        %4698 = vmatprep.mubr.f32.mxu0 0.0
        %4699 = vmatmul.mubr.f32.gmra.mxu0 %v4558
        %v4700 = vpop.f32.mrf.mxu0
        %v4701 = vadd.f32 0.0, %v4700
        %v4702 = vpop.f32.mrf.mxu0
        %4703 = vdwg.mxu0
        %vm4704 = vcmp.lt.f32.partialorder 10.0, %v242
        %v4705 = vsel %vm4704, 1.0, 0.0
        %v4706 = vmul.f32 %v4705, %v4626
        %v4707 = vmul.f32 %v4705, %v4631
        %v4708 = vmul.f32 %v4705, %v4636
        %v4709 = vmul.f32 %v4705, %v4641
        %v4710 = vmul.f32 %v4705, %v4646
        %v4711 = vmul.f32 %v4705, %v4651
        %v4712 = vmul.f32 %v4705, %v4656
        %v4713 = vmul.f32 %v4705, %v4661
        %v4714 = vmul.f32 %v4705, %v4666
        %v4715 = vmul.f32 %v4705, %v4671
        %v4716 = vmul.f32 %v4705, %v4676
        %v4717 = vmul.f32 %v4705, %v4681
        %v4718 = vmul.f32 %v4705, %v4686
        %v4719 = vmul.f32 %v4705, %v4691
        %v4720 = vmul.f32 %v4705, %v4696
        %v4721 = vmul.f32 %v4705, %v4701
        %v4722 = vsub.f32 1.0, %v4705
        %v4723 = vmul.f32 %v4722, %v4543
        %v4724 = vmul.f32 %v4722, %v4544
        %v4725 = vmul.f32 %v4722, %v4545
        %v4726 = vmul.f32 %v4722, %v4546
        %v4727 = vmul.f32 %v4722, %v4547
        %v4728 = vmul.f32 %v4722, %v4548
        %v4729 = vmul.f32 %v4722, %v4549
        %v4730 = vmul.f32 %v4722, %v4550
        %v4731 = vmul.f32 %v4722, %v4551
        %v4732 = vmul.f32 %v4722, %v4552
        %v4733 = vmul.f32 %v4722, %v4553
        %v4734 = vmul.f32 %v4722, %v4554
        %v4735 = vmul.f32 %v4722, %v4555
        %v4736 = vmul.f32 %v4722, %v4556
        %v4737 = vmul.f32 %v4722, %v4557
        %v4738 = vmul.f32 %v4722, %v4558
        %v4739 = vadd.f32 %v4706, %v4723
        %v4740 = vadd.f32 %v4707, %v4724
        %v4741 = vadd.f32 %v4708, %v4725
        %v4742 = vadd.f32 %v4709, %v4726
        %v4743 = vadd.f32 %v4710, %v4727
        %v4744 = vadd.f32 %v4711, %v4728
        %v4745 = vadd.f32 %v4712, %v4729
        %v4746 = vadd.f32 %v4713, %v4730
        %v4747 = vadd.f32 %v4714, %v4731
        %v4748 = vadd.f32 %v4715, %v4732
        %v4749 = vadd.f32 %v4716, %v4733
        %v4750 = vadd.f32 %v4717, %v4734
        %v4751 = vadd.f32 %v4718, %v4735
        %v4752 = vadd.f32 %v4719, %v4736
        %v4753 = vadd.f32 %v4720, %v4737
        %v4754 = vadd.f32 %v4721, %v4738
        %4755 = vmatprep.subr.mxu0 0.0
        %4756 = vmatpush1.msra.mxu0 %v4754
        %4757 = vmatprep.subr.mxu0 0.0
        %4758 = vmatpush1.msra.mxu0 %v4753
        %4759 = vmatprep.subr.mxu0 0.0
        %4760 = vmatpush1.msra.mxu0 %v4752
        %4761 = vmatprep.subr.mxu0 0.0
        %4762 = vmatpush1.msra.mxu0 %v4751
        %4763 = vmatprep.subr.mxu0 0.0
        %4764 = vmatpush1.msra.mxu0 %v4750
        %4765 = vmatprep.subr.mxu0 0.0
        %4766 = vmatpush1.msra.mxu0 %v4749
        %4767 = vmatprep.subr.mxu0 0.0
        %4768 = vmatpush1.msra.mxu0 %v4748
        %4769 = vmatprep.subr.mxu0 0.0
        %4770 = vmatpush1.msra.mxu0 %v4747
        %4771 = vmatprep.subr.mxu0 0.0
        %4772 = vmatpush1.msra.mxu0 %v4746
        %4773 = vmatprep.subr.mxu0 0.0
        %4774 = vmatpush1.msra.mxu0 %v4745
        %4775 = vmatprep.subr.mxu0 0.0
        %4776 = vmatpush1.msra.mxu0 %v4744
        %4777 = vmatprep.subr.mxu0 0.0
        %4778 = vmatpush1.msra.mxu0 %v4743
        %4779 = vmatprep.subr.mxu0 0.0
        %4780 = vmatpush1.msra.mxu0 %v4742
        %4781 = vmatprep.subr.mxu0 0.0
        %4782 = vmatpush1.msra.mxu0 %v4741
        %4783 = vmatprep.subr.mxu0 0.0
        %4784 = vmatpush1.msra.mxu0 %v4740
        %4785 = vmatprep.subr.mxu0 0.0
        %4786 = vmatpush1.msra.mxu0 %v4739
        %4787 = vmatprep.subr.mxu0 0.0
        %4788 = vmatpush2.msra.mxu0 0.0
        %4789 = vmatprep.subr.mxu0 0.0
        %4790 = vmatpush2.msra.mxu0 0.0
        %4791 = vmatprep.subr.mxu0 0.0
        %4792 = vmatpush2.msra.mxu0 0.0
        %4793 = vmatprep.subr.mxu0 0.0
        %4794 = vmatpush2.msra.mxu0 0.0
        %4795 = vmatprep.subr.mxu0 0.0
        %4796 = vmatpush2.msra.mxu0 0.0
        %4797 = vmatprep.subr.mxu0 0.0
        %4798 = vmatpush2.msra.mxu0 0.0
        %4799 = vmatprep.subr.mxu0 0.0
        %4800 = vmatpush2.msra.mxu0 0.0
        %4801 = vmatprep.subr.mxu0 0.0
        %4802 = vmatpush2.msra.mxu0 0.0
        %4803 = vmatprep.subr.mxu0 0.0
        %4804 = vmatpush2.msra.mxu0 0.0
        %4805 = vmatprep.subr.mxu0 0.0
        %4806 = vmatpush2.msra.mxu0 0.0
        %4807 = vmatprep.subr.mxu0 0.0
        %4808 = vmatpush2.msra.mxu0 0.0
        %4809 = vmatprep.subr.mxu0 0.0
        %4810 = vmatpush2.msra.mxu0 0.0
        %4811 = vmatprep.subr.mxu0 0.0
        %4812 = vmatpush2.msra.mxu0 0.0
        %4813 = vmatprep.subr.mxu0 0.0
        %4814 = vmatpush2.msra.mxu0 0.0
        %4815 = vmatprep.subr.mxu0 0.0
        %4816 = vmatpush2.msra.mxu0 0.0
        %4817 = vmatprep.subr.mxu0 0.0
        %4818 = vmatpush2.msra.mxu0 0.0
        %4819 = vmatprep.mubr.f32.mxu0 0.0
        %4820 = vmatmul.mubr.f32.gmra.mxu0 %v4739
        %v4821 = vpop.f32.mrf.mxu0
        %v4822 = vadd.f32 0.0, %v4821
        %v4823 = vpop.f32.mrf.mxu0
        %4824 = vmatprep.mubr.f32.mxu0 0.0
        %4825 = vmatmul.mubr.f32.gmra.mxu0 %v4740
        %v4826 = vpop.f32.mrf.mxu0
        %v4827 = vadd.f32 0.0, %v4826
        %v4828 = vpop.f32.mrf.mxu0
        %4829 = vmatprep.mubr.f32.mxu0 0.0
        %4830 = vmatmul.mubr.f32.gmra.mxu0 %v4741
        %v4831 = vpop.f32.mrf.mxu0
        %v4832 = vadd.f32 0.0, %v4831
        %v4833 = vpop.f32.mrf.mxu0
        %4834 = vmatprep.mubr.f32.mxu0 0.0
        %4835 = vmatmul.mubr.f32.gmra.mxu0 %v4742
        %v4836 = vpop.f32.mrf.mxu0
        %v4837 = vadd.f32 0.0, %v4836
        %v4838 = vpop.f32.mrf.mxu0
        %4839 = vmatprep.mubr.f32.mxu0 0.0
        %4840 = vmatmul.mubr.f32.gmra.mxu0 %v4743
        %v4841 = vpop.f32.mrf.mxu0
        %v4842 = vadd.f32 0.0, %v4841
        %v4843 = vpop.f32.mrf.mxu0
        %4844 = vmatprep.mubr.f32.mxu0 0.0
        %4845 = vmatmul.mubr.f32.gmra.mxu0 %v4744
        %v4846 = vpop.f32.mrf.mxu0
        %v4847 = vadd.f32 0.0, %v4846
        %v4848 = vpop.f32.mrf.mxu0
        %4849 = vmatprep.mubr.f32.mxu0 0.0
        %4850 = vmatmul.mubr.f32.gmra.mxu0 %v4745
        %v4851 = vpop.f32.mrf.mxu0
        %v4852 = vadd.f32 0.0, %v4851
        %v4853 = vpop.f32.mrf.mxu0
        %4854 = vmatprep.mubr.f32.mxu0 0.0
        %4855 = vmatmul.mubr.f32.gmra.mxu0 %v4746
        %v4856 = vpop.f32.mrf.mxu0
        %v4857 = vadd.f32 0.0, %v4856
        %v4858 = vpop.f32.mrf.mxu0
        %4859 = vmatprep.mubr.f32.mxu0 0.0
        %4860 = vmatmul.mubr.f32.gmra.mxu0 %v4747
        %v4861 = vpop.f32.mrf.mxu0
        %v4862 = vadd.f32 0.0, %v4861
        %v4863 = vpop.f32.mrf.mxu0
        %4864 = vmatprep.mubr.f32.mxu0 0.0
        %4865 = vmatmul.mubr.f32.gmra.mxu0 %v4748
        %v4866 = vpop.f32.mrf.mxu0
        %v4867 = vadd.f32 0.0, %v4866
        %v4868 = vpop.f32.mrf.mxu0
        %4869 = vmatprep.mubr.f32.mxu0 0.0
        %4870 = vmatmul.mubr.f32.gmra.mxu0 %v4749
        %v4871 = vpop.f32.mrf.mxu0
        %v4872 = vadd.f32 0.0, %v4871
        %v4873 = vpop.f32.mrf.mxu0
        %4874 = vmatprep.mubr.f32.mxu0 0.0
        %4875 = vmatmul.mubr.f32.gmra.mxu0 %v4750
        %v4876 = vpop.f32.mrf.mxu0
        %v4877 = vadd.f32 0.0, %v4876
        %v4878 = vpop.f32.mrf.mxu0
        %4879 = vmatprep.mubr.f32.mxu0 0.0
        %4880 = vmatmul.mubr.f32.gmra.mxu0 %v4751
        %v4881 = vpop.f32.mrf.mxu0
        %v4882 = vadd.f32 0.0, %v4881
        %v4883 = vpop.f32.mrf.mxu0
        %4884 = vmatprep.mubr.f32.mxu0 0.0
        %4885 = vmatmul.mubr.f32.gmra.mxu0 %v4752
        %v4886 = vpop.f32.mrf.mxu0
        %v4887 = vadd.f32 0.0, %v4886
        %v4888 = vpop.f32.mrf.mxu0
        %4889 = vmatprep.mubr.f32.mxu0 0.0
        %4890 = vmatmul.mubr.f32.gmra.mxu0 %v4753
        %v4891 = vpop.f32.mrf.mxu0
        %v4892 = vadd.f32 0.0, %v4891
        %v4893 = vpop.f32.mrf.mxu0
        %4894 = vmatprep.mubr.f32.mxu0 0.0
        %4895 = vmatmul.mubr.f32.gmra.mxu0 %v4754
        %v4896 = vpop.f32.mrf.mxu0
        %v4897 = vadd.f32 0.0, %v4896
        %v4898 = vpop.f32.mrf.mxu0
        %4899 = vdwg.mxu0
        %vm4900 = vcmp.lt.f32.partialorder 11.0, %v242
        %v4901 = vsel %vm4900, 1.0, 0.0
        %v4902 = vmul.f32 %v4901, %v4822
        %v4903 = vmul.f32 %v4901, %v4827
        %v4904 = vmul.f32 %v4901, %v4832
        %v4905 = vmul.f32 %v4901, %v4837
        %v4906 = vmul.f32 %v4901, %v4842
        %v4907 = vmul.f32 %v4901, %v4847
        %v4908 = vmul.f32 %v4901, %v4852
        %v4909 = vmul.f32 %v4901, %v4857
        %v4910 = vmul.f32 %v4901, %v4862
        %v4911 = vmul.f32 %v4901, %v4867
        %v4912 = vmul.f32 %v4901, %v4872
        %v4913 = vmul.f32 %v4901, %v4877
        %v4914 = vmul.f32 %v4901, %v4882
        %v4915 = vmul.f32 %v4901, %v4887
        %v4916 = vmul.f32 %v4901, %v4892
        %v4917 = vmul.f32 %v4901, %v4897
        %v4918 = vsub.f32 1.0, %v4901
        %v4919 = vmul.f32 %v4918, %v4739
        %v4920 = vmul.f32 %v4918, %v4740
        %v4921 = vmul.f32 %v4918, %v4741
        %v4922 = vmul.f32 %v4918, %v4742
        %v4923 = vmul.f32 %v4918, %v4743
        %v4924 = vmul.f32 %v4918, %v4744
        %v4925 = vmul.f32 %v4918, %v4745
        %v4926 = vmul.f32 %v4918, %v4746
        %v4927 = vmul.f32 %v4918, %v4747
        %v4928 = vmul.f32 %v4918, %v4748
        %v4929 = vmul.f32 %v4918, %v4749
        %v4930 = vmul.f32 %v4918, %v4750
        %v4931 = vmul.f32 %v4918, %v4751
        %v4932 = vmul.f32 %v4918, %v4752
        %v4933 = vmul.f32 %v4918, %v4753
        %v4934 = vmul.f32 %v4918, %v4754
        %v4935 = vadd.f32 %v4902, %v4919
        %v4936 = vadd.f32 %v4903, %v4920
        %v4937 = vadd.f32 %v4904, %v4921
        %v4938 = vadd.f32 %v4905, %v4922
        %v4939 = vadd.f32 %v4906, %v4923
        %v4940 = vadd.f32 %v4907, %v4924
        %v4941 = vadd.f32 %v4908, %v4925
        %v4942 = vadd.f32 %v4909, %v4926
        %v4943 = vadd.f32 %v4910, %v4927
        %v4944 = vadd.f32 %v4911, %v4928
        %v4945 = vadd.f32 %v4912, %v4929
        %v4946 = vadd.f32 %v4913, %v4930
        %v4947 = vadd.f32 %v4914, %v4931
        %v4948 = vadd.f32 %v4915, %v4932
        %v4949 = vadd.f32 %v4916, %v4933
        %v4950 = vadd.f32 %v4917, %v4934
        %4951 = vst [vmem:[%s134] sm:$0xff] %v4935
        %4952 = vst [vmem:[%s134 + $0x8] sm:$0xff] %v4936
        %4953 = vst [vmem:[%s134 + $0x10] sm:$0xff] %v4937
        %4954 = vst [vmem:[%s134 + $0x18] sm:$0xff] %v4938
        %4955 = vst [vmem:[%s134 + $0x20] sm:$0xff] %v4939
        %4956 = vst [vmem:[%s134 + $0x28] sm:$0xff] %v4940
        %4957 = vst [vmem:[%s134 + $0x30] sm:$0xff] %v4941
        %4958 = vst [vmem:[%s134 + $0x38] sm:$0xff] %v4942
        %4959 = vst [vmem:[%s134 + $0x40] sm:$0xff] %v4943
        %4960 = vst [vmem:[%s134 + $0x48] sm:$0xff] %v4944
        %4961 = vst [vmem:[%s134 + $0x50] sm:$0xff] %v4945
        %4962 = vst [vmem:[%s134 + $0x58] sm:$0xff] %v4946
        %4963 = vst [vmem:[%s134 + $0x60] sm:$0xff] %v4947
        %4964 = vst [vmem:[%s134 + $0x68] sm:$0xff] %v4948
        %4965 = vst [vmem:[%s134 + $0x70] sm:$0xff] %v4949
        %4966 = vst [vmem:[%s134 + $0x78] sm:$0xff] %v4950
        %s4967 = sand.u32 %s52, 1
        %s4968 = scalar_lea.sflag [#allocation4], %s4967
        %s4969 = sand.u32 %s52, 1
        %s4970 = smul.addr %s4969, 128
        %s4971 = scalar_lea.vmem [#allocation5], %s4970
        // Predicated region
        $region29: #{tpu_custom_call.1} parent=23 // pred_check
          %p4972 = pneg %p62
        $region30: #{tpu_custom_call.1} parent=23 // pred_check_branch
          %4974 = sbr.rel (%p4972) target = $region32
        $region31: #{tpu_custom_call.1} parent=23 // pred_region
          %s4976 = ssub.s32 2048, 2048
          %4977 = vsyncadd %s4968, %s4976
          %s4978 = smul.addr %s18, 16
          %s4979 = smul.addr %s4978, 128
          %s4980 = scalar_lea.hbm %s1, %s4979
          %s4981 = sshll.u32 %s4971, 4
          %s4982 = int_to_ptr.vmem [resolvable:$true] %s4981
          %4987 = dma.vmem_to_hbm [thread:$0]  %s4982, 2048, %s4980, %s4968, 128, 128, 8
        $region32: #{tpu_custom_call.1} parent=23 // pred_fallthru
          _
      $region24: #{tpu_custom_call.1} parent=5 // pred_fallthru
        _
      %p4988 = scmp.le.s32.totalorder 2, %s13
      // Predicated region
      $region33: #{tpu_custom_call.1} parent=5 // pred_check
        %p4989 = pneg %p4988
      $region34: #{tpu_custom_call.1} parent=5 // pred_check_branch
        %4991 = sbr.rel (%p4989) target = $region36
      $region35: #{tpu_custom_call.1} parent=5 // pred_region
        %s4992 = ssub.s32 %s13, 2
        // Predicated region
        $region37: #{tpu_custom_call.1} parent=35 // pred_check
          %p4993 = pneg %p68
        $region38: #{tpu_custom_call.1} parent=35 // pred_check_branch
          %4995 = sbr.rel (%p4993) target = $region40
        $region39: #{tpu_custom_call.1} parent=35 // pred_region
          %s4996 = sand.u32 %s53, 1
          %s4997 = scalar_lea.sflag [#allocation4], %s4996
          %s4998 = sand.u32 %s53, 1
          %s4999 = smul.addr %s4998, 128
          %s5000 = scalar_lea.vmem [#allocation5], %s4999
          %5001 = dma.done %s4997, 2048
        $region40: #{tpu_custom_call.1} parent=35 // pred_fallthru
          _
      $region36: #{tpu_custom_call.1} parent=5 // pred_fallthru
        _
    $region6: #{tpu_custom_call.1} parent=1 // loop_footer
      %s17 = sadd.s32 1, %s13
    $region7: #{tpu_custom_call.1} parent=1 // loop_footer_branch
      %12 = sbr.rel target = $region3
    $region8: #{tpu_custom_call.1} parent=1 // loop_exit
      _
    %5002 = vsyncpa [#allocation3], 1
    %s5003 = scalar_lea.sflag [#allocation3], 1
    %5004 = vsyncpa %s5003, 1
    %5005 = vsyncpa [#allocation4], 1
    %s5006 = scalar_lea.sflag [#allocation4], 1
    %5007 = vsyncpa %s5006, 1

</llo_original>
